<compile_context>
chip_gen: v7x
topology: tpu7x:2x2x1
jax: 0.10.0
libtpu: 0.0.40
codegen_flags: <defaults>
</compile_context>

<pallas_src>
import jax
import jax.numpy as jnp
from jax import lax
from jax.experimental import pallas as pl
from jax.experimental.pallas import tpu as pltpu


def _predictor_seq_kernel(x_ref, we1_ref, be1_ref, s1_ref, t1_ref,
                          we2_ref, be2_ref, s2_ref, t2_ref,
                          we3_ref, be3_ref,
                          wih_ref, whh_ref, bg_ref,
                          out_ref):
    n_cond = x_ref.shape[0]          # conditioning frames
    n_pred = out_ref.shape[0]        # predicted frames (time-major output)
    tb = x_ref.shape[1]              # batch tile
    hid = whh_ref.shape[-1]          # lstm hidden size
    f32 = jnp.float32

    def mlp(xt):
        a = jnp.dot(xt, we1_ref[...], preferred_element_type=f32) + be1_ref[...]
        a = jnp.maximum(a * s1_ref[...] + t1_ref[...], 0.0)          # BN(eval)+ReLU
        a = jnp.dot(a, we2_ref[...], preferred_element_type=f32) + be2_ref[...]
        a = jnp.maximum(a * s2_ref[...] + t2_ref[...], 0.0)          # BN(eval)+ReLU
        a = jnp.dot(a, we3_ref[...], preferred_element_type=f32) + be3_ref[...]
        return a

    def lstm_step(inp, h, c):
        # PyTorch gate order: 0=i, 1=f, 2=g, 3=o
        def gate(k):
            return (jnp.dot(inp, wih_ref[k], preferred_element_type=f32)
                    + jnp.dot(h, whh_ref[k], preferred_element_type=f32)
                    + bg_ref[k])
        i_g = jax.nn.sigmoid(gate(0))
        f_g = jax.nn.sigmoid(gate(1))
        g_g = jnp.tanh(gate(2))
        o_g = jax.nn.sigmoid(gate(3))
        c_new = f_g * c + i_g * g_g
        h_new = o_g * jnp.tanh(c_new)
        return h_new, c_new

    h = jnp.zeros((tb, hid), f32)
    c = jnp.zeros((tb, hid), f32)

    # Conditioning phase (small, static trip count -> unrolled).
    inp = None
    for t in range(n_cond):
        inp = mlp(x_ref[t].astype(f32))
        h, c = lstm_step(inp, h, c)

    # Prediction phase: feed previous output back in, store h each step.
    def body(t, carry):
        inp_t, h_t, c_t = carry
        h_n, c_n = lstm_step(inp_t, h_t, c_t)
        out_ref[pl.ds(t, 1), :, :] = h_n[None, :, :].astype(out_ref.dtype)
        return (h_n, h_n, c_n)

    lax.fori_loop(0, n_pred, body, (inp, h, c))


def predictor_seq_forward(x, params, n_pred_frames=25):
    """x: [n_cond_frames, B, input_size] float32 -> [B, n_pred_frames, H]."""
    n_cond, batch, in_dim = x.shape
    hid = params["w_hh"].shape[-1]
    mlp_h = params["w_enc1"].shape[-1]

    # Batch tile: full batch for small B; 256-row tiles (MXU/sublane friendly)
    # for large B, with weights resident across grid steps.
    tb = batch if batch <= 256 else 256
    grid = (pl.cdiv(batch, tb),)

    const2 = lambda b: (0, 0)
    const3 = lambda b: (0, 0, 0)

    in_specs = [
        pl.BlockSpec((n_cond, tb, in_dim), lambda b: (0, b, 0)),   # x (batch-tiled)
        pl.BlockSpec(params["w_enc1"].shape, const2),
        pl.BlockSpec(params["b_enc1"].shape, const2),
        pl.BlockSpec(params["bn1_scale"].shape, const2),
        pl.BlockSpec(params["bn1_shift"].shape, const2),
        pl.BlockSpec(params["w_enc2"].shape, const2),
        pl.BlockSpec(params["b_enc2"].shape, const2),
        pl.BlockSpec(params["bn2_scale"].shape, const2),
        pl.BlockSpec(params["bn2_shift"].shape, const2),
        pl.BlockSpec(params["w_enc3"].shape, const2),
        pl.BlockSpec(params["b_enc3"].shape, const2),
        pl.BlockSpec(params["w_ih"].shape, const3),
        pl.BlockSpec(params["w_hh"].shape, const3),
        pl.BlockSpec(params["b_gate"].shape, const3),
    ]
    # Time-major output so the per-step dynamic store hits the leading dim.
    out_specs = pl.BlockSpec((n_pred_frames, tb, hid), lambda b: (0, b, 0))
    out_shape = jax.ShapeDtypeStruct((n_pred_frames, batch, hid), jnp.float32)

    total_steps = n_cond + n_pred_frames
    mlp_flops = 2 * (in_dim * mlp_h + mlp_h * mlp_h + mlp_h * hid)
    lstm_flops = 16 * hid * hid                      # 8 [*,H]x[H,H] matmuls/step
    flops = batch * (n_cond * mlp_flops + total_steps * lstm_flops)
    transcendentals = batch * total_steps * 5 * hid  # 3 sigmoid + 2 tanh per elt
    param_bytes = sum(int(p.size) * p.dtype.itemsize for p in params.values())
    bytes_accessed = int(x.size) * 4 + param_bytes + batch * n_pred_frames * hid * 4

    out_tm = pl.pallas_call(
        _predictor_seq_kernel,
        out_shape=out_shape,
        grid=grid,
        in_specs=in_specs,
        out_specs=out_specs,
        compiler_params=pltpu.CompilerParams(
            dimension_semantics=("parallel",),
            vmem_limit_bytes=32 * 1024 * 1024,
        ),
        cost_estimate=pl.CostEstimate(
            flops=int(flops),
            transcendentals=int(transcendentals),
            bytes_accessed=int(bytes_accessed),
        ),
    )(x,
      params["w_enc1"], params["b_enc1"], params["bn1_scale"], params["bn1_shift"],
      params["w_enc2"], params["b_enc2"], params["bn2_scale"], params["bn2_shift"],
      params["w_enc3"], params["b_enc3"],
      params["w_ih"], params["w_hh"], params["b_gate"])

    return jnp.transpose(out_tm, (1, 0, 2))          # -> [B, n_pred, H]


def init_params(key, in_dim, mlp_hidden=32, lstm_hidden=64, eps=1e-5):
    """Deterministic example parameters (same structure as the torch module)."""
    ks = jax.random.split(key, 18)

    def uni(k, shape, bound):
        return jax.random.uniform(k, shape, jnp.float32, -bound, bound)

    def linear(kw, fi, fo):
        w = uni(kw, (fi, fo), fi ** -0.5)
        b = jnp.full((1, fo), 0.03, jnp.float32)     # init_weights: bias = 0.03
        return w, b

    w1, b1 = linear(ks[0], in_dim, mlp_hidden)
    w2, b2 = linear(ks[1], mlp_hidden, mlp_hidden)
    w3, b3 = linear(ks[2], mlp_hidden, lstm_hidden)

    def bn(kg, kb, km, kv, n):
        gamma = jax.random.uniform(kg, (1, n), jnp.float32, 0.5, 1.5)
        beta = jax.random.uniform(kb, (1, n), jnp.float32, -0.1, 0.1)
        mean = jax.random.uniform(km, (1, n), jnp.float32, -0.1, 0.1)
        var = jax.random.uniform(kv, (1, n), jnp.float32, 0.5, 1.5)
        scale = gamma / jnp.sqrt(var + eps)          # eval-mode BN folded
        shift = beta - mean * scale
        return scale, shift

    s1, t1 = bn(ks[3], ks[4], ks[5], ks[6], mlp_hidden)
    s2, t2 = bn(ks[7], ks[8], ks[9], ks[10], mlp_hidden)

    # LSTM (single layer): per-gate weights in PyTorch order (i, f, g, o),
    # stored transposed so the kernel computes x @ w_ih[k] / h @ w_hh[k].
    bnd = lstm_hidden ** -0.5
    w_ih = uni(ks[11], (4, lstm_hidden, lstm_hidden), bnd)
    w_hh = uni(ks[12], (4, lstm_hidden, lstm_hidden), bnd)
    b_gate = uni(ks[13], (4, 1, lstm_hidden), bnd)   # b_ih + b_hh folded

    return {
        "w_enc1": w1, "b_enc1": b1, "bn1_scale": s1, "bn1_shift": t1,
        "w_enc2": w2, "b_enc2": b2, "bn2_scale": s2, "bn2_shift": t2,
        "w_enc3": w3, "b_enc3": b3,
        "w_ih": w_ih, "w_hh": w_hh, "b_gate": b_gate,
    }


def _reference(x, params, n_pred_frames=25):
    """Pure-JAX reference matching Predictor_seq.forward (eval-mode BN)."""
    n_cond, batch, _ = x.shape
    hid = params["w_hh"].shape[-1]

    def mlp(xt):
        a = xt @ params["w_enc1"] + params["b_enc1"]
        a = jnp.maximum(a * params["bn1_scale"] + params["bn1_shift"], 0.0)
        a = a @ params["w_enc2"] + params["b_enc2"]
        a = jnp.maximum(a * params["bn2_scale"] + params["bn2_shift"], 0.0)
        return a @ params["w_enc3"] + params["b_enc3"]

    def lstm_step(inp, h, c):
        g = [inp @ params["w_ih"][k] + h @ params["w_hh"][k] + params["b_gate"][k]
             for k in range(4)]
        i_g = jax.nn.sigmoid(g[0])
        f_g = jax.nn.sigmoid(g[1])
        g_g = jnp.tanh(g[2])
        o_g = jax.nn.sigmoid(g[3])
        c = f_g * c + i_g * g_g
        h = o_g * jnp.tanh(c)
        return h, c

    h = jnp.zeros((batch, hid), jnp.float32)
    c = jnp.zeros((batch, hid), jnp.float32)
    inp = None
    for t in range(n_cond):
        inp = mlp(x[t])
        h, c = lstm_step(inp, h, c)
    outs = []
    for _ in range(n_pred_frames):
        h, c = lstm_step(inp, h, c)
        outs.append(h)
        inp = h
    return jnp.stack(outs, axis=1)                   # [B, n_pred, H]


if __name__ == "__main__":
    key = jax.random.PRNGKey(0)
    k_x, k_p = jax.random.split(key)

    BATCH = 2
    IN_DIM = 16            # `output_size` arg of Predictor_seq (MLP3 input size)
    N_COND = 3             # n_cond_frames (module default)
    N_PRED = 25            # n_pred_frames (module default)
    LSTM_H = 64            # lstm_output_size (module default)

    x = jax.random.normal(k_x, (N_COND, BATCH, IN_DIM), jnp.float32)
    params = init_params(k_p, IN_DIM, mlp_hidden=32, lstm_hidden=LSTM_H)

    out = predictor_seq_forward(x, params, n_pred_frames=N_PRED)
    out = jax.block_until_ready(out)

    ref = _reference(x, params, n_pred_frames=N_PRED)
    assert out.shape == (BATCH, N_PRED, LSTM_H)
    assert jnp.allclose(out, ref, atol=2e-3, rtol=2e-3), "mismatch vs reference"

    print("KERNEL_OK")
</pallas_src>

<mosaic_0001>
module attributes {stable_mosaic.version = 11 : i64} {
  func.func @_predictor_seq_kernel(%arg0: i32, %arg1: memref<3x2x16xf32, #tpu.memory_space<vmem>>, %arg2: memref<16x32xf32, #tpu.memory_space<vmem>>, %arg3: memref<1x32xf32, #tpu.memory_space<vmem>>, %arg4: memref<1x32xf32, #tpu.memory_space<vmem>>, %arg5: memref<1x32xf32, #tpu.memory_space<vmem>>, %arg6: memref<32x32xf32, #tpu.memory_space<vmem>>, %arg7: memref<1x32xf32, #tpu.memory_space<vmem>>, %arg8: memref<1x32xf32, #tpu.memory_space<vmem>>, %arg9: memref<1x32xf32, #tpu.memory_space<vmem>>, %arg10: memref<32x64xf32, #tpu.memory_space<vmem>>, %arg11: memref<1x64xf32, #tpu.memory_space<vmem>>, %arg12: memref<4x64x64xf32, #tpu.memory_space<vmem>>, %arg13: memref<4x64x64xf32, #tpu.memory_space<vmem>>, %arg14: memref<4x1x64xf32, #tpu.memory_space<vmem>>, %arg15: memref<25x2x64xf32, #tpu.memory_space<vmem>>) attributes {dimension_semantics = [#tpu.dimension_semantics<parallel>], iteration_bounds = array<i64: 1>, scalar_prefetch = 0 : i64, scratch_operands = 0 : i64, tpu.core_type = #tpu.core_type<tc>, window_params = [{transform_indices = @transform_0, window_bounds = array<i64: 3, 2, 16>}, {pipeline_mode = #tpu.pipeline_mode<synchronous>, transform_indices = @transform_1, window_bounds = array<i64: 16, 32>}, {pipeline_mode = #tpu.pipeline_mode<synchronous>, transform_indices = @transform_2, window_bounds = array<i64: 1, 32>}, {pipeline_mode = #tpu.pipeline_mode<synchronous>, transform_indices = @transform_3, window_bounds = array<i64: 1, 32>}, {pipeline_mode = #tpu.pipeline_mode<synchronous>, transform_indices = @transform_4, window_bounds = array<i64: 1, 32>}, {pipeline_mode = #tpu.pipeline_mode<synchronous>, transform_indices = @transform_5, window_bounds = array<i64: 32, 32>}, {pipeline_mode = #tpu.pipeline_mode<synchronous>, transform_indices = @transform_6, window_bounds = array<i64: 1, 32>}, {pipeline_mode = #tpu.pipeline_mode<synchronous>, transform_indices = @transform_7, window_bounds = array<i64: 1, 32>}, {pipeline_mode = #tpu.pipeline_mode<synchronous>, transform_indices = @transform_8, window_bounds = array<i64: 1, 32>}, {pipeline_mode = #tpu.pipeline_mode<synchronous>, transform_indices = @transform_9, window_bounds = array<i64: 32, 64>}, {pipeline_mode = #tpu.pipeline_mode<synchronous>, transform_indices = @transform_10, window_bounds = array<i64: 1, 64>}, {pipeline_mode = #tpu.pipeline_mode<synchronous>, transform_indices = @transform_11, window_bounds = array<i64: 4, 64, 64>}, {pipeline_mode = #tpu.pipeline_mode<synchronous>, transform_indices = @transform_12, window_bounds = array<i64: 4, 64, 64>}, {pipeline_mode = #tpu.pipeline_mode<synchronous>, transform_indices = @transform_13, window_bounds = array<i64: 4, 1, 64>}, {transform_indices = @transform_14, window_bounds = array<i64: 25, 2, 64>}]} {
    %cst = arith.constant 0.000000e+00 : f32
    %0 = vector.broadcast %cst : f32 to vector<2x64xf32>
    %cst_0 = arith.constant 0.000000e+00 : f32
    %1 = vector.broadcast %cst_0 : f32 to vector<2x64xf32>
    %c0 = arith.constant 0 : index
    %c0_1 = arith.constant 0 : index
    %c0_2 = arith.constant 0 : index
    %2 = vector.load %arg1[%c0, %c0_1, %c0_2] : memref<3x2x16xf32, #tpu.memory_space<vmem>>, vector<1x2x16xf32>
    %3 = vector.shape_cast %2 : vector<1x2x16xf32> to vector<2x16xf32>
    %c0_3 = arith.constant 0 : index
    %c0_4 = arith.constant 0 : index
    %4 = vector.load %arg2[%c0_3, %c0_4] : memref<16x32xf32, #tpu.memory_space<vmem>>, vector<16x32xf32>
    %cst_5 = arith.constant dense<0.000000e+00> : vector<2x32xf32>
    %5 = tpu.matmul %3, %4, %cst_5 {dimension_numbers = #tpu.dot_dimension_numbers<[1], [0], [0], [1], [0, 0, 1, 1], [], []>} : vector<2x16xf32>, vector<16x32xf32>, vector<2x32xf32> -> vector<2x32xf32>
    %c0_6 = arith.constant 0 : index
    %c0_7 = arith.constant 0 : index
    %6 = vector.load %arg3[%c0_6, %c0_7] : memref<1x32xf32, #tpu.memory_space<vmem>>, vector<1x32xf32>
    %7 = vector.broadcast %6 : vector<1x32xf32> to vector<2x32xf32>
    %8 = arith.addf %5, %7 : vector<2x32xf32>
    %c0_8 = arith.constant 0 : index
    %c0_9 = arith.constant 0 : index
    %9 = vector.load %arg4[%c0_8, %c0_9] : memref<1x32xf32, #tpu.memory_space<vmem>>, vector<1x32xf32>
    %10 = vector.broadcast %9 : vector<1x32xf32> to vector<2x32xf32>
    %11 = arith.mulf %8, %10 : vector<2x32xf32>
    %c0_10 = arith.constant 0 : index
    %c0_11 = arith.constant 0 : index
    %12 = vector.load %arg5[%c0_10, %c0_11] : memref<1x32xf32, #tpu.memory_space<vmem>>, vector<1x32xf32>
    %13 = vector.broadcast %12 : vector<1x32xf32> to vector<2x32xf32>
    %14 = arith.addf %11, %13 : vector<2x32xf32>
    %cst_12 = arith.constant 0.000000e+00 : f32
    %15 = vector.broadcast %cst_12 : f32 to vector<2x32xf32>
    %16 = arith.maximumf %14, %15 : vector<2x32xf32>
    %c0_13 = arith.constant 0 : index
    %c0_14 = arith.constant 0 : index
    %17 = vector.load %arg6[%c0_13, %c0_14] : memref<32x32xf32, #tpu.memory_space<vmem>>, vector<32x32xf32>
    %cst_15 = arith.constant dense<0.000000e+00> : vector<2x32xf32>
    %18 = tpu.matmul %16, %17, %cst_15 {dimension_numbers = #tpu.dot_dimension_numbers<[1], [0], [0], [1], [0, 0, 1, 1], [], []>} : vector<2x32xf32>, vector<32x32xf32>, vector<2x32xf32> -> vector<2x32xf32>
    %c0_16 = arith.constant 0 : index
    %c0_17 = arith.constant 0 : index
    %19 = vector.load %arg7[%c0_16, %c0_17] : memref<1x32xf32, #tpu.memory_space<vmem>>, vector<1x32xf32>
    %20 = vector.broadcast %19 : vector<1x32xf32> to vector<2x32xf32>
    %21 = arith.addf %18, %20 : vector<2x32xf32>
    %c0_18 = arith.constant 0 : index
    %c0_19 = arith.constant 0 : index
    %22 = vector.load %arg8[%c0_18, %c0_19] : memref<1x32xf32, #tpu.memory_space<vmem>>, vector<1x32xf32>
    %23 = vector.broadcast %22 : vector<1x32xf32> to vector<2x32xf32>
    %24 = arith.mulf %21, %23 : vector<2x32xf32>
    %c0_20 = arith.constant 0 : index
    %c0_21 = arith.constant 0 : index
    %25 = vector.load %arg9[%c0_20, %c0_21] : memref<1x32xf32, #tpu.memory_space<vmem>>, vector<1x32xf32>
    %26 = vector.broadcast %25 : vector<1x32xf32> to vector<2x32xf32>
    %27 = arith.addf %24, %26 : vector<2x32xf32>
    %cst_22 = arith.constant 0.000000e+00 : f32
    %28 = vector.broadcast %cst_22 : f32 to vector<2x32xf32>
    %29 = arith.maximumf %27, %28 : vector<2x32xf32>
    %c0_23 = arith.constant 0 : index
    %c0_24 = arith.constant 0 : index
    %30 = vector.load %arg10[%c0_23, %c0_24] : memref<32x64xf32, #tpu.memory_space<vmem>>, vector<32x64xf32>
    %cst_25 = arith.constant dense<0.000000e+00> : vector<2x64xf32>
    %31 = tpu.matmul %29, %30, %cst_25 {dimension_numbers = #tpu.dot_dimension_numbers<[1], [0], [0], [1], [0, 0, 1, 1], [], []>} : vector<2x32xf32>, vector<32x64xf32>, vector<2x64xf32> -> vector<2x64xf32>
    %c0_26 = arith.constant 0 : index
    %c0_27 = arith.constant 0 : index
    %32 = vector.load %arg11[%c0_26, %c0_27] : memref<1x64xf32, #tpu.memory_space<vmem>>, vector<1x64xf32>
    %33 = vector.broadcast %32 : vector<1x64xf32> to vector<2x64xf32>
    %34 = arith.addf %31, %33 : vector<2x64xf32>
    %c0_28 = arith.constant 0 : index
    %c0_29 = arith.constant 0 : index
    %c0_30 = arith.constant 0 : index
    %35 = vector.load %arg12[%c0_28, %c0_29, %c0_30] : memref<4x64x64xf32, #tpu.memory_space<vmem>>, vector<1x64x64xf32>
    %36 = vector.shape_cast %35 : vector<1x64x64xf32> to vector<64x64xf32>
    %cst_31 = arith.constant dense<0.000000e+00> : vector<2x64xf32>
    %37 = tpu.matmul %34, %36, %cst_31 {dimension_numbers = #tpu.dot_dimension_numbers<[1], [0], [0], [1], [0, 0, 1, 1], [], []>} : vector<2x64xf32>, vector<64x64xf32>, vector<2x64xf32> -> vector<2x64xf32>
    %c0_32 = arith.constant 0 : index
    %c0_33 = arith.constant 0 : index
    %c0_34 = arith.constant 0 : index
    %38 = vector.load %arg13[%c0_32, %c0_33, %c0_34] : memref<4x64x64xf32, #tpu.memory_space<vmem>>, vector<1x64x64xf32>
    %39 = vector.shape_cast %38 : vector<1x64x64xf32> to vector<64x64xf32>
    %cst_35 = arith.constant dense<0.000000e+00> : vector<2x64xf32>
    %40 = tpu.matmul %0, %39, %cst_35 {dimension_numbers = #tpu.dot_dimension_numbers<[1], [0], [0], [1], [0, 0, 1, 1], [], []>} : vector<2x64xf32>, vector<64x64xf32>, vector<2x64xf32> -> vector<2x64xf32>
    %41 = arith.addf %37, %40 : vector<2x64xf32>
    %c0_36 = arith.constant 0 : index
    %c0_37 = arith.constant 0 : index
    %c0_38 = arith.constant 0 : index
    %42 = vector.load %arg14[%c0_36, %c0_37, %c0_38] : memref<4x1x64xf32, #tpu.memory_space<vmem>>, vector<1x1x64xf32>
    %43 = vector.shape_cast %42 : vector<1x1x64xf32> to vector<1x64xf32>
    %44 = vector.broadcast %43 : vector<1x64xf32> to vector<2x64xf32>
    %45 = arith.addf %41, %44 : vector<2x64xf32>
    %46 = arith.negf %45 : vector<2x64xf32>
    %47 = math.exp %46 : vector<2x64xf32>
    %cst_39 = arith.constant 1.000000e+00 : f32
    %48 = vector.broadcast %cst_39 : f32 to vector<2x64xf32>
    %49 = arith.addf %48, %47 : vector<2x64xf32>
    %50 = arith.divf %48, %49 : vector<2x64xf32>
    %c1 = arith.constant 1 : index
    %c0_40 = arith.constant 0 : index
    %c0_41 = arith.constant 0 : index
    %51 = vector.load %arg12[%c1, %c0_40, %c0_41] : memref<4x64x64xf32, #tpu.memory_space<vmem>>, vector<1x64x64xf32>
    %52 = vector.shape_cast %51 : vector<1x64x64xf32> to vector<64x64xf32>
    %cst_42 = arith.constant dense<0.000000e+00> : vector<2x64xf32>
    %53 = tpu.matmul %34, %52, %cst_42 {dimension_numbers = #tpu.dot_dimension_numbers<[1], [0], [0], [1], [0, 0, 1, 1], [], []>} : vector<2x64xf32>, vector<64x64xf32>, vector<2x64xf32> -> vector<2x64xf32>
    %c1_43 = arith.constant 1 : index
    %c0_44 = arith.constant 0 : index
    %c0_45 = arith.constant 0 : index
    %54 = vector.load %arg13[%c1_43, %c0_44, %c0_45] : memref<4x64x64xf32, #tpu.memory_space<vmem>>, vector<1x64x64xf32>
    %55 = vector.shape_cast %54 : vector<1x64x64xf32> to vector<64x64xf32>
    %cst_46 = arith.constant dense<0.000000e+00> : vector<2x64xf32>
    %56 = tpu.matmul %0, %55, %cst_46 {dimension_numbers = #tpu.dot_dimension_numbers<[1], [0], [0], [1], [0, 0, 1, 1], [], []>} : vector<2x64xf32>, vector<64x64xf32>, vector<2x64xf32> -> vector<2x64xf32>
    %57 = arith.addf %53, %56 : vector<2x64xf32>
    %c1_47 = arith.constant 1 : index
    %c0_48 = arith.constant 0 : index
    %c0_49 = arith.constant 0 : index
    %58 = vector.load %arg14[%c1_47, %c0_48, %c0_49] : memref<4x1x64xf32, #tpu.memory_space<vmem>>, vector<1x1x64xf32>
    %59 = vector.shape_cast %58 : vector<1x1x64xf32> to vector<1x64xf32>
    %60 = vector.broadcast %59 : vector<1x64xf32> to vector<2x64xf32>
    %61 = arith.addf %57, %60 : vector<2x64xf32>
    %62 = arith.negf %61 : vector<2x64xf32>
    %63 = math.exp %62 : vector<2x64xf32>
    %cst_50 = arith.constant 1.000000e+00 : f32
    %64 = vector.broadcast %cst_50 : f32 to vector<2x64xf32>
    %65 = arith.addf %64, %63 : vector<2x64xf32>
    %66 = arith.divf %64, %65 : vector<2x64xf32>
    %c2 = arith.constant 2 : index
    %c0_51 = arith.constant 0 : index
    %c0_52 = arith.constant 0 : index
    %67 = vector.load %arg12[%c2, %c0_51, %c0_52] : memref<4x64x64xf32, #tpu.memory_space<vmem>>, vector<1x64x64xf32>
    %68 = vector.shape_cast %67 : vector<1x64x64xf32> to vector<64x64xf32>
    %cst_53 = arith.constant dense<0.000000e+00> : vector<2x64xf32>
    %69 = tpu.matmul %34, %68, %cst_53 {dimension_numbers = #tpu.dot_dimension_numbers<[1], [0], [0], [1], [0, 0, 1, 1], [], []>} : vector<2x64xf32>, vector<64x64xf32>, vector<2x64xf32> -> vector<2x64xf32>
    %c2_54 = arith.constant 2 : index
    %c0_55 = arith.constant 0 : index
    %c0_56 = arith.constant 0 : index
    %70 = vector.load %arg13[%c2_54, %c0_55, %c0_56] : memref<4x64x64xf32, #tpu.memory_space<vmem>>, vector<1x64x64xf32>
    %71 = vector.shape_cast %70 : vector<1x64x64xf32> to vector<64x64xf32>
    %cst_57 = arith.constant dense<0.000000e+00> : vector<2x64xf32>
    %72 = tpu.matmul %0, %71, %cst_57 {dimension_numbers = #tpu.dot_dimension_numbers<[1], [0], [0], [1], [0, 0, 1, 1], [], []>} : vector<2x64xf32>, vector<64x64xf32>, vector<2x64xf32> -> vector<2x64xf32>
    %73 = arith.addf %69, %72 : vector<2x64xf32>
    %c2_58 = arith.constant 2 : index
    %c0_59 = arith.constant 0 : index
    %c0_60 = arith.constant 0 : index
    %74 = vector.load %arg14[%c2_58, %c0_59, %c0_60] : memref<4x1x64xf32, #tpu.memory_space<vmem>>, vector<1x1x64xf32>
    %75 = vector.shape_cast %74 : vector<1x1x64xf32> to vector<1x64xf32>
    %76 = vector.broadcast %75 : vector<1x64xf32> to vector<2x64xf32>
    %77 = arith.addf %73, %76 : vector<2x64xf32>
    %78 = math.tanh %77 : vector<2x64xf32>
    %c3 = arith.constant 3 : index
    %c0_61 = arith.constant 0 : index
    %c0_62 = arith.constant 0 : index
    %79 = vector.load %arg12[%c3, %c0_61, %c0_62] : memref<4x64x64xf32, #tpu.memory_space<vmem>>, vector<1x64x64xf32>
    %80 = vector.shape_cast %79 : vector<1x64x64xf32> to vector<64x64xf32>
    %cst_63 = arith.constant dense<0.000000e+00> : vector<2x64xf32>
    %81 = tpu.matmul %34, %80, %cst_63 {dimension_numbers = #tpu.dot_dimension_numbers<[1], [0], [0], [1], [0, 0, 1, 1], [], []>} : vector<2x64xf32>, vector<64x64xf32>, vector<2x64xf32> -> vector<2x64xf32>
    %c3_64 = arith.constant 3 : index
    %c0_65 = arith.constant 0 : index
    %c0_66 = arith.constant 0 : index
    %82 = vector.load %arg13[%c3_64, %c0_65, %c0_66] : memref<4x64x64xf32, #tpu.memory_space<vmem>>, vector<1x64x64xf32>
    %83 = vector.shape_cast %82 : vector<1x64x64xf32> to vector<64x64xf32>
    %cst_67 = arith.constant dense<0.000000e+00> : vector<2x64xf32>
    %84 = tpu.matmul %0, %83, %cst_67 {dimension_numbers = #tpu.dot_dimension_numbers<[1], [0], [0], [1], [0, 0, 1, 1], [], []>} : vector<2x64xf32>, vector<64x64xf32>, vector<2x64xf32> -> vector<2x64xf32>
    %85 = arith.addf %81, %84 : vector<2x64xf32>
    %c3_68 = arith.constant 3 : index
    %c0_69 = arith.constant 0 : index
    %c0_70 = arith.constant 0 : index
    %86 = vector.load %arg14[%c3_68, %c0_69, %c0_70] : memref<4x1x64xf32, #tpu.memory_space<vmem>>, vector<1x1x64xf32>
    %87 = vector.shape_cast %86 : vector<1x1x64xf32> to vector<1x64xf32>
    %88 = vector.broadcast %87 : vector<1x64xf32> to vector<2x64xf32>
    %89 = arith.addf %85, %88 : vector<2x64xf32>
    %90 = arith.negf %89 : vector<2x64xf32>
    %91 = math.exp %90 : vector<2x64xf32>
    %cst_71 = arith.constant 1.000000e+00 : f32
    %92 = vector.broadcast %cst_71 : f32 to vector<2x64xf32>
    %93 = arith.addf %92, %91 : vector<2x64xf32>
    %94 = arith.divf %92, %93 : vector<2x64xf32>
    %95 = arith.mulf %66, %1 : vector<2x64xf32>
    %96 = arith.mulf %50, %78 : vector<2x64xf32>
    %97 = arith.addf %95, %96 : vector<2x64xf32>
    %98 = math.tanh %97 : vector<2x64xf32>
    %99 = arith.mulf %94, %98 : vector<2x64xf32>
    %c1_72 = arith.constant 1 : index
    %c0_73 = arith.constant 0 : index
    %c0_74 = arith.constant 0 : index
    %100 = vector.load %arg1[%c1_72, %c0_73, %c0_74] : memref<3x2x16xf32, #tpu.memory_space<vmem>>, vector<1x2x16xf32>
    %101 = vector.shape_cast %100 : vector<1x2x16xf32> to vector<2x16xf32>
    %c0_75 = arith.constant 0 : index
    %c0_76 = arith.constant 0 : index
    %102 = vector.load %arg2[%c0_75, %c0_76] : memref<16x32xf32, #tpu.memory_space<vmem>>, vector<16x32xf32>
    %cst_77 = arith.constant dense<0.000000e+00> : vector<2x32xf32>
    %103 = tpu.matmul %101, %102, %cst_77 {dimension_numbers = #tpu.dot_dimension_numbers<[1], [0], [0], [1], [0, 0, 1, 1], [], []>} : vector<2x16xf32>, vector<16x32xf32>, vector<2x32xf32> -> vector<2x32xf32>
    %c0_78 = arith.constant 0 : index
    %c0_79 = arith.constant 0 : index
    %104 = vector.load %arg3[%c0_78, %c0_79] : memref<1x32xf32, #tpu.memory_space<vmem>>, vector<1x32xf32>
    %105 = vector.broadcast %104 : vector<1x32xf32> to vector<2x32xf32>
    %106 = arith.addf %103, %105 : vector<2x32xf32>
    %c0_80 = arith.constant 0 : index
    %c0_81 = arith.constant 0 : index
    %107 = vector.load %arg4[%c0_80, %c0_81] : memref<1x32xf32, #tpu.memory_space<vmem>>, vector<1x32xf32>
    %108 = vector.broadcast %107 : vector<1x32xf32> to vector<2x32xf32>
    %109 = arith.mulf %106, %108 : vector<2x32xf32>
    %c0_82 = arith.constant 0 : index
    %c0_83 = arith.constant 0 : index
    %110 = vector.load %arg5[%c0_82, %c0_83] : memref<1x32xf32, #tpu.memory_space<vmem>>, vector<1x32xf32>
    %111 = vector.broadcast %110 : vector<1x32xf32> to vector<2x32xf32>
    %112 = arith.addf %109, %111 : vector<2x32xf32>
    %cst_84 = arith.constant 0.000000e+00 : f32
    %113 = vector.broadcast %cst_84 : f32 to vector<2x32xf32>
    %114 = arith.maximumf %112, %113 : vector<2x32xf32>
    %c0_85 = arith.constant 0 : index
    %c0_86 = arith.constant 0 : index
    %115 = vector.load %arg6[%c0_85, %c0_86] : memref<32x32xf32, #tpu.memory_space<vmem>>, vector<32x32xf32>
    %cst_87 = arith.constant dense<0.000000e+00> : vector<2x32xf32>
    %116 = tpu.matmul %114, %115, %cst_87 {dimension_numbers = #tpu.dot_dimension_numbers<[1], [0], [0], [1], [0, 0, 1, 1], [], []>} : vector<2x32xf32>, vector<32x32xf32>, vector<2x32xf32> -> vector<2x32xf32>
    %c0_88 = arith.constant 0 : index
    %c0_89 = arith.constant 0 : index
    %117 = vector.load %arg7[%c0_88, %c0_89] : memref<1x32xf32, #tpu.memory_space<vmem>>, vector<1x32xf32>
    %118 = vector.broadcast %117 : vector<1x32xf32> to vector<2x32xf32>
    %119 = arith.addf %116, %118 : vector<2x32xf32>
    %c0_90 = arith.constant 0 : index
    %c0_91 = arith.constant 0 : index
    %120 = vector.load %arg8[%c0_90, %c0_91] : memref<1x32xf32, #tpu.memory_space<vmem>>, vector<1x32xf32>
    %121 = vector.broadcast %120 : vector<1x32xf32> to vector<2x32xf32>
    %122 = arith.mulf %119, %121 : vector<2x32xf32>
    %c0_92 = arith.constant 0 : index
    %c0_93 = arith.constant 0 : index
    %123 = vector.load %arg9[%c0_92, %c0_93] : memref<1x32xf32, #tpu.memory_space<vmem>>, vector<1x32xf32>
    %124 = vector.broadcast %123 : vector<1x32xf32> to vector<2x32xf32>
    %125 = arith.addf %122, %124 : vector<2x32xf32>
    %cst_94 = arith.constant 0.000000e+00 : f32
    %126 = vector.broadcast %cst_94 : f32 to vector<2x32xf32>
    %127 = arith.maximumf %125, %126 : vector<2x32xf32>
    %c0_95 = arith.constant 0 : index
    %c0_96 = arith.constant 0 : index
    %128 = vector.load %arg10[%c0_95, %c0_96] : memref<32x64xf32, #tpu.memory_space<vmem>>, vector<32x64xf32>
    %cst_97 = arith.constant dense<0.000000e+00> : vector<2x64xf32>
    %129 = tpu.matmul %127, %128, %cst_97 {dimension_numbers = #tpu.dot_dimension_numbers<[1], [0], [0], [1], [0, 0, 1, 1], [], []>} : vector<2x32xf32>, vector<32x64xf32>, vector<2x64xf32> -> vector<2x64xf32>
    %c0_98 = arith.constant 0 : index
    %c0_99 = arith.constant 0 : index
    %130 = vector.load %arg11[%c0_98, %c0_99] : memref<1x64xf32, #tpu.memory_space<vmem>>, vector<1x64xf32>
    %131 = vector.broadcast %130 : vector<1x64xf32> to vector<2x64xf32>
    %132 = arith.addf %129, %131 : vector<2x64xf32>
    %c0_100 = arith.constant 0 : index
    %c0_101 = arith.constant 0 : index
    %c0_102 = arith.constant 0 : index
    %133 = vector.load %arg12[%c0_100, %c0_101, %c0_102] : memref<4x64x64xf32, #tpu.memory_space<vmem>>, vector<1x64x64xf32>
    %134 = vector.shape_cast %133 : vector<1x64x64xf32> to vector<64x64xf32>
    %cst_103 = arith.constant dense<0.000000e+00> : vector<2x64xf32>
    %135 = tpu.matmul %132, %134, %cst_103 {dimension_numbers = #tpu.dot_dimension_numbers<[1], [0], [0], [1], [0, 0, 1, 1], [], []>} : vector<2x64xf32>, vector<64x64xf32>, vector<2x64xf32> -> vector<2x64xf32>
    %c0_104 = arith.constant 0 : index
    %c0_105 = arith.constant 0 : index
    %c0_106 = arith.constant 0 : index
    %136 = vector.load %arg13[%c0_104, %c0_105, %c0_106] : memref<4x64x64xf32, #tpu.memory_space<vmem>>, vector<1x64x64xf32>
    %137 = vector.shape_cast %136 : vector<1x64x64xf32> to vector<64x64xf32>
    %cst_107 = arith.constant dense<0.000000e+00> : vector<2x64xf32>
    %138 = tpu.matmul %99, %137, %cst_107 {dimension_numbers = #tpu.dot_dimension_numbers<[1], [0], [0], [1], [0, 0, 1, 1], [], []>} : vector<2x64xf32>, vector<64x64xf32>, vector<2x64xf32> -> vector<2x64xf32>
    %139 = arith.addf %135, %138 : vector<2x64xf32>
    %c0_108 = arith.constant 0 : index
    %c0_109 = arith.constant 0 : index
    %c0_110 = arith.constant 0 : index
    %140 = vector.load %arg14[%c0_108, %c0_109, %c0_110] : memref<4x1x64xf32, #tpu.memory_space<vmem>>, vector<1x1x64xf32>
    %141 = vector.shape_cast %140 : vector<1x1x64xf32> to vector<1x64xf32>
    %142 = vector.broadcast %141 : vector<1x64xf32> to vector<2x64xf32>
    %143 = arith.addf %139, %142 : vector<2x64xf32>
    %144 = arith.negf %143 : vector<2x64xf32>
    %145 = math.exp %144 : vector<2x64xf32>
    %cst_111 = arith.constant 1.000000e+00 : f32
    %146 = vector.broadcast %cst_111 : f32 to vector<2x64xf32>
    %147 = arith.addf %146, %145 : vector<2x64xf32>
    %148 = arith.divf %146, %147 : vector<2x64xf32>
    %c1_112 = arith.constant 1 : index
    %c0_113 = arith.constant 0 : index
    %c0_114 = arith.constant 0 : index
    %149 = vector.load %arg12[%c1_112, %c0_113, %c0_114] : memref<4x64x64xf32, #tpu.memory_space<vmem>>, vector<1x64x64xf32>
    %150 = vector.shape_cast %149 : vector<1x64x64xf32> to vector<64x64xf32>
    %cst_115 = arith.constant dense<0.000000e+00> : vector<2x64xf32>
    %151 = tpu.matmul %132, %150, %cst_115 {dimension_numbers = #tpu.dot_dimension_numbers<[1], [0], [0], [1], [0, 0, 1, 1], [], []>} : vector<2x64xf32>, vector<64x64xf32>, vector<2x64xf32> -> vector<2x64xf32>
    %c1_116 = arith.constant 1 : index
    %c0_117 = arith.constant 0 : index
    %c0_118 = arith.constant 0 : index
    %152 = vector.load %arg13[%c1_116, %c0_117, %c0_118] : memref<4x64x64xf32, #tpu.memory_space<vmem>>, vector<1x64x64xf32>
    %153 = vector.shape_cast %152 : vector<1x64x64xf32> to vector<64x64xf32>
    %cst_119 = arith.constant dense<0.000000e+00> : vector<2x64xf32>
    %154 = tpu.matmul %99, %153, %cst_119 {dimension_numbers = #tpu.dot_dimension_numbers<[1], [0], [0], [1], [0, 0, 1, 1], [], []>} : vector<2x64xf32>, vector<64x64xf32>, vector<2x64xf32> -> vector<2x64xf32>
    %155 = arith.addf %151, %154 : vector<2x64xf32>
    %c1_120 = arith.constant 1 : index
    %c0_121 = arith.constant 0 : index
    %c0_122 = arith.constant 0 : index
    %156 = vector.load %arg14[%c1_120, %c0_121, %c0_122] : memref<4x1x64xf32, #tpu.memory_space<vmem>>, vector<1x1x64xf32>
    %157 = vector.shape_cast %156 : vector<1x1x64xf32> to vector<1x64xf32>
    %158 = vector.broadcast %157 : vector<1x64xf32> to vector<2x64xf32>
    %159 = arith.addf %155, %158 : vector<2x64xf32>
    %160 = arith.negf %159 : vector<2x64xf32>
    %161 = math.exp %160 : vector<2x64xf32>
    %cst_123 = arith.constant 1.000000e+00 : f32
    %162 = vector.broadcast %cst_123 : f32 to vector<2x64xf32>
    %163 = arith.addf %162, %161 : vector<2x64xf32>
    %164 = arith.divf %162, %163 : vector<2x64xf32>
    %c2_124 = arith.constant 2 : index
    %c0_125 = arith.constant 0 : index
    %c0_126 = arith.constant 0 : index
    %165 = vector.load %arg12[%c2_124, %c0_125, %c0_126] : memref<4x64x64xf32, #tpu.memory_space<vmem>>, vector<1x64x64xf32>
    %166 = vector.shape_cast %165 : vector<1x64x64xf32> to vector<64x64xf32>
    %cst_127 = arith.constant dense<0.000000e+00> : vector<2x64xf32>
    %167 = tpu.matmul %132, %166, %cst_127 {dimension_numbers = #tpu.dot_dimension_numbers<[1], [0], [0], [1], [0, 0, 1, 1], [], []>} : vector<2x64xf32>, vector<64x64xf32>, vector<2x64xf32> -> vector<2x64xf32>
    %c2_128 = arith.constant 2 : index
    %c0_129 = arith.constant 0 : index
    %c0_130 = arith.constant 0 : index
    %168 = vector.load %arg13[%c2_128, %c0_129, %c0_130] : memref<4x64x64xf32, #tpu.memory_space<vmem>>, vector<1x64x64xf32>
    %169 = vector.shape_cast %168 : vector<1x64x64xf32> to vector<64x64xf32>
    %cst_131 = arith.constant dense<0.000000e+00> : vector<2x64xf32>
    %170 = tpu.matmul %99, %169, %cst_131 {dimension_numbers = #tpu.dot_dimension_numbers<[1], [0], [0], [1], [0, 0, 1, 1], [], []>} : vector<2x64xf32>, vector<64x64xf32>, vector<2x64xf32> -> vector<2x64xf32>
    %171 = arith.addf %167, %170 : vector<2x64xf32>
    %c2_132 = arith.constant 2 : index
    %c0_133 = arith.constant 0 : index
    %c0_134 = arith.constant 0 : index
    %172 = vector.load %arg14[%c2_132, %c0_133, %c0_134] : memref<4x1x64xf32, #tpu.memory_space<vmem>>, vector<1x1x64xf32>
    %173 = vector.shape_cast %172 : vector<1x1x64xf32> to vector<1x64xf32>
    %174 = vector.broadcast %173 : vector<1x64xf32> to vector<2x64xf32>
    %175 = arith.addf %171, %174 : vector<2x64xf32>
    %176 = math.tanh %175 : vector<2x64xf32>
    %c3_135 = arith.constant 3 : index
    %c0_136 = arith.constant 0 : index
    %c0_137 = arith.constant 0 : index
    %177 = vector.load %arg12[%c3_135, %c0_136, %c0_137] : memref<4x64x64xf32, #tpu.memory_space<vmem>>, vector<1x64x64xf32>
    %178 = vector.shape_cast %177 : vector<1x64x64xf32> to vector<64x64xf32>
    %cst_138 = arith.constant dense<0.000000e+00> : vector<2x64xf32>
    %179 = tpu.matmul %132, %178, %cst_138 {dimension_numbers = #tpu.dot_dimension_numbers<[1], [0], [0], [1], [0, 0, 1, 1], [], []>} : vector<2x64xf32>, vector<64x64xf32>, vector<2x64xf32> -> vector<2x64xf32>
    %c3_139 = arith.constant 3 : index
    %c0_140 = arith.constant 0 : index
    %c0_141 = arith.constant 0 : index
    %180 = vector.load %arg13[%c3_139, %c0_140, %c0_141] : memref<4x64x64xf32, #tpu.memory_space<vmem>>, vector<1x64x64xf32>
    %181 = vector.shape_cast %180 : vector<1x64x64xf32> to vector<64x64xf32>
    %cst_142 = arith.constant dense<0.000000e+00> : vector<2x64xf32>
    %182 = tpu.matmul %99, %181, %cst_142 {dimension_numbers = #tpu.dot_dimension_numbers<[1], [0], [0], [1], [0, 0, 1, 1], [], []>} : vector<2x64xf32>, vector<64x64xf32>, vector<2x64xf32> -> vector<2x64xf32>
    %183 = arith.addf %179, %182 : vector<2x64xf32>
    %c3_143 = arith.constant 3 : index
    %c0_144 = arith.constant 0 : index
    %c0_145 = arith.constant 0 : index
    %184 = vector.load %arg14[%c3_143, %c0_144, %c0_145] : memref<4x1x64xf32, #tpu.memory_space<vmem>>, vector<1x1x64xf32>
    %185 = vector.shape_cast %184 : vector<1x1x64xf32> to vector<1x64xf32>
    %186 = vector.broadcast %185 : vector<1x64xf32> to vector<2x64xf32>
    %187 = arith.addf %183, %186 : vector<2x64xf32>
    %188 = arith.negf %187 : vector<2x64xf32>
    %189 = math.exp %188 : vector<2x64xf32>
    %cst_146 = arith.constant 1.000000e+00 : f32
    %190 = vector.broadcast %cst_146 : f32 to vector<2x64xf32>
    %191 = arith.addf %190, %189 : vector<2x64xf32>
    %192 = arith.divf %190, %191 : vector<2x64xf32>
    %193 = arith.mulf %164, %97 : vector<2x64xf32>
    %194 = arith.mulf %148, %176 : vector<2x64xf32>
    %195 = arith.addf %193, %194 : vector<2x64xf32>
    %196 = math.tanh %195 : vector<2x64xf32>
    %197 = arith.mulf %192, %196 : vector<2x64xf32>
    %c2_147 = arith.constant 2 : index
    %c0_148 = arith.constant 0 : index
    %c0_149 = arith.constant 0 : index
    %198 = vector.load %arg1[%c2_147, %c0_148, %c0_149] : memref<3x2x16xf32, #tpu.memory_space<vmem>>, vector<1x2x16xf32>
    %199 = vector.shape_cast %198 : vector<1x2x16xf32> to vector<2x16xf32>
    %c0_150 = arith.constant 0 : index
    %c0_151 = arith.constant 0 : index
    %200 = vector.load %arg2[%c0_150, %c0_151] : memref<16x32xf32, #tpu.memory_space<vmem>>, vector<16x32xf32>
    %cst_152 = arith.constant dense<0.000000e+00> : vector<2x32xf32>
    %201 = tpu.matmul %199, %200, %cst_152 {dimension_numbers = #tpu.dot_dimension_numbers<[1], [0], [0], [1], [0, 0, 1, 1], [], []>} : vector<2x16xf32>, vector<16x32xf32>, vector<2x32xf32> -> vector<2x32xf32>
    %c0_153 = arith.constant 0 : index
    %c0_154 = arith.constant 0 : index
    %202 = vector.load %arg3[%c0_153, %c0_154] : memref<1x32xf32, #tpu.memory_space<vmem>>, vector<1x32xf32>
    %203 = vector.broadcast %202 : vector<1x32xf32> to vector<2x32xf32>
    %204 = arith.addf %201, %203 : vector<2x32xf32>
    %c0_155 = arith.constant 0 : index
    %c0_156 = arith.constant 0 : index
    %205 = vector.load %arg4[%c0_155, %c0_156] : memref<1x32xf32, #tpu.memory_space<vmem>>, vector<1x32xf32>
    %206 = vector.broadcast %205 : vector<1x32xf32> to vector<2x32xf32>
    %207 = arith.mulf %204, %206 : vector<2x32xf32>
    %c0_157 = arith.constant 0 : index
    %c0_158 = arith.constant 0 : index
    %208 = vector.load %arg5[%c0_157, %c0_158] : memref<1x32xf32, #tpu.memory_space<vmem>>, vector<1x32xf32>
    %209 = vector.broadcast %208 : vector<1x32xf32> to vector<2x32xf32>
    %210 = arith.addf %207, %209 : vector<2x32xf32>
    %cst_159 = arith.constant 0.000000e+00 : f32
    %211 = vector.broadcast %cst_159 : f32 to vector<2x32xf32>
    %212 = arith.maximumf %210, %211 : vector<2x32xf32>
    %c0_160 = arith.constant 0 : index
    %c0_161 = arith.constant 0 : index
    %213 = vector.load %arg6[%c0_160, %c0_161] : memref<32x32xf32, #tpu.memory_space<vmem>>, vector<32x32xf32>
    %cst_162 = arith.constant dense<0.000000e+00> : vector<2x32xf32>
    %214 = tpu.matmul %212, %213, %cst_162 {dimension_numbers = #tpu.dot_dimension_numbers<[1], [0], [0], [1], [0, 0, 1, 1], [], []>} : vector<2x32xf32>, vector<32x32xf32>, vector<2x32xf32> -> vector<2x32xf32>
    %c0_163 = arith.constant 0 : index
    %c0_164 = arith.constant 0 : index
    %215 = vector.load %arg7[%c0_163, %c0_164] : memref<1x32xf32, #tpu.memory_space<vmem>>, vector<1x32xf32>
    %216 = vector.broadcast %215 : vector<1x32xf32> to vector<2x32xf32>
    %217 = arith.addf %214, %216 : vector<2x32xf32>
    %c0_165 = arith.constant 0 : index
    %c0_166 = arith.constant 0 : index
    %218 = vector.load %arg8[%c0_165, %c0_166] : memref<1x32xf32, #tpu.memory_space<vmem>>, vector<1x32xf32>
    %219 = vector.broadcast %218 : vector<1x32xf32> to vector<2x32xf32>
    %220 = arith.mulf %217, %219 : vector<2x32xf32>
    %c0_167 = arith.constant 0 : index
    %c0_168 = arith.constant 0 : index
    %221 = vector.load %arg9[%c0_167, %c0_168] : memref<1x32xf32, #tpu.memory_space<vmem>>, vector<1x32xf32>
    %222 = vector.broadcast %221 : vector<1x32xf32> to vector<2x32xf32>
    %223 = arith.addf %220, %222 : vector<2x32xf32>
    %cst_169 = arith.constant 0.000000e+00 : f32
    %224 = vector.broadcast %cst_169 : f32 to vector<2x32xf32>
    %225 = arith.maximumf %223, %224 : vector<2x32xf32>
    %c0_170 = arith.constant 0 : index
    %c0_171 = arith.constant 0 : index
    %226 = vector.load %arg10[%c0_170, %c0_171] : memref<32x64xf32, #tpu.memory_space<vmem>>, vector<32x64xf32>
    %cst_172 = arith.constant dense<0.000000e+00> : vector<2x64xf32>
    %227 = tpu.matmul %225, %226, %cst_172 {dimension_numbers = #tpu.dot_dimension_numbers<[1], [0], [0], [1], [0, 0, 1, 1], [], []>} : vector<2x32xf32>, vector<32x64xf32>, vector<2x64xf32> -> vector<2x64xf32>
    %c0_173 = arith.constant 0 : index
    %c0_174 = arith.constant 0 : index
    %228 = vector.load %arg11[%c0_173, %c0_174] : memref<1x64xf32, #tpu.memory_space<vmem>>, vector<1x64xf32>
    %229 = vector.broadcast %228 : vector<1x64xf32> to vector<2x64xf32>
    %230 = arith.addf %227, %229 : vector<2x64xf32>
    %c0_175 = arith.constant 0 : index
    %c0_176 = arith.constant 0 : index
    %c0_177 = arith.constant 0 : index
    %231 = vector.load %arg12[%c0_175, %c0_176, %c0_177] : memref<4x64x64xf32, #tpu.memory_space<vmem>>, vector<1x64x64xf32>
    %232 = vector.shape_cast %231 : vector<1x64x64xf32> to vector<64x64xf32>
    %cst_178 = arith.constant dense<0.000000e+00> : vector<2x64xf32>
    %233 = tpu.matmul %230, %232, %cst_178 {dimension_numbers = #tpu.dot_dimension_numbers<[1], [0], [0], [1], [0, 0, 1, 1], [], []>} : vector<2x64xf32>, vector<64x64xf32>, vector<2x64xf32> -> vector<2x64xf32>
    %c0_179 = arith.constant 0 : index
    %c0_180 = arith.constant 0 : index
    %c0_181 = arith.constant 0 : index
    %234 = vector.load %arg13[%c0_179, %c0_180, %c0_181] : memref<4x64x64xf32, #tpu.memory_space<vmem>>, vector<1x64x64xf32>
    %235 = vector.shape_cast %234 : vector<1x64x64xf32> to vector<64x64xf32>
    %cst_182 = arith.constant dense<0.000000e+00> : vector<2x64xf32>
    %236 = tpu.matmul %197, %235, %cst_182 {dimension_numbers = #tpu.dot_dimension_numbers<[1], [0], [0], [1], [0, 0, 1, 1], [], []>} : vector<2x64xf32>, vector<64x64xf32>, vector<2x64xf32> -> vector<2x64xf32>
    %237 = arith.addf %233, %236 : vector<2x64xf32>
    %c0_183 = arith.constant 0 : index
    %c0_184 = arith.constant 0 : index
    %c0_185 = arith.constant 0 : index
    %238 = vector.load %arg14[%c0_183, %c0_184, %c0_185] : memref<4x1x64xf32, #tpu.memory_space<vmem>>, vector<1x1x64xf32>
    %239 = vector.shape_cast %238 : vector<1x1x64xf32> to vector<1x64xf32>
    %240 = vector.broadcast %239 : vector<1x64xf32> to vector<2x64xf32>
    %241 = arith.addf %237, %240 : vector<2x64xf32>
    %242 = arith.negf %241 : vector<2x64xf32>
    %243 = math.exp %242 : vector<2x64xf32>
    %cst_186 = arith.constant 1.000000e+00 : f32
    %244 = vector.broadcast %cst_186 : f32 to vector<2x64xf32>
    %245 = arith.addf %244, %243 : vector<2x64xf32>
    %246 = arith.divf %244, %245 : vector<2x64xf32>
    %c1_187 = arith.constant 1 : index
    %c0_188 = arith.constant 0 : index
    %c0_189 = arith.constant 0 : index
    %247 = vector.load %arg12[%c1_187, %c0_188, %c0_189] : memref<4x64x64xf32, #tpu.memory_space<vmem>>, vector<1x64x64xf32>
    %248 = vector.shape_cast %247 : vector<1x64x64xf32> to vector<64x64xf32>
    %cst_190 = arith.constant dense<0.000000e+00> : vector<2x64xf32>
    %249 = tpu.matmul %230, %248, %cst_190 {dimension_numbers = #tpu.dot_dimension_numbers<[1], [0], [0], [1], [0, 0, 1, 1], [], []>} : vector<2x64xf32>, vector<64x64xf32>, vector<2x64xf32> -> vector<2x64xf32>
    %c1_191 = arith.constant 1 : index
    %c0_192 = arith.constant 0 : index
    %c0_193 = arith.constant 0 : index
    %250 = vector.load %arg13[%c1_191, %c0_192, %c0_193] : memref<4x64x64xf32, #tpu.memory_space<vmem>>, vector<1x64x64xf32>
    %251 = vector.shape_cast %250 : vector<1x64x64xf32> to vector<64x64xf32>
    %cst_194 = arith.constant dense<0.000000e+00> : vector<2x64xf32>
    %252 = tpu.matmul %197, %251, %cst_194 {dimension_numbers = #tpu.dot_dimension_numbers<[1], [0], [0], [1], [0, 0, 1, 1], [], []>} : vector<2x64xf32>, vector<64x64xf32>, vector<2x64xf32> -> vector<2x64xf32>
    %253 = arith.addf %249, %252 : vector<2x64xf32>
    %c1_195 = arith.constant 1 : index
    %c0_196 = arith.constant 0 : index
    %c0_197 = arith.constant 0 : index
    %254 = vector.load %arg14[%c1_195, %c0_196, %c0_197] : memref<4x1x64xf32, #tpu.memory_space<vmem>>, vector<1x1x64xf32>
    %255 = vector.shape_cast %254 : vector<1x1x64xf32> to vector<1x64xf32>
    %256 = vector.broadcast %255 : vector<1x64xf32> to vector<2x64xf32>
    %257 = arith.addf %253, %256 : vector<2x64xf32>
    %258 = arith.negf %257 : vector<2x64xf32>
    %259 = math.exp %258 : vector<2x64xf32>
    %cst_198 = arith.constant 1.000000e+00 : f32
    %260 = vector.broadcast %cst_198 : f32 to vector<2x64xf32>
    %261 = arith.addf %260, %259 : vector<2x64xf32>
    %262 = arith.divf %260, %261 : vector<2x64xf32>
    %c2_199 = arith.constant 2 : index
    %c0_200 = arith.constant 0 : index
    %c0_201 = arith.constant 0 : index
    %263 = vector.load %arg12[%c2_199, %c0_200, %c0_201] : memref<4x64x64xf32, #tpu.memory_space<vmem>>, vector<1x64x64xf32>
    %264 = vector.shape_cast %263 : vector<1x64x64xf32> to vector<64x64xf32>
    %cst_202 = arith.constant dense<0.000000e+00> : vector<2x64xf32>
    %265 = tpu.matmul %230, %264, %cst_202 {dimension_numbers = #tpu.dot_dimension_numbers<[1], [0], [0], [1], [0, 0, 1, 1], [], []>} : vector<2x64xf32>, vector<64x64xf32>, vector<2x64xf32> -> vector<2x64xf32>
    %c2_203 = arith.constant 2 : index
    %c0_204 = arith.constant 0 : index
    %c0_205 = arith.constant 0 : index
    %266 = vector.load %arg13[%c2_203, %c0_204, %c0_205] : memref<4x64x64xf32, #tpu.memory_space<vmem>>, vector<1x64x64xf32>
    %267 = vector.shape_cast %266 : vector<1x64x64xf32> to vector<64x64xf32>
    %cst_206 = arith.constant dense<0.000000e+00> : vector<2x64xf32>
    %268 = tpu.matmul %197, %267, %cst_206 {dimension_numbers = #tpu.dot_dimension_numbers<[1], [0], [0], [1], [0, 0, 1, 1], [], []>} : vector<2x64xf32>, vector<64x64xf32>, vector<2x64xf32> -> vector<2x64xf32>
    %269 = arith.addf %265, %268 : vector<2x64xf32>
    %c2_207 = arith.constant 2 : index
    %c0_208 = arith.constant 0 : index
    %c0_209 = arith.constant 0 : index
    %270 = vector.load %arg14[%c2_207, %c0_208, %c0_209] : memref<4x1x64xf32, #tpu.memory_space<vmem>>, vector<1x1x64xf32>
    %271 = vector.shape_cast %270 : vector<1x1x64xf32> to vector<1x64xf32>
    %272 = vector.broadcast %271 : vector<1x64xf32> to vector<2x64xf32>
    %273 = arith.addf %269, %272 : vector<2x64xf32>
    %274 = math.tanh %273 : vector<2x64xf32>
    %c3_210 = arith.constant 3 : index
    %c0_211 = arith.constant 0 : index
    %c0_212 = arith.constant 0 : index
    %275 = vector.load %arg12[%c3_210, %c0_211, %c0_212] : memref<4x64x64xf32, #tpu.memory_space<vmem>>, vector<1x64x64xf32>
    %276 = vector.shape_cast %275 : vector<1x64x64xf32> to vector<64x64xf32>
    %cst_213 = arith.constant dense<0.000000e+00> : vector<2x64xf32>
    %277 = tpu.matmul %230, %276, %cst_213 {dimension_numbers = #tpu.dot_dimension_numbers<[1], [0], [0], [1], [0, 0, 1, 1], [], []>} : vector<2x64xf32>, vector<64x64xf32>, vector<2x64xf32> -> vector<2x64xf32>
    %c3_214 = arith.constant 3 : index
    %c0_215 = arith.constant 0 : index
    %c0_216 = arith.constant 0 : index
    %278 = vector.load %arg13[%c3_214, %c0_215, %c0_216] : memref<4x64x64xf32, #tpu.memory_space<vmem>>, vector<1x64x64xf32>
    %279 = vector.shape_cast %278 : vector<1x64x64xf32> to vector<64x64xf32>
    %cst_217 = arith.constant dense<0.000000e+00> : vector<2x64xf32>
    %280 = tpu.matmul %197, %279, %cst_217 {dimension_numbers = #tpu.dot_dimension_numbers<[1], [0], [0], [1], [0, 0, 1, 1], [], []>} : vector<2x64xf32>, vector<64x64xf32>, vector<2x64xf32> -> vector<2x64xf32>
    %281 = arith.addf %277, %280 : vector<2x64xf32>
    %c3_218 = arith.constant 3 : index
    %c0_219 = arith.constant 0 : index
    %c0_220 = arith.constant 0 : index
    %282 = vector.load %arg14[%c3_218, %c0_219, %c0_220] : memref<4x1x64xf32, #tpu.memory_space<vmem>>, vector<1x1x64xf32>
    %283 = vector.shape_cast %282 : vector<1x1x64xf32> to vector<1x64xf32>
    %284 = vector.broadcast %283 : vector<1x64xf32> to vector<2x64xf32>
    %285 = arith.addf %281, %284 : vector<2x64xf32>
    %286 = arith.negf %285 : vector<2x64xf32>
    %287 = math.exp %286 : vector<2x64xf32>
    %cst_221 = arith.constant 1.000000e+00 : f32
    %288 = vector.broadcast %cst_221 : f32 to vector<2x64xf32>
    %289 = arith.addf %288, %287 : vector<2x64xf32>
    %290 = arith.divf %288, %289 : vector<2x64xf32>
    %291 = arith.mulf %262, %195 : vector<2x64xf32>
    %292 = arith.mulf %246, %274 : vector<2x64xf32>
    %293 = arith.addf %291, %292 : vector<2x64xf32>
    %294 = math.tanh %293 : vector<2x64xf32>
    %295 = arith.mulf %290, %294 : vector<2x64xf32>
    %c0_i32 = arith.constant 0 : i32
    %c25_i32 = arith.constant 25 : i32
    %296 = arith.addi %c0_i32, %c25_i32 : i32
    %c1_i32 = arith.constant 1 : i32
    %297:3 = scf.for %arg16 = %c0_i32 to %296 step %c1_i32 iter_args(%arg17 = %230, %arg18 = %295, %arg19 = %293) -> (vector<2x64xf32>, vector<2x64xf32>, vector<2x64xf32>)  : i32 {
      %c0_223 = arith.constant 0 : index
      %c0_224 = arith.constant 0 : index
      %c0_225 = arith.constant 0 : index
      %298 = vector.load %arg12[%c0_223, %c0_224, %c0_225] : memref<4x64x64xf32, #tpu.memory_space<vmem>>, vector<1x64x64xf32>
      %299 = vector.shape_cast %298 : vector<1x64x64xf32> to vector<64x64xf32>
      %cst_226 = arith.constant dense<0.000000e+00> : vector<2x64xf32>
      %300 = tpu.matmul %arg17, %299, %cst_226 {dimension_numbers = #tpu.dot_dimension_numbers<[1], [0], [0], [1], [0, 0, 1, 1], [], []>} : vector<2x64xf32>, vector<64x64xf32>, vector<2x64xf32> -> vector<2x64xf32>
      %c0_227 = arith.constant 0 : index
      %c0_228 = arith.constant 0 : index
      %c0_229 = arith.constant 0 : index
      %301 = vector.load %arg13[%c0_227, %c0_228, %c0_229] : memref<4x64x64xf32, #tpu.memory_space<vmem>>, vector<1x64x64xf32>
      %302 = vector.shape_cast %301 : vector<1x64x64xf32> to vector<64x64xf32>
      %cst_230 = arith.constant dense<0.000000e+00> : vector<2x64xf32>
      %303 = tpu.matmul %arg18, %302, %cst_230 {dimension_numbers = #tpu.dot_dimension_numbers<[1], [0], [0], [1], [0, 0, 1, 1], [], []>} : vector<2x64xf32>, vector<64x64xf32>, vector<2x64xf32> -> vector<2x64xf32>
      %304 = arith.addf %300, %303 : vector<2x64xf32>
      %c0_231 = arith.constant 0 : index
      %c0_232 = arith.constant 0 : index
      %c0_233 = arith.constant 0 : index
      %305 = vector.load %arg14[%c0_231, %c0_232, %c0_233] : memref<4x1x64xf32, #tpu.memory_space<vmem>>, vector<1x1x64xf32>
      %306 = vector.shape_cast %305 : vector<1x1x64xf32> to vector<1x64xf32>
      %307 = vector.broadcast %306 : vector<1x64xf32> to vector<2x64xf32>
      %308 = arith.addf %304, %307 : vector<2x64xf32>
      %309 = arith.negf %308 : vector<2x64xf32>
      %310 = math.exp %309 : vector<2x64xf32>
      %cst_234 = arith.constant 1.000000e+00 : f32
      %311 = vector.broadcast %cst_234 : f32 to vector<2x64xf32>
      %312 = arith.addf %311, %310 : vector<2x64xf32>
      %313 = arith.divf %311, %312 : vector<2x64xf32>
      %c1_235 = arith.constant 1 : index
      %c0_236 = arith.constant 0 : index
      %c0_237 = arith.constant 0 : index
      %314 = vector.load %arg12[%c1_235, %c0_236, %c0_237] : memref<4x64x64xf32, #tpu.memory_space<vmem>>, vector<1x64x64xf32>
      %315 = vector.shape_cast %314 : vector<1x64x64xf32> to vector<64x64xf32>
      %cst_238 = arith.constant dense<0.000000e+00> : vector<2x64xf32>
      %316 = tpu.matmul %arg17, %315, %cst_238 {dimension_numbers = #tpu.dot_dimension_numbers<[1], [0], [0], [1], [0, 0, 1, 1], [], []>} : vector<2x64xf32>, vector<64x64xf32>, vector<2x64xf32> -> vector<2x64xf32>
      %c1_239 = arith.constant 1 : index
      %c0_240 = arith.constant 0 : index
      %c0_241 = arith.constant 0 : index
      %317 = vector.load %arg13[%c1_239, %c0_240, %c0_241] : memref<4x64x64xf32, #tpu.memory_space<vmem>>, vector<1x64x64xf32>
      %318 = vector.shape_cast %317 : vector<1x64x64xf32> to vector<64x64xf32>
      %cst_242 = arith.constant dense<0.000000e+00> : vector<2x64xf32>
      %319 = tpu.matmul %arg18, %318, %cst_242 {dimension_numbers = #tpu.dot_dimension_numbers<[1], [0], [0], [1], [0, 0, 1, 1], [], []>} : vector<2x64xf32>, vector<64x64xf32>, vector<2x64xf32> -> vector<2x64xf32>
      %320 = arith.addf %316, %319 : vector<2x64xf32>
      %c1_243 = arith.constant 1 : index
      %c0_244 = arith.constant 0 : index
      %c0_245 = arith.constant 0 : index
      %321 = vector.load %arg14[%c1_243, %c0_244, %c0_245] : memref<4x1x64xf32, #tpu.memory_space<vmem>>, vector<1x1x64xf32>
      %322 = vector.shape_cast %321 : vector<1x1x64xf32> to vector<1x64xf32>
      %323 = vector.broadcast %322 : vector<1x64xf32> to vector<2x64xf32>
      %324 = arith.addf %320, %323 : vector<2x64xf32>
      %325 = arith.negf %324 : vector<2x64xf32>
      %326 = math.exp %325 : vector<2x64xf32>
      %cst_246 = arith.constant 1.000000e+00 : f32
      %327 = vector.broadcast %cst_246 : f32 to vector<2x64xf32>
      %328 = arith.addf %327, %326 : vector<2x64xf32>
      %329 = arith.divf %327, %328 : vector<2x64xf32>
      %c2_247 = arith.constant 2 : index
      %c0_248 = arith.constant 0 : index
      %c0_249 = arith.constant 0 : index
      %330 = vector.load %arg12[%c2_247, %c0_248, %c0_249] : memref<4x64x64xf32, #tpu.memory_space<vmem>>, vector<1x64x64xf32>
      %331 = vector.shape_cast %330 : vector<1x64x64xf32> to vector<64x64xf32>
      %cst_250 = arith.constant dense<0.000000e+00> : vector<2x64xf32>
      %332 = tpu.matmul %arg17, %331, %cst_250 {dimension_numbers = #tpu.dot_dimension_numbers<[1], [0], [0], [1], [0, 0, 1, 1], [], []>} : vector<2x64xf32>, vector<64x64xf32>, vector<2x64xf32> -> vector<2x64xf32>
      %c2_251 = arith.constant 2 : index
      %c0_252 = arith.constant 0 : index
      %c0_253 = arith.constant 0 : index
      %333 = vector.load %arg13[%c2_251, %c0_252, %c0_253] : memref<4x64x64xf32, #tpu.memory_space<vmem>>, vector<1x64x64xf32>
      %334 = vector.shape_cast %333 : vector<1x64x64xf32> to vector<64x64xf32>
      %cst_254 = arith.constant dense<0.000000e+00> : vector<2x64xf32>
      %335 = tpu.matmul %arg18, %334, %cst_254 {dimension_numbers = #tpu.dot_dimension_numbers<[1], [0], [0], [1], [0, 0, 1, 1], [], []>} : vector<2x64xf32>, vector<64x64xf32>, vector<2x64xf32> -> vector<2x64xf32>
      %336 = arith.addf %332, %335 : vector<2x64xf32>
      %c2_255 = arith.constant 2 : index
      %c0_256 = arith.constant 0 : index
      %c0_257 = arith.constant 0 : index
      %337 = vector.load %arg14[%c2_255, %c0_256, %c0_257] : memref<4x1x64xf32, #tpu.memory_space<vmem>>, vector<1x1x64xf32>
      %338 = vector.shape_cast %337 : vector<1x1x64xf32> to vector<1x64xf32>
      %339 = vector.broadcast %338 : vector<1x64xf32> to vector<2x64xf32>
      %340 = arith.addf %336, %339 : vector<2x64xf32>
      %341 = math.tanh %340 : vector<2x64xf32>
      %c3_258 = arith.constant 3 : index
      %c0_259 = arith.constant 0 : index
      %c0_260 = arith.constant 0 : index
      %342 = vector.load %arg12[%c3_258, %c0_259, %c0_260] : memref<4x64x64xf32, #tpu.memory_space<vmem>>, vector<1x64x64xf32>
      %343 = vector.shape_cast %342 : vector<1x64x64xf32> to vector<64x64xf32>
      %cst_261 = arith.constant dense<0.000000e+00> : vector<2x64xf32>
      %344 = tpu.matmul %arg17, %343, %cst_261 {dimension_numbers = #tpu.dot_dimension_numbers<[1], [0], [0], [1], [0, 0, 1, 1], [], []>} : vector<2x64xf32>, vector<64x64xf32>, vector<2x64xf32> -> vector<2x64xf32>
      %c3_262 = arith.constant 3 : index
      %c0_263 = arith.constant 0 : index
      %c0_264 = arith.constant 0 : index
      %345 = vector.load %arg13[%c3_262, %c0_263, %c0_264] : memref<4x64x64xf32, #tpu.memory_space<vmem>>, vector<1x64x64xf32>
      %346 = vector.shape_cast %345 : vector<1x64x64xf32> to vector<64x64xf32>
      %cst_265 = arith.constant dense<0.000000e+00> : vector<2x64xf32>
      %347 = tpu.matmul %arg18, %346, %cst_265 {dimension_numbers = #tpu.dot_dimension_numbers<[1], [0], [0], [1], [0, 0, 1, 1], [], []>} : vector<2x64xf32>, vector<64x64xf32>, vector<2x64xf32> -> vector<2x64xf32>
      %348 = arith.addf %344, %347 : vector<2x64xf32>
      %c3_266 = arith.constant 3 : index
      %c0_267 = arith.constant 0 : index
      %c0_268 = arith.constant 0 : index
      %349 = vector.load %arg14[%c3_266, %c0_267, %c0_268] : memref<4x1x64xf32, #tpu.memory_space<vmem>>, vector<1x1x64xf32>
      %350 = vector.shape_cast %349 : vector<1x1x64xf32> to vector<1x64xf32>
      %351 = vector.broadcast %350 : vector<1x64xf32> to vector<2x64xf32>
      %352 = arith.addf %348, %351 : vector<2x64xf32>
      %353 = arith.negf %352 : vector<2x64xf32>
      %354 = math.exp %353 : vector<2x64xf32>
      %cst_269 = arith.constant 1.000000e+00 : f32
      %355 = vector.broadcast %cst_269 : f32 to vector<2x64xf32>
      %356 = arith.addf %355, %354 : vector<2x64xf32>
      %357 = arith.divf %355, %356 : vector<2x64xf32>
      %358 = arith.mulf %329, %arg19 : vector<2x64xf32>
      %359 = arith.mulf %313, %341 : vector<2x64xf32>
      %360 = arith.addf %358, %359 : vector<2x64xf32>
      %361 = math.tanh %360 : vector<2x64xf32>
      %362 = arith.mulf %357, %361 : vector<2x64xf32>
      %363 = vector.shape_cast %362 : vector<2x64xf32> to vector<1x2x64xf32>
      %364 = arith.index_cast %arg16 : i32 to index
      %c0_270 = arith.constant 0 : index
      %c0_271 = arith.constant 0 : index
      %365 = vector.load %arg15[%364, %c0_270, %c0_271] : memref<25x2x64xf32, #tpu.memory_space<vmem>>, vector<1x2x64xf32>
      tpu.vector_store %arg15[%364, %c0_270, %c0_271], %363 {strides = array<i32>} : memref<25x2x64xf32, #tpu.memory_space<vmem>>, vector<1x2x64xf32>,
      scf.yield %362, %362, %360 : vector<2x64xf32>, vector<2x64xf32>, vector<2x64xf32>
    }
    %c25_i32_222 = arith.constant 25 : i32
    return
  }
  func.func @transform_0(%arg0: i32) -> (i32, i32, i32) {
    %c0_i32 = arith.constant 0 : i32
    %c0_i32_0 = arith.constant 0 : i32
    %c0_i32_1 = arith.constant 0 : i32
    return %c0_i32, %arg0, %c0_i32_0 : i32, i32, i32
  }
  func.func @transform_1(%arg0: i32) -> (i32, i32) {
    %c0_i32 = arith.constant 0 : i32
    %c0_i32_0 = arith.constant 0 : i32
    %c0_i32_1 = arith.constant 0 : i32
    return %c0_i32, %c0_i32_0 : i32, i32
  }
  func.func @transform_2(%arg0: i32) -> (i32, i32) {
    %c0_i32 = arith.constant 0 : i32
    %c0_i32_0 = arith.constant 0 : i32
    %c0_i32_1 = arith.constant 0 : i32
    return %c0_i32, %c0_i32_0 : i32, i32
  }
  func.func @transform_3(%arg0: i32) -> (i32, i32) {
    %c0_i32 = arith.constant 0 : i32
    %c0_i32_0 = arith.constant 0 : i32
    %c0_i32_1 = arith.constant 0 : i32
    return %c0_i32, %c0_i32_0 : i32, i32
  }
  func.func @transform_4(%arg0: i32) -> (i32, i32) {
    %c0_i32 = arith.constant 0 : i32
    %c0_i32_0 = arith.constant 0 : i32
    %c0_i32_1 = arith.constant 0 : i32
    return %c0_i32, %c0_i32_0 : i32, i32
  }
  func.func @transform_5(%arg0: i32) -> (i32, i32) {
    %c0_i32 = arith.constant 0 : i32
    %c0_i32_0 = arith.constant 0 : i32
    %c0_i32_1 = arith.constant 0 : i32
    return %c0_i32, %c0_i32_0 : i32, i32
  }
  func.func @transform_6(%arg0: i32) -> (i32, i32) {
    %c0_i32 = arith.constant 0 : i32
    %c0_i32_0 = arith.constant 0 : i32
    %c0_i32_1 = arith.constant 0 : i32
    return %c0_i32, %c0_i32_0 : i32, i32
  }
  func.func @transform_7(%arg0: i32) -> (i32, i32) {
    %c0_i32 = arith.constant 0 : i32
    %c0_i32_0 = arith.constant 0 : i32
    %c0_i32_1 = arith.constant 0 : i32
    return %c0_i32, %c0_i32_0 : i32, i32
  }
  func.func @transform_8(%arg0: i32) -> (i32, i32) {
    %c0_i32 = arith.constant 0 : i32
    %c0_i32_0 = arith.constant 0 : i32
    %c0_i32_1 = arith.constant 0 : i32
    return %c0_i32, %c0_i32_0 : i32, i32
  }
  func.func @transform_9(%arg0: i32) -> (i32, i32) {
    %c0_i32 = arith.constant 0 : i32
    %c0_i32_0 = arith.constant 0 : i32
    %c0_i32_1 = arith.constant 0 : i32
    return %c0_i32, %c0_i32_0 : i32, i32
  }
  func.func @transform_10(%arg0: i32) -> (i32, i32) {
    %c0_i32 = arith.constant 0 : i32
    %c0_i32_0 = arith.constant 0 : i32
    %c0_i32_1 = arith.constant 0 : i32
    return %c0_i32, %c0_i32_0 : i32, i32
  }
  func.func @transform_11(%arg0: i32) -> (i32, i32, i32) {
    %c0_i32 = arith.constant 0 : i32
    %c0_i32_0 = arith.constant 0 : i32
    %c0_i32_1 = arith.constant 0 : i32
    %c0_i32_2 = arith.constant 0 : i32
    return %c0_i32, %c0_i32_0, %c0_i32_1 : i32, i32, i32
  }
  func.func @transform_12(%arg0: i32) -> (i32, i32, i32) {
    %c0_i32 = arith.constant 0 : i32
    %c0_i32_0 = arith.constant 0 : i32
    %c0_i32_1 = arith.constant 0 : i32
    %c0_i32_2 = arith.constant 0 : i32
    return %c0_i32, %c0_i32_0, %c0_i32_1 : i32, i32, i32
  }
  func.func @transform_13(%arg0: i32) -> (i32, i32, i32) {
    %c0_i32 = arith.constant 0 : i32
    %c0_i32_0 = arith.constant 0 : i32
    %c0_i32_1 = arith.constant 0 : i32
    %c0_i32_2 = arith.constant 0 : i32
    return %c0_i32, %c0_i32_0, %c0_i32_1 : i32, i32, i32
  }
  func.func @transform_14(%arg0: i32) -> (i32, i32, i32) {
    %c0_i32 = arith.constant 0 : i32
    %c0_i32_0 = arith.constant 0 : i32
    %c0_i32_1 = arith.constant 0 : i32
    return %c0_i32, %arg0, %c0_i32_0 : i32, i32, i32
  }
}

</mosaic_0001>

<llo_original>
// kernel: tpu_custom_call.1
$region0: #{tpu_custom_call.1}
  #allocation0 [shape = 'u32[]', space=smem, size = 0x4, offset = 0x4, fixed_abs, tag = 'smem constant byte address 0x4 - core index']
  #allocation1 [shape = 'u32[144,128]{1,0:T(1,128)}', space=vmem, size = 0x12000, scoped, tag = 'internal scratch']
  %s0 = inlined_call_operand.hbm [shape: f32[3,2,16], index: 0, kind: input, shape index: {}]
  %s1 = inlined_call_operand.hbm [shape: f32[16,32], index: 1, kind: input, shape index: {}]
  %s2 = inlined_call_operand.vmem [shape: f32[1,32], index: 2, kind: input, shape index: {}]
  %s3 = inlined_call_operand.hbm [shape: f32[1,32], index: 3, kind: input, shape index: {}]
  %s4 = inlined_call_operand.hbm [shape: f32[1,32], index: 4, kind: input, shape index: {}]
  %s5 = inlined_call_operand.hbm [shape: f32[32,32], index: 5, kind: input, shape index: {}]
  %s6 = inlined_call_operand.hbm [shape: f32[1,32], index: 6, kind: input, shape index: {}]
  %s7 = inlined_call_operand.hbm [shape: f32[1,32], index: 7, kind: input, shape index: {}]
  %s8 = inlined_call_operand.hbm [shape: f32[1,32], index: 8, kind: input, shape index: {}]
  %s9 = inlined_call_operand.vmem [shape: f32[32,64], index: 9, kind: input, shape index: {}]
  %s10 = inlined_call_operand.hbm [shape: f32[1,64], index: 10, kind: input, shape index: {}]
  %s11 = inlined_call_operand.hbm [shape: f32[4,64,64], index: 11, kind: input, shape index: {}]
  %s12 = inlined_call_operand.hbm [shape: f32[4,64,64], index: 12, kind: input, shape index: {}]
  %s13 = inlined_call_operand.vmem [shape: f32[4,1,64], index: 13, kind: input, shape index: {}]
  %s14 = inlined_call_operand.hbm [shape: f32[25,2,64], index: 14, kind: output, shape index: {}]
  %s15 = sld [smem:[#allocation0]]
  $region117: #{tpu_custom_call.1} parent=0
    _
  %s17 = ssub.s32 1, %s15
  %s18 = scalar_select 0, %s17, %s15
  $region1: #{tpu_custom_call.1} parent=0
    #allocation2 [shape = 'u8[3072]{0}', space=vmem, size = 0xc00, scoped, tag = 'input window, operand 0, single buffered']
    #allocation3 [shape = 's32[1]{0}', space=sflag, size = 0x4, scoped, tag = 'scoped memory for tpu_custom_call.1']
    #allocation4 [shape = 's32[1]{0}', space=sflag, size = 0x4, scoped, tag = 'scoped memory for tpu_custom_call.1']
    #allocation5 [shape = 'u8[8192]{0}', space=vmem, size = 0x2000, scoped, tag = 'input window, operand 1, single buffered']
    #allocation6 [shape = 's32[1]{0}', space=sflag, size = 0x4, scoped, tag = 'scoped memory for tpu_custom_call.1']
    #allocation7 [shape = 'u8[512]{0}', space=vmem, size = 0x400, scoped, tag = 'input window, operand 3, single buffered']
    #allocation8 [shape = 'u8[512]{0}', space=vmem, size = 0x400, scoped, tag = 'input window, operand 4, single buffered']
    #allocation9 [shape = 's32[1]{0}', space=sflag, size = 0x4, scoped, tag = 'scoped memory for tpu_custom_call.1']
    #allocation10 [shape = 'u8[16384]{0}', space=vmem, size = 0x4000, scoped, tag = 'input window, operand 5, single buffered']
    #allocation11 [shape = 'u8[512]{0}', space=vmem, size = 0x400, scoped, tag = 'input window, operand 6, single buffered']
    #allocation12 [shape = 's32[1]{0}', space=sflag, size = 0x4, scoped, tag = 'scoped memory for tpu_custom_call.1']
    #allocation13 [shape = 'u8[512]{0}', space=vmem, size = 0x400, scoped, tag = 'input window, operand 7, single buffered']
    #allocation14 [shape = 'u8[512]{0}', space=vmem, size = 0x400, scoped, tag = 'input window, operand 8, single buffered']
    #allocation15 [shape = 's32[1]{0}', space=sflag, size = 0x4, scoped, tag = 'scoped memory for tpu_custom_call.1']
    #allocation16 [shape = 'u8[512]{0}', space=vmem, size = 0x400, scoped, tag = 'input window, operand 10, single buffered']
    #allocation17 [shape = 'u8[131072]{0}', space=vmem, size = 0x20000, scoped, tag = 'input window, operand 11, single buffered']
    #allocation18 [shape = 's32[1]{0}', space=sflag, size = 0x4, scoped, tag = 'scoped memory for tpu_custom_call.1']
    #allocation19 [shape = 'u8[131072]{0}', space=vmem, size = 0x20000, scoped, tag = 'input window, operand 12, single buffered']
    #allocation20 [shape = 'u8[25600]{0}', space=vmem, size = 0x6400, scoped, tag = 'output window, operand 0, single buffered']
    %19 = vsyncpa [#allocation3], 0
    %20 = vsyncpa [#allocation6], 0
    %21 = vsyncpa [#allocation9], 0
    %22 = vsyncpa [#allocation12], 0
    %23 = vsyncpa [#allocation15], 0
    %24 = vsyncpa [#allocation18], 0
    %25 = vsyncpa [#allocation4], 0
    // Predicated region
    $region2: #{tpu_custom_call.1} parent=1 // pred_check
      _
    $region3: #{tpu_custom_call.1} parent=1 // pred_check_branch
      %27 = sbr.rel (0) target = $region5
    $region4: #{tpu_custom_call.1} parent=1 // pred_region
      %s29 = ssub.s32 96, 96
      %30 = vsyncadd [#allocation3], %s29
      %s31 = sshll.u32 [#allocation2], 4
      %s32 = int_to_ptr.vmem [resolvable:$true] %s31
      %37 = dma.hbm_to_vmem [thread:$0]  %s0, 96, %s32, [#allocation3], 32, 32, 2
    $region5: #{tpu_custom_call.1} parent=1 // pred_fallthru
      _
    // Predicated region
    $region6: #{tpu_custom_call.1} parent=1 // pred_check
      _
    $region7: #{tpu_custom_call.1} parent=1 // pred_check_branch
      %39 = sbr.rel (0) target = $region9
    $region8: #{tpu_custom_call.1} parent=1 // pred_region
      %s41 = ssub.s32 256, 256
      %42 = vsyncadd [#allocation6], %s41
      %s43 = sshll.u32 [#allocation5], 4
      %s44 = int_to_ptr.vmem [resolvable:$true] %s43
      %49 = dma.hbm_to_vmem [thread:$0]  %s1, 256, %s44, [#allocation6], 128, 128, 8
    $region9: #{tpu_custom_call.1} parent=1 // pred_fallthru
      _
    // Predicated region
    $region10: #{tpu_custom_call.1} parent=1 // pred_check
      _
    $region11: #{tpu_custom_call.1} parent=1 // pred_check_branch
      %51 = sbr.rel (0) target = $region13
    $region12: #{tpu_custom_call.1} parent=1 // pred_region
      _
    $region13: #{tpu_custom_call.1} parent=1 // pred_fallthru
      _
    // Predicated region
    $region14: #{tpu_custom_call.1} parent=1 // pred_check
      _
    $region15: #{tpu_custom_call.1} parent=1 // pred_check_branch
      %53 = sbr.rel (0) target = $region17
    $region16: #{tpu_custom_call.1} parent=1 // pred_region
      %s55 = ssub.s32 16, 16
      %56 = vsyncadd [#allocation6], %s55
      %s58 = sshll.u32 [#allocation7], 4
      %s59 = int_to_ptr.vmem [resolvable:$true] %s58
      %61 = dma.hbm_to_vmem [thread:$0]  %s3, 16, %s59, [#allocation6]
    $region17: #{tpu_custom_call.1} parent=1 // pred_fallthru
      _
    // Predicated region
    $region18: #{tpu_custom_call.1} parent=1 // pred_check
      _
    $region19: #{tpu_custom_call.1} parent=1 // pred_check_branch
      %63 = sbr.rel (0) target = $region21
    $region20: #{tpu_custom_call.1} parent=1 // pred_region
      %s65 = ssub.s32 16, 16
      %66 = vsyncadd [#allocation9], %s65
      %s68 = sshll.u32 [#allocation8], 4
      %s69 = int_to_ptr.vmem [resolvable:$true] %s68
      %71 = dma.hbm_to_vmem [thread:$0]  %s4, 16, %s69, [#allocation9]
    $region21: #{tpu_custom_call.1} parent=1 // pred_fallthru
      _
    // Predicated region
    $region22: #{tpu_custom_call.1} parent=1 // pred_check
      _
    $region23: #{tpu_custom_call.1} parent=1 // pred_check_branch
      %73 = sbr.rel (0) target = $region25
    $region24: #{tpu_custom_call.1} parent=1 // pred_region
      %s75 = ssub.s32 512, 512
      %76 = vsyncadd [#allocation9], %s75
      %s77 = sshll.u32 [#allocation10], 4
      %s78 = int_to_ptr.vmem [resolvable:$true] %s77
      %83 = dma.hbm_to_vmem [thread:$0]  %s5, 512, %s78, [#allocation9], 128, 128, 8
    $region25: #{tpu_custom_call.1} parent=1 // pred_fallthru
      _
    // Predicated region
    $region26: #{tpu_custom_call.1} parent=1 // pred_check
      _
    $region27: #{tpu_custom_call.1} parent=1 // pred_check_branch
      %85 = sbr.rel (0) target = $region29
    $region28: #{tpu_custom_call.1} parent=1 // pred_region
      %s87 = ssub.s32 16, 16
      %88 = vsyncadd [#allocation12], %s87
      %s90 = sshll.u32 [#allocation11], 4
      %s91 = int_to_ptr.vmem [resolvable:$true] %s90
      %93 = dma.hbm_to_vmem [thread:$0]  %s6, 16, %s91, [#allocation12]
    $region29: #{tpu_custom_call.1} parent=1 // pred_fallthru
      _
    // Predicated region
    $region30: #{tpu_custom_call.1} parent=1 // pred_check
      _
    $region31: #{tpu_custom_call.1} parent=1 // pred_check_branch
      %95 = sbr.rel (0) target = $region33
    $region32: #{tpu_custom_call.1} parent=1 // pred_region
      %s97 = ssub.s32 16, 16
      %98 = vsyncadd [#allocation12], %s97
      %s100 = sshll.u32 [#allocation13], 4
      %s101 = int_to_ptr.vmem [resolvable:$true] %s100
      %103 = dma.hbm_to_vmem [thread:$0]  %s7, 16, %s101, [#allocation12]
    $region33: #{tpu_custom_call.1} parent=1 // pred_fallthru
      _
    // Predicated region
    $region34: #{tpu_custom_call.1} parent=1 // pred_check
      _
    $region35: #{tpu_custom_call.1} parent=1 // pred_check_branch
      %105 = sbr.rel (0) target = $region37
    $region36: #{tpu_custom_call.1} parent=1 // pred_region
      %s107 = ssub.s32 16, 16
      %108 = vsyncadd [#allocation15], %s107
      %s110 = sshll.u32 [#allocation14], 4
      %s111 = int_to_ptr.vmem [resolvable:$true] %s110
      %113 = dma.hbm_to_vmem [thread:$0]  %s8, 16, %s111, [#allocation15]
    $region37: #{tpu_custom_call.1} parent=1 // pred_fallthru
      _
    // Predicated region
    $region38: #{tpu_custom_call.1} parent=1 // pred_check
      _
    $region39: #{tpu_custom_call.1} parent=1 // pred_check_branch
      %115 = sbr.rel (0) target = $region41
    $region40: #{tpu_custom_call.1} parent=1 // pred_region
      _
    $region41: #{tpu_custom_call.1} parent=1 // pred_fallthru
      _
    // Predicated region
    $region42: #{tpu_custom_call.1} parent=1 // pred_check
      _
    $region43: #{tpu_custom_call.1} parent=1 // pred_check_branch
      %117 = sbr.rel (0) target = $region45
    $region44: #{tpu_custom_call.1} parent=1 // pred_region
      %s119 = ssub.s32 16, 16
      %120 = vsyncadd [#allocation15], %s119
      %s122 = sshll.u32 [#allocation16], 4
      %s123 = int_to_ptr.vmem [resolvable:$true] %s122
      %125 = dma.hbm_to_vmem [thread:$0]  %s10, 16, %s123, [#allocation15]
    $region45: #{tpu_custom_call.1} parent=1 // pred_fallthru
      _
    // Predicated region
    $region46: #{tpu_custom_call.1} parent=1 // pred_check
      _
    $region47: #{tpu_custom_call.1} parent=1 // pred_check_branch
      %127 = sbr.rel (0) target = $region49
    $region48: #{tpu_custom_call.1} parent=1 // pred_region
      %s129 = ssub.s32 4096, 4096
      %130 = vsyncadd [#allocation18], %s129
      %s131 = sshll.u32 [#allocation17], 4
      %s132 = int_to_ptr.vmem [resolvable:$true] %s131
      %137 = dma.hbm_to_vmem [thread:$0]  %s11, 4096, %s132, [#allocation18], 128, 128, 8
    $region49: #{tpu_custom_call.1} parent=1 // pred_fallthru
      _
    // Predicated region
    $region50: #{tpu_custom_call.1} parent=1 // pred_check
      _
    $region51: #{tpu_custom_call.1} parent=1 // pred_check_branch
      %139 = sbr.rel (0) target = $region53
    $region52: #{tpu_custom_call.1} parent=1 // pred_region
      %s141 = ssub.s32 4096, 4096
      %142 = vsyncadd [#allocation18], %s141
      %s143 = sshll.u32 [#allocation19], 4
      %s144 = int_to_ptr.vmem [resolvable:$true] %s143
      %149 = dma.hbm_to_vmem [thread:$0]  %s12, 4096, %s144, [#allocation18], 128, 128, 8
    $region53: #{tpu_custom_call.1} parent=1 // pred_fallthru
      _
    // Predicated region
    $region54: #{tpu_custom_call.1} parent=1 // pred_check
      _
    $region55: #{tpu_custom_call.1} parent=1 // pred_check_branch
      %151 = sbr.rel (0) target = $region57
    $region56: #{tpu_custom_call.1} parent=1 // pred_region
      _
    $region57: #{tpu_custom_call.1} parent=1 // pred_fallthru
      _
    // Predicated region
    $region58: #{tpu_custom_call.1} parent=1 // pred_check
      _
    $region59: #{tpu_custom_call.1} parent=1 // pred_check_branch
      %153 = sbr.rel (0) target = $region61
    $region60: #{tpu_custom_call.1} parent=1 // pred_region
      %154 = dma.done [#allocation3], 96
    $region61: #{tpu_custom_call.1} parent=1 // pred_fallthru
      _
    // Predicated region
    $region62: #{tpu_custom_call.1} parent=1 // pred_check
      _
    $region63: #{tpu_custom_call.1} parent=1 // pred_check_branch
      %156 = sbr.rel (0) target = $region65
    $region64: #{tpu_custom_call.1} parent=1 // pred_region
      %157 = dma.done [#allocation6], 256
    $region65: #{tpu_custom_call.1} parent=1 // pred_fallthru
      _
    // Predicated region
    $region66: #{tpu_custom_call.1} parent=1 // pred_check
      _
    $region67: #{tpu_custom_call.1} parent=1 // pred_check_branch
      %159 = sbr.rel (0) target = $region69
    $region68: #{tpu_custom_call.1} parent=1 // pred_region
      %160 = dma.done [#allocation6], 16
    $region69: #{tpu_custom_call.1} parent=1 // pred_fallthru
      _
    // Predicated region
    $region70: #{tpu_custom_call.1} parent=1 // pred_check
      _
    $region71: #{tpu_custom_call.1} parent=1 // pred_check_branch
      %162 = sbr.rel (0) target = $region73
    $region72: #{tpu_custom_call.1} parent=1 // pred_region
      %163 = dma.done [#allocation9], 16
    $region73: #{tpu_custom_call.1} parent=1 // pred_fallthru
      _
    // Predicated region
    $region74: #{tpu_custom_call.1} parent=1 // pred_check
      _
    $region75: #{tpu_custom_call.1} parent=1 // pred_check_branch
      %165 = sbr.rel (0) target = $region77
    $region76: #{tpu_custom_call.1} parent=1 // pred_region
      %166 = dma.done [#allocation9], 512
    $region77: #{tpu_custom_call.1} parent=1 // pred_fallthru
      _
    // Predicated region
    $region78: #{tpu_custom_call.1} parent=1 // pred_check
      _
    $region79: #{tpu_custom_call.1} parent=1 // pred_check_branch
      %168 = sbr.rel (0) target = $region81
    $region80: #{tpu_custom_call.1} parent=1 // pred_region
      %169 = dma.done [#allocation12], 16
    $region81: #{tpu_custom_call.1} parent=1 // pred_fallthru
      _
    // Predicated region
    $region82: #{tpu_custom_call.1} parent=1 // pred_check
      _
    $region83: #{tpu_custom_call.1} parent=1 // pred_check_branch
      %171 = sbr.rel (0) target = $region85
    $region84: #{tpu_custom_call.1} parent=1 // pred_region
      %172 = dma.done [#allocation12], 16
    $region85: #{tpu_custom_call.1} parent=1 // pred_fallthru
      _
    // Predicated region
    $region86: #{tpu_custom_call.1} parent=1 // pred_check
      _
    $region87: #{tpu_custom_call.1} parent=1 // pred_check_branch
      %174 = sbr.rel (0) target = $region89
    $region88: #{tpu_custom_call.1} parent=1 // pred_region
      %175 = dma.done [#allocation15], 16
    $region89: #{tpu_custom_call.1} parent=1 // pred_fallthru
      _
    // Predicated region
    $region90: #{tpu_custom_call.1} parent=1 // pred_check
      _
    $region91: #{tpu_custom_call.1} parent=1 // pred_check_branch
      %177 = sbr.rel (0) target = $region93
    $region92: #{tpu_custom_call.1} parent=1 // pred_region
      %178 = dma.done [#allocation15], 16
    $region93: #{tpu_custom_call.1} parent=1 // pred_fallthru
      _
    // Predicated region
    $region94: #{tpu_custom_call.1} parent=1 // pred_check
      _
    $region95: #{tpu_custom_call.1} parent=1 // pred_check_branch
      %180 = sbr.rel (0) target = $region97
    $region96: #{tpu_custom_call.1} parent=1 // pred_region
      %181 = dma.done [#allocation18], 4096
    $region97: #{tpu_custom_call.1} parent=1 // pred_fallthru
      _
    // Predicated region
    $region98: #{tpu_custom_call.1} parent=1 // pred_check
      _
    $region99: #{tpu_custom_call.1} parent=1 // pred_check_branch
      %183 = sbr.rel (0) target = $region101
    $region100: #{tpu_custom_call.1} parent=1 // pred_region
      %184 = dma.done [#allocation18], 4096
    $region101: #{tpu_custom_call.1} parent=1 // pred_fallthru
      _
    %v185 = vld [vmem:[#allocation2] sm:$0x3]
    %v186 = vld [vmem:[#allocation5] sm:$0xff]
    %v187 = vld [vmem:[#allocation5 + $0x8] sm:$0xff]
    %v188 = vld [vmem:[%s2] sm:$0x1]
    %v190 = vlaneseq
    %v191 = vshrl.u32 %v190, 7
    %v192 = vsub.s32 0, %v191
    %v193 = vrot.slane %v188, %v192
    %vm195 = vcmask 130048
    %v197 = vsel %vm195, %v185, 0
    %199 = vmatprep.subr.mxu0 0.0
    %200 = vmatpush1.msra.mxu0 %v186
    %201 = vmatprep.subr.mxu0 0.0
    %202 = vmatpush1.msra.mxu0 %v187
    %203 = vmatprep.subr.mxu0 0.0
    %204 = vmatpush1.msra.mxu0 0.0
    %205 = vmatprep.subr.mxu0 0.0
    %206 = vmatpush1.msra.mxu0 0.0
    %207 = vmatprep.subr.mxu0 0.0
    %208 = vmatpush1.msra.mxu0 0.0
    %209 = vmatprep.subr.mxu0 0.0
    %210 = vmatpush1.msra.mxu0 0.0
    %211 = vmatprep.subr.mxu0 0.0
    %212 = vmatpush1.msra.mxu0 0.0
    %213 = vmatprep.subr.mxu0 0.0
    %214 = vmatpush1.msra.mxu0 0.0
    %215 = vmatprep.subr.mxu0 0.0
    %216 = vmatpush1.msra.mxu0 0.0
    %217 = vmatprep.subr.mxu0 0.0
    %218 = vmatpush1.msra.mxu0 0.0
    %219 = vmatprep.subr.mxu0 0.0
    %220 = vmatpush1.msra.mxu0 0.0
    %221 = vmatprep.subr.mxu0 0.0
    %222 = vmatpush1.msra.mxu0 0.0
    %223 = vmatprep.subr.mxu0 0.0
    %224 = vmatpush1.msra.mxu0 0.0
    %225 = vmatprep.subr.mxu0 0.0
    %226 = vmatpush1.msra.mxu0 0.0
    %227 = vmatprep.subr.mxu0 0.0
    %228 = vmatpush1.msra.mxu0 0.0
    %229 = vmatprep.subr.mxu0 0.0
    %230 = vmatpush1.msra.mxu0 0.0
    %231 = vmatprep.subr.mxu0 0.0
    %232 = vmatpush1.msra.mxu0 0.0
    %233 = vmatprep.subr.mxu0 0.0
    %234 = vmatpush1.msra.mxu0 0.0
    %235 = vmatprep.subr.mxu0 0.0
    %236 = vmatpush1.msra.mxu0 0.0
    %237 = vmatprep.subr.mxu0 0.0
    %238 = vmatpush1.msra.mxu0 0.0
    %239 = vmatprep.subr.mxu0 0.0
    %240 = vmatpush1.msra.mxu0 0.0
    %241 = vmatprep.subr.mxu0 0.0
    %242 = vmatpush1.msra.mxu0 0.0
    %243 = vmatprep.subr.mxu0 0.0
    %244 = vmatpush1.msra.mxu0 0.0
    %245 = vmatprep.subr.mxu0 0.0
    %246 = vmatpush1.msra.mxu0 0.0
    %247 = vmatprep.subr.mxu0 0.0
    %248 = vmatpush1.msra.mxu0 0.0
    %249 = vmatprep.subr.mxu0 0.0
    %250 = vmatpush1.msra.mxu0 0.0
    %251 = vmatprep.subr.mxu0 0.0
    %252 = vmatpush1.msra.mxu0 0.0
    %253 = vmatprep.subr.mxu0 0.0
    %254 = vmatpush1.msra.mxu0 0.0
    %255 = vmatprep.subr.mxu0 0.0
    %256 = vmatpush1.msra.mxu0 0.0
    %257 = vmatprep.subr.mxu0 0.0
    %258 = vmatpush1.msra.mxu0 0.0
    %259 = vmatprep.subr.mxu0 0.0
    %260 = vmatpush1.msra.mxu0 0.0
    %261 = vmatprep.subr.mxu0 0.0
    %262 = vmatpush1.msra.mxu0 0.0
    %263 = vmatprep.mubr.f32.mxu0 0.0
    %264 = vmatmul.mubr.f32.gmra.mrb[0].mxu0 %v197
    %v265 = vpop.f32.mrb[0].mxu0
    %v266 = vadd.f32 %v193, %v265
    %v267 = vpop.f32.mrb[0].mxu0
    %268 = vdwg.mxu0
    %v269 = vld [vmem:[#allocation7] sm:$0x1]
    %v271 = vlaneseq
    %v272 = vshrl.u32 %v271, 7
    %v273 = vsub.s32 0, %v272
    %v274 = vrot.slane %v269, %v273
    %v276 = vmul.f32 %v266, %v274
    %v277 = vld [vmem:[#allocation8] sm:$0x1]
    %v279 = vlaneseq
    %v280 = vshrl.u32 %v279, 7
    %v281 = vsub.s32 0, %v280
    %v282 = vrot.slane %v277, %v281
    %v284 = vadd.f32 %v276, %v282
    %v285 = vmax.f32 %v284, 0.0
    %v286 = vld [vmem:[#allocation10] sm:$0xff]
    %v287 = vld [vmem:[#allocation10 + $0x8] sm:$0xff]
    %v288 = vld [vmem:[#allocation10 + $0x10] sm:$0xff]
    %v289 = vld [vmem:[#allocation10 + $0x18] sm:$0xff]
    %v290 = vld [vmem:[#allocation11] sm:$0x1]
    %v292 = vlaneseq
    %v293 = vshrl.u32 %v292, 7
    %v294 = vsub.s32 0, %v293
    %v295 = vrot.slane %v290, %v294
    %vm297 = vcmask 261120
    %v299 = vsel %vm297, %v285, 0
    %301 = vmatprep.subr.mxu0 0.0
    %302 = vmatpush1.msra.mxu0 %v286
    %303 = vmatprep.subr.mxu0 0.0
    %304 = vmatpush1.msra.mxu0 %v287
    %305 = vmatprep.subr.mxu0 0.0
    %306 = vmatpush1.msra.mxu0 %v288
    %307 = vmatprep.subr.mxu0 0.0
    %308 = vmatpush1.msra.mxu0 %v289
    %309 = vmatprep.subr.mxu0 0.0
    %310 = vmatpush1.msra.mxu0 0.0
    %311 = vmatprep.subr.mxu0 0.0
    %312 = vmatpush1.msra.mxu0 0.0
    %313 = vmatprep.subr.mxu0 0.0
    %314 = vmatpush1.msra.mxu0 0.0
    %315 = vmatprep.subr.mxu0 0.0
    %316 = vmatpush1.msra.mxu0 0.0
    %317 = vmatprep.subr.mxu0 0.0
    %318 = vmatpush1.msra.mxu0 0.0
    %319 = vmatprep.subr.mxu0 0.0
    %320 = vmatpush1.msra.mxu0 0.0
    %321 = vmatprep.subr.mxu0 0.0
    %322 = vmatpush1.msra.mxu0 0.0
    %323 = vmatprep.subr.mxu0 0.0
    %324 = vmatpush1.msra.mxu0 0.0
    %325 = vmatprep.subr.mxu0 0.0
    %326 = vmatpush1.msra.mxu0 0.0
    %327 = vmatprep.subr.mxu0 0.0
    %328 = vmatpush1.msra.mxu0 0.0
    %329 = vmatprep.subr.mxu0 0.0
    %330 = vmatpush1.msra.mxu0 0.0
    %331 = vmatprep.subr.mxu0 0.0
    %332 = vmatpush1.msra.mxu0 0.0
    %333 = vmatprep.subr.mxu0 0.0
    %334 = vmatpush1.msra.mxu0 0.0
    %335 = vmatprep.subr.mxu0 0.0
    %336 = vmatpush1.msra.mxu0 0.0
    %337 = vmatprep.subr.mxu0 0.0
    %338 = vmatpush1.msra.mxu0 0.0
    %339 = vmatprep.subr.mxu0 0.0
    %340 = vmatpush1.msra.mxu0 0.0
    %341 = vmatprep.subr.mxu0 0.0
    %342 = vmatpush1.msra.mxu0 0.0
    %343 = vmatprep.subr.mxu0 0.0
    %344 = vmatpush1.msra.mxu0 0.0
    %345 = vmatprep.subr.mxu0 0.0
    %346 = vmatpush1.msra.mxu0 0.0
    %347 = vmatprep.subr.mxu0 0.0
    %348 = vmatpush1.msra.mxu0 0.0
    %349 = vmatprep.subr.mxu0 0.0
    %350 = vmatpush1.msra.mxu0 0.0
    %351 = vmatprep.subr.mxu0 0.0
    %352 = vmatpush1.msra.mxu0 0.0
    %353 = vmatprep.subr.mxu0 0.0
    %354 = vmatpush1.msra.mxu0 0.0
    %355 = vmatprep.subr.mxu0 0.0
    %356 = vmatpush1.msra.mxu0 0.0
    %357 = vmatprep.subr.mxu0 0.0
    %358 = vmatpush1.msra.mxu0 0.0
    %359 = vmatprep.subr.mxu0 0.0
    %360 = vmatpush1.msra.mxu0 0.0
    %361 = vmatprep.subr.mxu0 0.0
    %362 = vmatpush1.msra.mxu0 0.0
    %363 = vmatprep.subr.mxu0 0.0
    %364 = vmatpush1.msra.mxu0 0.0
    %365 = vmatprep.mubr.f32.mxu0 0.0
    %366 = vmatmul.mubr.f32.gmra.mrb[0].mxu0 %v299
    %v367 = vpop.f32.mrb[0].mxu0
    %v368 = vadd.f32 %v295, %v367
    %v369 = vpop.f32.mrb[0].mxu0
    %370 = vdwg.mxu0
    %v371 = vld [vmem:[#allocation13] sm:$0x1]
    %v373 = vlaneseq
    %v374 = vshrl.u32 %v373, 7
    %v375 = vsub.s32 0, %v374
    %v376 = vrot.slane %v371, %v375
    %v378 = vmul.f32 %v368, %v376
    %v379 = vld [vmem:[#allocation14] sm:$0x1]
    %v381 = vlaneseq
    %v382 = vshrl.u32 %v381, 7
    %v383 = vsub.s32 0, %v382
    %v384 = vrot.slane %v379, %v383
    %v386 = vadd.f32 %v378, %v384
    %v387 = vmax.f32 %v386, 0.0
    %v388 = vld [vmem:[%s9] sm:$0xff]
    %v389 = vld [vmem:[%s9 + $0x8] sm:$0xff]
    %v390 = vld [vmem:[%s9 + $0x10] sm:$0xff]
    %v391 = vld [vmem:[%s9 + $0x18] sm:$0xff]
    %v392 = vld [vmem:[#allocation16] sm:$0x1]
    %v394 = vlaneseq
    %v395 = vshrl.u32 %v394, 7
    %v396 = vsub.s32 0, %v395
    %v397 = vrot.slane %v392, %v396
    %v400 = vsel %vm297, %v387, 0
    %402 = vmatprep.subr.mxu0 0.0
    %403 = vmatpush1.msra.mxu0 %v388
    %404 = vmatprep.subr.mxu0 0.0
    %405 = vmatpush1.msra.mxu0 %v389
    %406 = vmatprep.subr.mxu0 0.0
    %407 = vmatpush1.msra.mxu0 %v390
    %408 = vmatprep.subr.mxu0 0.0
    %409 = vmatpush1.msra.mxu0 %v391
    %410 = vmatprep.subr.mxu0 0.0
    %411 = vmatpush1.msra.mxu0 0.0
    %412 = vmatprep.subr.mxu0 0.0
    %413 = vmatpush1.msra.mxu0 0.0
    %414 = vmatprep.subr.mxu0 0.0
    %415 = vmatpush1.msra.mxu0 0.0
    %416 = vmatprep.subr.mxu0 0.0
    %417 = vmatpush1.msra.mxu0 0.0
    %418 = vmatprep.subr.mxu0 0.0
    %419 = vmatpush1.msra.mxu0 0.0
    %420 = vmatprep.subr.mxu0 0.0
    %421 = vmatpush1.msra.mxu0 0.0
    %422 = vmatprep.subr.mxu0 0.0
    %423 = vmatpush1.msra.mxu0 0.0
    %424 = vmatprep.subr.mxu0 0.0
    %425 = vmatpush1.msra.mxu0 0.0
    %426 = vmatprep.subr.mxu0 0.0
    %427 = vmatpush1.msra.mxu0 0.0
    %428 = vmatprep.subr.mxu0 0.0
    %429 = vmatpush1.msra.mxu0 0.0
    %430 = vmatprep.subr.mxu0 0.0
    %431 = vmatpush1.msra.mxu0 0.0
    %432 = vmatprep.subr.mxu0 0.0
    %433 = vmatpush1.msra.mxu0 0.0
    %434 = vmatprep.subr.mxu0 0.0
    %435 = vmatpush1.msra.mxu0 0.0
    %436 = vmatprep.subr.mxu0 0.0
    %437 = vmatpush1.msra.mxu0 0.0
    %438 = vmatprep.subr.mxu0 0.0
    %439 = vmatpush1.msra.mxu0 0.0
    %440 = vmatprep.subr.mxu0 0.0
    %441 = vmatpush1.msra.mxu0 0.0
    %442 = vmatprep.subr.mxu0 0.0
    %443 = vmatpush1.msra.mxu0 0.0
    %444 = vmatprep.subr.mxu0 0.0
    %445 = vmatpush1.msra.mxu0 0.0
    %446 = vmatprep.subr.mxu0 0.0
    %447 = vmatpush1.msra.mxu0 0.0
    %448 = vmatprep.subr.mxu0 0.0
    %449 = vmatpush1.msra.mxu0 0.0
    %450 = vmatprep.subr.mxu0 0.0
    %451 = vmatpush1.msra.mxu0 0.0
    %452 = vmatprep.subr.mxu0 0.0
    %453 = vmatpush1.msra.mxu0 0.0
    %454 = vmatprep.subr.mxu0 0.0
    %455 = vmatpush1.msra.mxu0 0.0
    %456 = vmatprep.subr.mxu0 0.0
    %457 = vmatpush1.msra.mxu0 0.0
    %458 = vmatprep.subr.mxu0 0.0
    %459 = vmatpush1.msra.mxu0 0.0
    %460 = vmatprep.subr.mxu0 0.0
    %461 = vmatpush1.msra.mxu0 0.0
    %462 = vmatprep.subr.mxu0 0.0
    %463 = vmatpush1.msra.mxu0 0.0
    %464 = vmatprep.subr.mxu0 0.0
    %465 = vmatpush1.msra.mxu0 0.0
    %466 = vmatprep.mubr.f32.mxu0 0.0
    %467 = vmatmul.mubr.f32.gmra.mrb[0].mxu0 %v400
    %v468 = vpop.f32.mrb[0].mxu0
    %v469 = vadd.f32 %v397, %v468
    %v470 = vpop.f32.mrb[0].mxu0
    %471 = vdwg.mxu0
    %v472 = vld [vmem:[#allocation17] sm:$0xff]
    %v473 = vld [vmem:[#allocation17 + $0x8] sm:$0xff]
    %v474 = vld [vmem:[#allocation17 + $0x10] sm:$0xff]
    %v475 = vld [vmem:[#allocation17 + $0x18] sm:$0xff]
    %v476 = vld [vmem:[#allocation17 + $0x20] sm:$0xff]
    %v477 = vld [vmem:[#allocation17 + $0x28] sm:$0xff]
    %v478 = vld [vmem:[#allocation17 + $0x30] sm:$0xff]
    %v479 = vld [vmem:[#allocation17 + $0x38] sm:$0xff]
    %v480 = vld [vmem:[#allocation19] sm:$0xff]
    %v481 = vld [vmem:[#allocation19 + $0x8] sm:$0xff]
    %v482 = vld [vmem:[#allocation19 + $0x10] sm:$0xff]
    %v483 = vld [vmem:[#allocation19 + $0x18] sm:$0xff]
    %v484 = vld [vmem:[#allocation19 + $0x20] sm:$0xff]
    %v485 = vld [vmem:[#allocation19 + $0x28] sm:$0xff]
    %v486 = vld [vmem:[#allocation19 + $0x30] sm:$0xff]
    %v487 = vld [vmem:[#allocation19 + $0x38] sm:$0xff]
    %vm488 = vcmask 523264
    %v490 = vsel %vm488, 0.0, 0
    %492 = vmatprep.subr.mxu0 0.0
    %493 = vmatpush1.msra.mxu0 %v480
    %494 = vmatprep.subr.mxu0 0.0
    %495 = vmatpush1.msra.mxu0 %v481
    %496 = vmatprep.subr.mxu0 0.0
    %497 = vmatpush1.msra.mxu0 %v482
    %498 = vmatprep.subr.mxu0 0.0
    %499 = vmatpush1.msra.mxu0 %v483
    %500 = vmatprep.subr.mxu0 0.0
    %501 = vmatpush1.msra.mxu0 %v484
    %502 = vmatprep.subr.mxu0 0.0
    %503 = vmatpush1.msra.mxu0 %v485
    %504 = vmatprep.subr.mxu0 0.0
    %505 = vmatpush1.msra.mxu0 %v486
    %506 = vmatprep.subr.mxu0 0.0
    %507 = vmatpush1.msra.mxu0 %v487
    %508 = vmatprep.subr.mxu0 0.0
    %509 = vmatpush1.msra.mxu0 0.0
    %510 = vmatprep.subr.mxu0 0.0
    %511 = vmatpush1.msra.mxu0 0.0
    %512 = vmatprep.subr.mxu0 0.0
    %513 = vmatpush1.msra.mxu0 0.0
    %514 = vmatprep.subr.mxu0 0.0
    %515 = vmatpush1.msra.mxu0 0.0
    %516 = vmatprep.subr.mxu0 0.0
    %517 = vmatpush1.msra.mxu0 0.0
    %518 = vmatprep.subr.mxu0 0.0
    %519 = vmatpush1.msra.mxu0 0.0
    %520 = vmatprep.subr.mxu0 0.0
    %521 = vmatpush1.msra.mxu0 0.0
    %522 = vmatprep.subr.mxu0 0.0
    %523 = vmatpush1.msra.mxu0 0.0
    %524 = vmatprep.subr.mxu0 0.0
    %525 = vmatpush1.msra.mxu0 0.0
    %526 = vmatprep.subr.mxu0 0.0
    %527 = vmatpush1.msra.mxu0 0.0
    %528 = vmatprep.subr.mxu0 0.0
    %529 = vmatpush1.msra.mxu0 0.0
    %530 = vmatprep.subr.mxu0 0.0
    %531 = vmatpush1.msra.mxu0 0.0
    %532 = vmatprep.subr.mxu0 0.0
    %533 = vmatpush1.msra.mxu0 0.0
    %534 = vmatprep.subr.mxu0 0.0
    %535 = vmatpush1.msra.mxu0 0.0
    %536 = vmatprep.subr.mxu0 0.0
    %537 = vmatpush1.msra.mxu0 0.0
    %538 = vmatprep.subr.mxu0 0.0
    %539 = vmatpush1.msra.mxu0 0.0
    %540 = vmatprep.subr.mxu0 0.0
    %541 = vmatpush1.msra.mxu0 0.0
    %542 = vmatprep.subr.mxu0 0.0
    %543 = vmatpush1.msra.mxu0 0.0
    %544 = vmatprep.subr.mxu0 0.0
    %545 = vmatpush1.msra.mxu0 0.0
    %546 = vmatprep.subr.mxu0 0.0
    %547 = vmatpush1.msra.mxu0 0.0
    %548 = vmatprep.subr.mxu0 0.0
    %549 = vmatpush1.msra.mxu0 0.0
    %550 = vmatprep.subr.mxu0 0.0
    %551 = vmatpush1.msra.mxu0 0.0
    %552 = vmatprep.subr.mxu0 0.0
    %553 = vmatpush1.msra.mxu0 0.0
    %554 = vmatprep.subr.mxu0 0.0
    %555 = vmatpush1.msra.mxu0 0.0
    %556 = vmatprep.mubr.f32.mxu0 0.0
    %557 = vmatmul.mubr.f32.gmra.mrb[0].mxu0 %v490
    %v558 = vpop.f32.mrb[0].mxu0
    %v559 = vadd.f32 0.0, %v558
    %v560 = vpop.f32.mrb[0].mxu0
    %561 = vdwg.mxu0
    %v563 = vsel %vm488, %v469, 0
    %565 = vmatprep.subr.mxu0 0.0
    %566 = vmatpush1.msra.mxu0 %v472
    %567 = vmatprep.subr.mxu0 0.0
    %568 = vmatpush1.msra.mxu0 %v473
    %569 = vmatprep.subr.mxu0 0.0
    %570 = vmatpush1.msra.mxu0 %v474
    %571 = vmatprep.subr.mxu0 0.0
    %572 = vmatpush1.msra.mxu0 %v475
    %573 = vmatprep.subr.mxu0 0.0
    %574 = vmatpush1.msra.mxu0 %v476
    %575 = vmatprep.subr.mxu0 0.0
    %576 = vmatpush1.msra.mxu0 %v477
    %577 = vmatprep.subr.mxu0 0.0
    %578 = vmatpush1.msra.mxu0 %v478
    %579 = vmatprep.subr.mxu0 0.0
    %580 = vmatpush1.msra.mxu0 %v479
    %581 = vmatprep.subr.mxu0 0.0
    %582 = vmatpush1.msra.mxu0 0.0
    %583 = vmatprep.subr.mxu0 0.0
    %584 = vmatpush1.msra.mxu0 0.0
    %585 = vmatprep.subr.mxu0 0.0
    %586 = vmatpush1.msra.mxu0 0.0
    %587 = vmatprep.subr.mxu0 0.0
    %588 = vmatpush1.msra.mxu0 0.0
    %589 = vmatprep.subr.mxu0 0.0
    %590 = vmatpush1.msra.mxu0 0.0
    %591 = vmatprep.subr.mxu0 0.0
    %592 = vmatpush1.msra.mxu0 0.0
    %593 = vmatprep.subr.mxu0 0.0
    %594 = vmatpush1.msra.mxu0 0.0
    %595 = vmatprep.subr.mxu0 0.0
    %596 = vmatpush1.msra.mxu0 0.0
    %597 = vmatprep.subr.mxu0 0.0
    %598 = vmatpush1.msra.mxu0 0.0
    %599 = vmatprep.subr.mxu0 0.0
    %600 = vmatpush1.msra.mxu0 0.0
    %601 = vmatprep.subr.mxu0 0.0
    %602 = vmatpush1.msra.mxu0 0.0
    %603 = vmatprep.subr.mxu0 0.0
    %604 = vmatpush1.msra.mxu0 0.0
    %605 = vmatprep.subr.mxu0 0.0
    %606 = vmatpush1.msra.mxu0 0.0
    %607 = vmatprep.subr.mxu0 0.0
    %608 = vmatpush1.msra.mxu0 0.0
    %609 = vmatprep.subr.mxu0 0.0
    %610 = vmatpush1.msra.mxu0 0.0
    %611 = vmatprep.subr.mxu0 0.0
    %612 = vmatpush1.msra.mxu0 0.0
    %613 = vmatprep.subr.mxu0 0.0
    %614 = vmatpush1.msra.mxu0 0.0
    %615 = vmatprep.subr.mxu0 0.0
    %616 = vmatpush1.msra.mxu0 0.0
    %617 = vmatprep.subr.mxu0 0.0
    %618 = vmatpush1.msra.mxu0 0.0
    %619 = vmatprep.subr.mxu0 0.0
    %620 = vmatpush1.msra.mxu0 0.0
    %621 = vmatprep.subr.mxu0 0.0
    %622 = vmatpush1.msra.mxu0 0.0
    %623 = vmatprep.subr.mxu0 0.0
    %624 = vmatpush1.msra.mxu0 0.0
    %625 = vmatprep.subr.mxu0 0.0
    %626 = vmatpush1.msra.mxu0 0.0
    %627 = vmatprep.subr.mxu0 0.0
    %628 = vmatpush1.msra.mxu0 0.0
    %629 = vmatprep.mubr.f32.mxu0 0.0
    %630 = vmatmul.mubr.f32.gmra.mrb[0].mxu0 %v563
    %v631 = vpop.f32.mrb[0].mxu0
    %v632 = vadd.f32 %v559, %v631
    %v633 = vpop.f32.mrb[0].mxu0
    %634 = vdwg.mxu0
    %v635 = vld [vmem:[%s13] sm:$0x1]
    %v637 = vlaneseq
    %v638 = vshrl.u32 %v637, 7
    %v639 = vsub.s32 0, %v638
    %v640 = vrot.slane %v635, %v639
    %v642 = vadd.f32 %v632, %v640
    %v643 = vxor.u32 %v642, 2147483648
    %v644 = vmul.f32 %v643, 1.442695
    %v645 = vpow.pop %v644
    %v646 = vadd.f32 %v645, 1.0
    %v647 = vrcp.pop %v646
    %v648 = vmul.f32 1.0, %v647
    %s649 = scalar_lea.vmem [#allocation17], 64
    %v650 = vld [vmem:[%s649] sm:$0xff]
    %v651 = vld [vmem:[%s649 + $0x8] sm:$0xff]
    %v652 = vld [vmem:[%s649 + $0x10] sm:$0xff]
    %v653 = vld [vmem:[%s649 + $0x18] sm:$0xff]
    %v654 = vld [vmem:[%s649 + $0x20] sm:$0xff]
    %v655 = vld [vmem:[%s649 + $0x28] sm:$0xff]
    %v656 = vld [vmem:[%s649 + $0x30] sm:$0xff]
    %v657 = vld [vmem:[%s649 + $0x38] sm:$0xff]
    %s658 = scalar_lea.vmem [#allocation19], 64
    %v659 = vld [vmem:[%s658] sm:$0xff]
    %v660 = vld [vmem:[%s658 + $0x8] sm:$0xff]
    %v661 = vld [vmem:[%s658 + $0x10] sm:$0xff]
    %v662 = vld [vmem:[%s658 + $0x18] sm:$0xff]
    %v663 = vld [vmem:[%s658 + $0x20] sm:$0xff]
    %v664 = vld [vmem:[%s658 + $0x28] sm:$0xff]
    %v665 = vld [vmem:[%s658 + $0x30] sm:$0xff]
    %v666 = vld [vmem:[%s658 + $0x38] sm:$0xff]
    %667 = vmatprep.subr.mxu0 0.0
    %668 = vmatpush1.msra.mxu0 %v659
    %669 = vmatprep.subr.mxu0 0.0
    %670 = vmatpush1.msra.mxu0 %v660
    %671 = vmatprep.subr.mxu0 0.0
    %672 = vmatpush1.msra.mxu0 %v661
    %673 = vmatprep.subr.mxu0 0.0
    %674 = vmatpush1.msra.mxu0 %v662
    %675 = vmatprep.subr.mxu0 0.0
    %676 = vmatpush1.msra.mxu0 %v663
    %677 = vmatprep.subr.mxu0 0.0
    %678 = vmatpush1.msra.mxu0 %v664
    %679 = vmatprep.subr.mxu0 0.0
    %680 = vmatpush1.msra.mxu0 %v665
    %681 = vmatprep.subr.mxu0 0.0
    %682 = vmatpush1.msra.mxu0 %v666
    %683 = vmatprep.subr.mxu0 0.0
    %684 = vmatpush1.msra.mxu0 0.0
    %685 = vmatprep.subr.mxu0 0.0
    %686 = vmatpush1.msra.mxu0 0.0
    %687 = vmatprep.subr.mxu0 0.0
    %688 = vmatpush1.msra.mxu0 0.0
    %689 = vmatprep.subr.mxu0 0.0
    %690 = vmatpush1.msra.mxu0 0.0
    %691 = vmatprep.subr.mxu0 0.0
    %692 = vmatpush1.msra.mxu0 0.0
    %693 = vmatprep.subr.mxu0 0.0
    %694 = vmatpush1.msra.mxu0 0.0
    %695 = vmatprep.subr.mxu0 0.0
    %696 = vmatpush1.msra.mxu0 0.0
    %697 = vmatprep.subr.mxu0 0.0
    %698 = vmatpush1.msra.mxu0 0.0
    %699 = vmatprep.subr.mxu0 0.0
    %700 = vmatpush1.msra.mxu0 0.0
    %701 = vmatprep.subr.mxu0 0.0
    %702 = vmatpush1.msra.mxu0 0.0
    %703 = vmatprep.subr.mxu0 0.0
    %704 = vmatpush1.msra.mxu0 0.0
    %705 = vmatprep.subr.mxu0 0.0
    %706 = vmatpush1.msra.mxu0 0.0
    %707 = vmatprep.subr.mxu0 0.0
    %708 = vmatpush1.msra.mxu0 0.0
    %709 = vmatprep.subr.mxu0 0.0
    %710 = vmatpush1.msra.mxu0 0.0
    %711 = vmatprep.subr.mxu0 0.0
    %712 = vmatpush1.msra.mxu0 0.0
    %713 = vmatprep.subr.mxu0 0.0
    %714 = vmatpush1.msra.mxu0 0.0
    %715 = vmatprep.subr.mxu0 0.0
    %716 = vmatpush1.msra.mxu0 0.0
    %717 = vmatprep.subr.mxu0 0.0
    %718 = vmatpush1.msra.mxu0 0.0
    %719 = vmatprep.subr.mxu0 0.0
    %720 = vmatpush1.msra.mxu0 0.0
    %721 = vmatprep.subr.mxu0 0.0
    %722 = vmatpush1.msra.mxu0 0.0
    %723 = vmatprep.subr.mxu0 0.0
    %724 = vmatpush1.msra.mxu0 0.0
    %725 = vmatprep.subr.mxu0 0.0
    %726 = vmatpush1.msra.mxu0 0.0
    %727 = vmatprep.subr.mxu0 0.0
    %728 = vmatpush1.msra.mxu0 0.0
    %729 = vmatprep.subr.mxu0 0.0
    %730 = vmatpush1.msra.mxu0 0.0
    %731 = vmatprep.mubr.f32.mxu0 0.0
    %732 = vmatmul.mubr.f32.gmra.mrb[0].mxu0 %v490
    %v733 = vpop.f32.mrb[0].mxu0
    %v734 = vadd.f32 0.0, %v733
    %v735 = vpop.f32.mrb[0].mxu0
    %736 = vdwg.mxu0
    %737 = vmatprep.subr.mxu0 0.0
    %738 = vmatpush1.msra.mxu0 %v650
    %739 = vmatprep.subr.mxu0 0.0
    %740 = vmatpush1.msra.mxu0 %v651
    %741 = vmatprep.subr.mxu0 0.0
    %742 = vmatpush1.msra.mxu0 %v652
    %743 = vmatprep.subr.mxu0 0.0
    %744 = vmatpush1.msra.mxu0 %v653
    %745 = vmatprep.subr.mxu0 0.0
    %746 = vmatpush1.msra.mxu0 %v654
    %747 = vmatprep.subr.mxu0 0.0
    %748 = vmatpush1.msra.mxu0 %v655
    %749 = vmatprep.subr.mxu0 0.0
    %750 = vmatpush1.msra.mxu0 %v656
    %751 = vmatprep.subr.mxu0 0.0
    %752 = vmatpush1.msra.mxu0 %v657
    %753 = vmatprep.subr.mxu0 0.0
    %754 = vmatpush1.msra.mxu0 0.0
    %755 = vmatprep.subr.mxu0 0.0
    %756 = vmatpush1.msra.mxu0 0.0
    %757 = vmatprep.subr.mxu0 0.0
    %758 = vmatpush1.msra.mxu0 0.0
    %759 = vmatprep.subr.mxu0 0.0
    %760 = vmatpush1.msra.mxu0 0.0
    %761 = vmatprep.subr.mxu0 0.0
    %762 = vmatpush1.msra.mxu0 0.0
    %763 = vmatprep.subr.mxu0 0.0
    %764 = vmatpush1.msra.mxu0 0.0
    %765 = vmatprep.subr.mxu0 0.0
    %766 = vmatpush1.msra.mxu0 0.0
    %767 = vmatprep.subr.mxu0 0.0
    %768 = vmatpush1.msra.mxu0 0.0
    %769 = vmatprep.subr.mxu0 0.0
    %770 = vmatpush1.msra.mxu0 0.0
    %771 = vmatprep.subr.mxu0 0.0
    %772 = vmatpush1.msra.mxu0 0.0
    %773 = vmatprep.subr.mxu0 0.0
    %774 = vmatpush1.msra.mxu0 0.0
    %775 = vmatprep.subr.mxu0 0.0
    %776 = vmatpush1.msra.mxu0 0.0
    %777 = vmatprep.subr.mxu0 0.0
    %778 = vmatpush1.msra.mxu0 0.0
    %779 = vmatprep.subr.mxu0 0.0
    %780 = vmatpush1.msra.mxu0 0.0
    %781 = vmatprep.subr.mxu0 0.0
    %782 = vmatpush1.msra.mxu0 0.0
    %783 = vmatprep.subr.mxu0 0.0
    %784 = vmatpush1.msra.mxu0 0.0
    %785 = vmatprep.subr.mxu0 0.0
    %786 = vmatpush1.msra.mxu0 0.0
    %787 = vmatprep.subr.mxu0 0.0
    %788 = vmatpush1.msra.mxu0 0.0
    %789 = vmatprep.subr.mxu0 0.0
    %790 = vmatpush1.msra.mxu0 0.0
    %791 = vmatprep.subr.mxu0 0.0
    %792 = vmatpush1.msra.mxu0 0.0
    %793 = vmatprep.subr.mxu0 0.0
    %794 = vmatpush1.msra.mxu0 0.0
    %795 = vmatprep.subr.mxu0 0.0
    %796 = vmatpush1.msra.mxu0 0.0
    %797 = vmatprep.subr.mxu0 0.0
    %798 = vmatpush1.msra.mxu0 0.0
    %799 = vmatprep.subr.mxu0 0.0
    %800 = vmatpush1.msra.mxu0 0.0
    %801 = vmatprep.mubr.f32.mxu0 0.0
    %802 = vmatmul.mubr.f32.gmra.mrb[0].mxu0 %v563
    %v803 = vpop.f32.mrb[0].mxu0
    %v804 = vadd.f32 %v734, %v803
    %v805 = vpop.f32.mrb[0].mxu0
    %806 = vdwg.mxu0
    %s807 = scalar_lea.vmem %s13, 1
    %v808 = vld [vmem:[%s807] sm:$0x1]
    %v810 = vlaneseq
    %v811 = vshrl.u32 %v810, 7
    %v812 = vsub.s32 0, %v811
    %v813 = vrot.slane %v808, %v812
    %v815 = vadd.f32 %v804, %v813
    %v816 = vxor.u32 %v815, 2147483648
    %v817 = vmul.f32 %v816, 1.442695
    %v818 = vpow.pop %v817
    %v819 = vadd.f32 %v818, 1.0
    %v820 = vrcp.pop %v819
    %v821 = vmul.f32 1.0, %v820
    %s822 = scalar_lea.vmem [#allocation17], 128
    %v823 = vld [vmem:[%s822] sm:$0xff]
    %v824 = vld [vmem:[%s822 + $0x8] sm:$0xff]
    %v825 = vld [vmem:[%s822 + $0x10] sm:$0xff]
    %v826 = vld [vmem:[%s822 + $0x18] sm:$0xff]
    %v827 = vld [vmem:[%s822 + $0x20] sm:$0xff]
    %v828 = vld [vmem:[%s822 + $0x28] sm:$0xff]
    %v829 = vld [vmem:[%s822 + $0x30] sm:$0xff]
    %v830 = vld [vmem:[%s822 + $0x38] sm:$0xff]
    %s831 = scalar_lea.vmem [#allocation19], 128
    %v832 = vld [vmem:[%s831] sm:$0xff]
    %v833 = vld [vmem:[%s831 + $0x8] sm:$0xff]
    %v834 = vld [vmem:[%s831 + $0x10] sm:$0xff]
    %v835 = vld [vmem:[%s831 + $0x18] sm:$0xff]
    %v836 = vld [vmem:[%s831 + $0x20] sm:$0xff]
    %v837 = vld [vmem:[%s831 + $0x28] sm:$0xff]
    %v838 = vld [vmem:[%s831 + $0x30] sm:$0xff]
    %v839 = vld [vmem:[%s831 + $0x38] sm:$0xff]
    %840 = vmatprep.subr.mxu0 0.0
    %841 = vmatpush1.msra.mxu0 %v832
    %842 = vmatprep.subr.mxu0 0.0
    %843 = vmatpush1.msra.mxu0 %v833
    %844 = vmatprep.subr.mxu0 0.0
    %845 = vmatpush1.msra.mxu0 %v834
    %846 = vmatprep.subr.mxu0 0.0
    %847 = vmatpush1.msra.mxu0 %v835
    %848 = vmatprep.subr.mxu0 0.0
    %849 = vmatpush1.msra.mxu0 %v836
    %850 = vmatprep.subr.mxu0 0.0
    %851 = vmatpush1.msra.mxu0 %v837
    %852 = vmatprep.subr.mxu0 0.0
    %853 = vmatpush1.msra.mxu0 %v838
    %854 = vmatprep.subr.mxu0 0.0
    %855 = vmatpush1.msra.mxu0 %v839
    %856 = vmatprep.subr.mxu0 0.0
    %857 = vmatpush1.msra.mxu0 0.0
    %858 = vmatprep.subr.mxu0 0.0
    %859 = vmatpush1.msra.mxu0 0.0
    %860 = vmatprep.subr.mxu0 0.0
    %861 = vmatpush1.msra.mxu0 0.0
    %862 = vmatprep.subr.mxu0 0.0
    %863 = vmatpush1.msra.mxu0 0.0
    %864 = vmatprep.subr.mxu0 0.0
    %865 = vmatpush1.msra.mxu0 0.0
    %866 = vmatprep.subr.mxu0 0.0
    %867 = vmatpush1.msra.mxu0 0.0
    %868 = vmatprep.subr.mxu0 0.0
    %869 = vmatpush1.msra.mxu0 0.0
    %870 = vmatprep.subr.mxu0 0.0
    %871 = vmatpush1.msra.mxu0 0.0
    %872 = vmatprep.subr.mxu0 0.0
    %873 = vmatpush1.msra.mxu0 0.0
    %874 = vmatprep.subr.mxu0 0.0
    %875 = vmatpush1.msra.mxu0 0.0
    %876 = vmatprep.subr.mxu0 0.0
    %877 = vmatpush1.msra.mxu0 0.0
    %878 = vmatprep.subr.mxu0 0.0
    %879 = vmatpush1.msra.mxu0 0.0
    %880 = vmatprep.subr.mxu0 0.0
    %881 = vmatpush1.msra.mxu0 0.0
    %882 = vmatprep.subr.mxu0 0.0
    %883 = vmatpush1.msra.mxu0 0.0
    %884 = vmatprep.subr.mxu0 0.0
    %885 = vmatpush1.msra.mxu0 0.0
    %886 = vmatprep.subr.mxu0 0.0
    %887 = vmatpush1.msra.mxu0 0.0
    %888 = vmatprep.subr.mxu0 0.0
    %889 = vmatpush1.msra.mxu0 0.0
    %890 = vmatprep.subr.mxu0 0.0
    %891 = vmatpush1.msra.mxu0 0.0
    %892 = vmatprep.subr.mxu0 0.0
    %893 = vmatpush1.msra.mxu0 0.0
    %894 = vmatprep.subr.mxu0 0.0
    %895 = vmatpush1.msra.mxu0 0.0
    %896 = vmatprep.subr.mxu0 0.0
    %897 = vmatpush1.msra.mxu0 0.0
    %898 = vmatprep.subr.mxu0 0.0
    %899 = vmatpush1.msra.mxu0 0.0
    %900 = vmatprep.subr.mxu0 0.0
    %901 = vmatpush1.msra.mxu0 0.0
    %902 = vmatprep.subr.mxu0 0.0
    %903 = vmatpush1.msra.mxu0 0.0
    %904 = vmatprep.mubr.f32.mxu0 0.0
    %905 = vmatmul.mubr.f32.gmra.mrb[0].mxu0 %v490
    %v906 = vpop.f32.mrb[0].mxu0
    %v907 = vadd.f32 0.0, %v906
    %v908 = vpop.f32.mrb[0].mxu0
    %909 = vdwg.mxu0
    %910 = vmatprep.subr.mxu0 0.0
    %911 = vmatpush1.msra.mxu0 %v823
    %912 = vmatprep.subr.mxu0 0.0
    %913 = vmatpush1.msra.mxu0 %v824
    %914 = vmatprep.subr.mxu0 0.0
    %915 = vmatpush1.msra.mxu0 %v825
    %916 = vmatprep.subr.mxu0 0.0
    %917 = vmatpush1.msra.mxu0 %v826
    %918 = vmatprep.subr.mxu0 0.0
    %919 = vmatpush1.msra.mxu0 %v827
    %920 = vmatprep.subr.mxu0 0.0
    %921 = vmatpush1.msra.mxu0 %v828
    %922 = vmatprep.subr.mxu0 0.0
    %923 = vmatpush1.msra.mxu0 %v829
    %924 = vmatprep.subr.mxu0 0.0
    %925 = vmatpush1.msra.mxu0 %v830
    %926 = vmatprep.subr.mxu0 0.0
    %927 = vmatpush1.msra.mxu0 0.0
    %928 = vmatprep.subr.mxu0 0.0
    %929 = vmatpush1.msra.mxu0 0.0
    %930 = vmatprep.subr.mxu0 0.0
    %931 = vmatpush1.msra.mxu0 0.0
    %932 = vmatprep.subr.mxu0 0.0
    %933 = vmatpush1.msra.mxu0 0.0
    %934 = vmatprep.subr.mxu0 0.0
    %935 = vmatpush1.msra.mxu0 0.0
    %936 = vmatprep.subr.mxu0 0.0
    %937 = vmatpush1.msra.mxu0 0.0
    %938 = vmatprep.subr.mxu0 0.0
    %939 = vmatpush1.msra.mxu0 0.0
    %940 = vmatprep.subr.mxu0 0.0
    %941 = vmatpush1.msra.mxu0 0.0
    %942 = vmatprep.subr.mxu0 0.0
    %943 = vmatpush1.msra.mxu0 0.0
    %944 = vmatprep.subr.mxu0 0.0
    %945 = vmatpush1.msra.mxu0 0.0
    %946 = vmatprep.subr.mxu0 0.0
    %947 = vmatpush1.msra.mxu0 0.0
    %948 = vmatprep.subr.mxu0 0.0
    %949 = vmatpush1.msra.mxu0 0.0
    %950 = vmatprep.subr.mxu0 0.0
    %951 = vmatpush1.msra.mxu0 0.0
    %952 = vmatprep.subr.mxu0 0.0
    %953 = vmatpush1.msra.mxu0 0.0
    %954 = vmatprep.subr.mxu0 0.0
    %955 = vmatpush1.msra.mxu0 0.0
    %956 = vmatprep.subr.mxu0 0.0
    %957 = vmatpush1.msra.mxu0 0.0
    %958 = vmatprep.subr.mxu0 0.0
    %959 = vmatpush1.msra.mxu0 0.0
    %960 = vmatprep.subr.mxu0 0.0
    %961 = vmatpush1.msra.mxu0 0.0
    %962 = vmatprep.subr.mxu0 0.0
    %963 = vmatpush1.msra.mxu0 0.0
    %964 = vmatprep.subr.mxu0 0.0
    %965 = vmatpush1.msra.mxu0 0.0
    %966 = vmatprep.subr.mxu0 0.0
    %967 = vmatpush1.msra.mxu0 0.0
    %968 = vmatprep.subr.mxu0 0.0
    %969 = vmatpush1.msra.mxu0 0.0
    %970 = vmatprep.subr.mxu0 0.0
    %971 = vmatpush1.msra.mxu0 0.0
    %972 = vmatprep.subr.mxu0 0.0
    %973 = vmatpush1.msra.mxu0 0.0
    %974 = vmatprep.mubr.f32.mxu0 0.0
    %975 = vmatmul.mubr.f32.gmra.mrb[0].mxu0 %v563
    %v976 = vpop.f32.mrb[0].mxu0
    %v977 = vadd.f32 %v907, %v976
    %v978 = vpop.f32.mrb[0].mxu0
    %979 = vdwg.mxu0
    %s980 = scalar_lea.vmem %s13, 2
    %v981 = vld [vmem:[%s980] sm:$0x1]
    %v983 = vlaneseq
    %v984 = vshrl.u32 %v983, 7
    %v985 = vsub.s32 0, %v984
    %v986 = vrot.slane %v981, %v985
    %v988 = vadd.f32 %v977, %v986
    %v989 = vtanh.pop %v988
    %s990 = scalar_lea.vmem [#allocation17], 192
    %v991 = vld [vmem:[%s990] sm:$0xff]
    %v992 = vld [vmem:[%s990 + $0x8] sm:$0xff]
    %v993 = vld [vmem:[%s990 + $0x10] sm:$0xff]
    %v994 = vld [vmem:[%s990 + $0x18] sm:$0xff]
    %v995 = vld [vmem:[%s990 + $0x20] sm:$0xff]
    %v996 = vld [vmem:[%s990 + $0x28] sm:$0xff]
    %v997 = vld [vmem:[%s990 + $0x30] sm:$0xff]
    %v998 = vld [vmem:[%s990 + $0x38] sm:$0xff]
    %s999 = scalar_lea.vmem [#allocation19], 192
    %v1000 = vld [vmem:[%s999] sm:$0xff]
    %v1001 = vld [vmem:[%s999 + $0x8] sm:$0xff]
    %v1002 = vld [vmem:[%s999 + $0x10] sm:$0xff]
    %v1003 = vld [vmem:[%s999 + $0x18] sm:$0xff]
    %v1004 = vld [vmem:[%s999 + $0x20] sm:$0xff]
    %v1005 = vld [vmem:[%s999 + $0x28] sm:$0xff]
    %v1006 = vld [vmem:[%s999 + $0x30] sm:$0xff]
    %v1007 = vld [vmem:[%s999 + $0x38] sm:$0xff]
    %1008 = vmatprep.subr.mxu0 0.0
    %1009 = vmatpush1.msra.mxu0 %v1000
    %1010 = vmatprep.subr.mxu0 0.0
    %1011 = vmatpush1.msra.mxu0 %v1001
    %1012 = vmatprep.subr.mxu0 0.0
    %1013 = vmatpush1.msra.mxu0 %v1002
    %1014 = vmatprep.subr.mxu0 0.0
    %1015 = vmatpush1.msra.mxu0 %v1003
    %1016 = vmatprep.subr.mxu0 0.0
    %1017 = vmatpush1.msra.mxu0 %v1004
    %1018 = vmatprep.subr.mxu0 0.0
    %1019 = vmatpush1.msra.mxu0 %v1005
    %1020 = vmatprep.subr.mxu0 0.0
    %1021 = vmatpush1.msra.mxu0 %v1006
    %1022 = vmatprep.subr.mxu0 0.0
    %1023 = vmatpush1.msra.mxu0 %v1007
    %1024 = vmatprep.subr.mxu0 0.0
    %1025 = vmatpush1.msra.mxu0 0.0
    %1026 = vmatprep.subr.mxu0 0.0
    %1027 = vmatpush1.msra.mxu0 0.0
    %1028 = vmatprep.subr.mxu0 0.0
    %1029 = vmatpush1.msra.mxu0 0.0
    %1030 = vmatprep.subr.mxu0 0.0
    %1031 = vmatpush1.msra.mxu0 0.0
    %1032 = vmatprep.subr.mxu0 0.0
    %1033 = vmatpush1.msra.mxu0 0.0
    %1034 = vmatprep.subr.mxu0 0.0
    %1035 = vmatpush1.msra.mxu0 0.0
    %1036 = vmatprep.subr.mxu0 0.0
    %1037 = vmatpush1.msra.mxu0 0.0
    %1038 = vmatprep.subr.mxu0 0.0
    %1039 = vmatpush1.msra.mxu0 0.0
    %1040 = vmatprep.subr.mxu0 0.0
    %1041 = vmatpush1.msra.mxu0 0.0
    %1042 = vmatprep.subr.mxu0 0.0
    %1043 = vmatpush1.msra.mxu0 0.0
    %1044 = vmatprep.subr.mxu0 0.0
    %1045 = vmatpush1.msra.mxu0 0.0
    %1046 = vmatprep.subr.mxu0 0.0
    %1047 = vmatpush1.msra.mxu0 0.0
    %1048 = vmatprep.subr.mxu0 0.0
    %1049 = vmatpush1.msra.mxu0 0.0
    %1050 = vmatprep.subr.mxu0 0.0
    %1051 = vmatpush1.msra.mxu0 0.0
    %1052 = vmatprep.subr.mxu0 0.0
    %1053 = vmatpush1.msra.mxu0 0.0
    %1054 = vmatprep.subr.mxu0 0.0
    %1055 = vmatpush1.msra.mxu0 0.0
    %1056 = vmatprep.subr.mxu0 0.0
    %1057 = vmatpush1.msra.mxu0 0.0
    %1058 = vmatprep.subr.mxu0 0.0
    %1059 = vmatpush1.msra.mxu0 0.0
    %1060 = vmatprep.subr.mxu0 0.0
    %1061 = vmatpush1.msra.mxu0 0.0
    %1062 = vmatprep.subr.mxu0 0.0
    %1063 = vmatpush1.msra.mxu0 0.0
    %1064 = vmatprep.subr.mxu0 0.0
    %1065 = vmatpush1.msra.mxu0 0.0
    %1066 = vmatprep.subr.mxu0 0.0
    %1067 = vmatpush1.msra.mxu0 0.0
    %1068 = vmatprep.subr.mxu0 0.0
    %1069 = vmatpush1.msra.mxu0 0.0
    %1070 = vmatprep.subr.mxu0 0.0
    %1071 = vmatpush1.msra.mxu0 0.0
    %1072 = vmatprep.mubr.f32.mxu0 0.0
    %1073 = vmatmul.mubr.f32.gmra.mrb[0].mxu0 %v490
    %v1074 = vpop.f32.mrb[0].mxu0
    %v1075 = vadd.f32 0.0, %v1074
    %v1076 = vpop.f32.mrb[0].mxu0
    %1077 = vdwg.mxu0
    %1078 = vmatprep.subr.mxu0 0.0
    %1079 = vmatpush1.msra.mxu0 %v991
    %1080 = vmatprep.subr.mxu0 0.0
    %1081 = vmatpush1.msra.mxu0 %v992
    %1082 = vmatprep.subr.mxu0 0.0
    %1083 = vmatpush1.msra.mxu0 %v993
    %1084 = vmatprep.subr.mxu0 0.0
    %1085 = vmatpush1.msra.mxu0 %v994
    %1086 = vmatprep.subr.mxu0 0.0
    %1087 = vmatpush1.msra.mxu0 %v995
    %1088 = vmatprep.subr.mxu0 0.0
    %1089 = vmatpush1.msra.mxu0 %v996
    %1090 = vmatprep.subr.mxu0 0.0
    %1091 = vmatpush1.msra.mxu0 %v997
    %1092 = vmatprep.subr.mxu0 0.0
    %1093 = vmatpush1.msra.mxu0 %v998
    %1094 = vmatprep.subr.mxu0 0.0
    %1095 = vmatpush1.msra.mxu0 0.0
    %1096 = vmatprep.subr.mxu0 0.0
    %1097 = vmatpush1.msra.mxu0 0.0
    %1098 = vmatprep.subr.mxu0 0.0
    %1099 = vmatpush1.msra.mxu0 0.0
    %1100 = vmatprep.subr.mxu0 0.0
    %1101 = vmatpush1.msra.mxu0 0.0
    %1102 = vmatprep.subr.mxu0 0.0
    %1103 = vmatpush1.msra.mxu0 0.0
    %1104 = vmatprep.subr.mxu0 0.0
    %1105 = vmatpush1.msra.mxu0 0.0
    %1106 = vmatprep.subr.mxu0 0.0
    %1107 = vmatpush1.msra.mxu0 0.0
    %1108 = vmatprep.subr.mxu0 0.0
    %1109 = vmatpush1.msra.mxu0 0.0
    %1110 = vmatprep.subr.mxu0 0.0
    %1111 = vmatpush1.msra.mxu0 0.0
    %1112 = vmatprep.subr.mxu0 0.0
    %1113 = vmatpush1.msra.mxu0 0.0
    %1114 = vmatprep.subr.mxu0 0.0
    %1115 = vmatpush1.msra.mxu0 0.0
    %1116 = vmatprep.subr.mxu0 0.0
    %1117 = vmatpush1.msra.mxu0 0.0
    %1118 = vmatprep.subr.mxu0 0.0
    %1119 = vmatpush1.msra.mxu0 0.0
    %1120 = vmatprep.subr.mxu0 0.0
    %1121 = vmatpush1.msra.mxu0 0.0
    %1122 = vmatprep.subr.mxu0 0.0
    %1123 = vmatpush1.msra.mxu0 0.0
    %1124 = vmatprep.subr.mxu0 0.0
    %1125 = vmatpush1.msra.mxu0 0.0
    %1126 = vmatprep.subr.mxu0 0.0
    %1127 = vmatpush1.msra.mxu0 0.0
    %1128 = vmatprep.subr.mxu0 0.0
    %1129 = vmatpush1.msra.mxu0 0.0
    %1130 = vmatprep.subr.mxu0 0.0
    %1131 = vmatpush1.msra.mxu0 0.0
    %1132 = vmatprep.subr.mxu0 0.0
    %1133 = vmatpush1.msra.mxu0 0.0
    %1134 = vmatprep.subr.mxu0 0.0
    %1135 = vmatpush1.msra.mxu0 0.0
    %1136 = vmatprep.subr.mxu0 0.0
    %1137 = vmatpush1.msra.mxu0 0.0
    %1138 = vmatprep.subr.mxu0 0.0
    %1139 = vmatpush1.msra.mxu0 0.0
    %1140 = vmatprep.subr.mxu0 0.0
    %1141 = vmatpush1.msra.mxu0 0.0
    %1142 = vmatprep.mubr.f32.mxu0 0.0
    %1143 = vmatmul.mubr.f32.gmra.mrb[0].mxu0 %v563
    %v1144 = vpop.f32.mrb[0].mxu0
    %v1145 = vadd.f32 %v1075, %v1144
    %v1146 = vpop.f32.mrb[0].mxu0
    %1147 = vdwg.mxu0
    %s1148 = scalar_lea.vmem %s13, 3
    %v1149 = vld [vmem:[%s1148] sm:$0x1]
    %v1151 = vlaneseq
    %v1152 = vshrl.u32 %v1151, 7
    %v1153 = vsub.s32 0, %v1152
    %v1154 = vrot.slane %v1149, %v1153
    %v1156 = vadd.f32 %v1145, %v1154
    %v1157 = vxor.u32 %v1156, 2147483648
    %v1158 = vmul.f32 %v1157, 1.442695
    %v1159 = vpow.pop %v1158
    %v1160 = vadd.f32 %v1159, 1.0
    %v1161 = vrcp.pop %v1160
    %v1162 = vmul.f32 1.0, %v1161
    %v1163 = vmul.f32 %v821, 0.0
    %v1164 = vmul.f32 %v648, %v989
    %v1165 = vadd.f32 %v1163, %v1164
    %v1166 = vtanh.pop %v1165
    %v1167 = vmul.f32 %v1162, %v1166
    %s1168 = scalar_lea.vmem [#allocation2], 2
    %v1169 = vld [vmem:[%s1168] sm:$0x3]
    %v1171 = vsel %vm195, %v1169, 0
    %1173 = vmatprep.subr.mxu0 0.0
    %1174 = vmatpush1.msra.mxu0 %v186
    %1175 = vmatprep.subr.mxu0 0.0
    %1176 = vmatpush1.msra.mxu0 %v187
    %1177 = vmatprep.subr.mxu0 0.0
    %1178 = vmatpush1.msra.mxu0 0.0
    %1179 = vmatprep.subr.mxu0 0.0
    %1180 = vmatpush1.msra.mxu0 0.0
    %1181 = vmatprep.subr.mxu0 0.0
    %1182 = vmatpush1.msra.mxu0 0.0
    %1183 = vmatprep.subr.mxu0 0.0
    %1184 = vmatpush1.msra.mxu0 0.0
    %1185 = vmatprep.subr.mxu0 0.0
    %1186 = vmatpush1.msra.mxu0 0.0
    %1187 = vmatprep.subr.mxu0 0.0
    %1188 = vmatpush1.msra.mxu0 0.0
    %1189 = vmatprep.subr.mxu0 0.0
    %1190 = vmatpush1.msra.mxu0 0.0
    %1191 = vmatprep.subr.mxu0 0.0
    %1192 = vmatpush1.msra.mxu0 0.0
    %1193 = vmatprep.subr.mxu0 0.0
    %1194 = vmatpush1.msra.mxu0 0.0
    %1195 = vmatprep.subr.mxu0 0.0
    %1196 = vmatpush1.msra.mxu0 0.0
    %1197 = vmatprep.subr.mxu0 0.0
    %1198 = vmatpush1.msra.mxu0 0.0
    %1199 = vmatprep.subr.mxu0 0.0
    %1200 = vmatpush1.msra.mxu0 0.0
    %1201 = vmatprep.subr.mxu0 0.0
    %1202 = vmatpush1.msra.mxu0 0.0
    %1203 = vmatprep.subr.mxu0 0.0
    %1204 = vmatpush1.msra.mxu0 0.0
    %1205 = vmatprep.subr.mxu0 0.0
    %1206 = vmatpush1.msra.mxu0 0.0
    %1207 = vmatprep.subr.mxu0 0.0
    %1208 = vmatpush1.msra.mxu0 0.0
    %1209 = vmatprep.subr.mxu0 0.0
    %1210 = vmatpush1.msra.mxu0 0.0
    %1211 = vmatprep.subr.mxu0 0.0
    %1212 = vmatpush1.msra.mxu0 0.0
    %1213 = vmatprep.subr.mxu0 0.0
    %1214 = vmatpush1.msra.mxu0 0.0
    %1215 = vmatprep.subr.mxu0 0.0
    %1216 = vmatpush1.msra.mxu0 0.0
    %1217 = vmatprep.subr.mxu0 0.0
    %1218 = vmatpush1.msra.mxu0 0.0
    %1219 = vmatprep.subr.mxu0 0.0
    %1220 = vmatpush1.msra.mxu0 0.0
    %1221 = vmatprep.subr.mxu0 0.0
    %1222 = vmatpush1.msra.mxu0 0.0
    %1223 = vmatprep.subr.mxu0 0.0
    %1224 = vmatpush1.msra.mxu0 0.0
    %1225 = vmatprep.subr.mxu0 0.0
    %1226 = vmatpush1.msra.mxu0 0.0
    %1227 = vmatprep.subr.mxu0 0.0
    %1228 = vmatpush1.msra.mxu0 0.0
    %1229 = vmatprep.subr.mxu0 0.0
    %1230 = vmatpush1.msra.mxu0 0.0
    %1231 = vmatprep.subr.mxu0 0.0
    %1232 = vmatpush1.msra.mxu0 0.0
    %1233 = vmatprep.subr.mxu0 0.0
    %1234 = vmatpush1.msra.mxu0 0.0
    %1235 = vmatprep.subr.mxu0 0.0
    %1236 = vmatpush1.msra.mxu0 0.0
    %1237 = vmatprep.mubr.f32.mxu0 0.0
    %1238 = vmatmul.mubr.f32.gmra.mrb[0].mxu0 %v1171
    %v1239 = vpop.f32.mrb[0].mxu0
    %v1240 = vadd.f32 %v193, %v1239
    %v1241 = vpop.f32.mrb[0].mxu0
    %1242 = vdwg.mxu0
    %v1243 = vmul.f32 %v1240, %v274
    %v1244 = vadd.f32 %v1243, %v282
    %v1245 = vmax.f32 %v1244, 0.0
    %v1247 = vsel %vm297, %v1245, 0
    %1249 = vmatprep.subr.mxu0 0.0
    %1250 = vmatpush1.msra.mxu0 %v286
    %1251 = vmatprep.subr.mxu0 0.0
    %1252 = vmatpush1.msra.mxu0 %v287
    %1253 = vmatprep.subr.mxu0 0.0
    %1254 = vmatpush1.msra.mxu0 %v288
    %1255 = vmatprep.subr.mxu0 0.0
    %1256 = vmatpush1.msra.mxu0 %v289
    %1257 = vmatprep.subr.mxu0 0.0
    %1258 = vmatpush1.msra.mxu0 0.0
    %1259 = vmatprep.subr.mxu0 0.0
    %1260 = vmatpush1.msra.mxu0 0.0
    %1261 = vmatprep.subr.mxu0 0.0
    %1262 = vmatpush1.msra.mxu0 0.0
    %1263 = vmatprep.subr.mxu0 0.0
    %1264 = vmatpush1.msra.mxu0 0.0
    %1265 = vmatprep.subr.mxu0 0.0
    %1266 = vmatpush1.msra.mxu0 0.0
    %1267 = vmatprep.subr.mxu0 0.0
    %1268 = vmatpush1.msra.mxu0 0.0
    %1269 = vmatprep.subr.mxu0 0.0
    %1270 = vmatpush1.msra.mxu0 0.0
    %1271 = vmatprep.subr.mxu0 0.0
    %1272 = vmatpush1.msra.mxu0 0.0
    %1273 = vmatprep.subr.mxu0 0.0
    %1274 = vmatpush1.msra.mxu0 0.0
    %1275 = vmatprep.subr.mxu0 0.0
    %1276 = vmatpush1.msra.mxu0 0.0
    %1277 = vmatprep.subr.mxu0 0.0
    %1278 = vmatpush1.msra.mxu0 0.0
    %1279 = vmatprep.subr.mxu0 0.0
    %1280 = vmatpush1.msra.mxu0 0.0
    %1281 = vmatprep.subr.mxu0 0.0
    %1282 = vmatpush1.msra.mxu0 0.0
    %1283 = vmatprep.subr.mxu0 0.0
    %1284 = vmatpush1.msra.mxu0 0.0
    %1285 = vmatprep.subr.mxu0 0.0
    %1286 = vmatpush1.msra.mxu0 0.0
    %1287 = vmatprep.subr.mxu0 0.0
    %1288 = vmatpush1.msra.mxu0 0.0
    %1289 = vmatprep.subr.mxu0 0.0
    %1290 = vmatpush1.msra.mxu0 0.0
    %1291 = vmatprep.subr.mxu0 0.0
    %1292 = vmatpush1.msra.mxu0 0.0
    %1293 = vmatprep.subr.mxu0 0.0
    %1294 = vmatpush1.msra.mxu0 0.0
    %1295 = vmatprep.subr.mxu0 0.0
    %1296 = vmatpush1.msra.mxu0 0.0
    %1297 = vmatprep.subr.mxu0 0.0
    %1298 = vmatpush1.msra.mxu0 0.0
    %1299 = vmatprep.subr.mxu0 0.0
    %1300 = vmatpush1.msra.mxu0 0.0
    %1301 = vmatprep.subr.mxu0 0.0
    %1302 = vmatpush1.msra.mxu0 0.0
    %1303 = vmatprep.subr.mxu0 0.0
    %1304 = vmatpush1.msra.mxu0 0.0
    %1305 = vmatprep.subr.mxu0 0.0
    %1306 = vmatpush1.msra.mxu0 0.0
    %1307 = vmatprep.subr.mxu0 0.0
    %1308 = vmatpush1.msra.mxu0 0.0
    %1309 = vmatprep.subr.mxu0 0.0
    %1310 = vmatpush1.msra.mxu0 0.0
    %1311 = vmatprep.subr.mxu0 0.0
    %1312 = vmatpush1.msra.mxu0 0.0
    %1313 = vmatprep.mubr.f32.mxu0 0.0
    %1314 = vmatmul.mubr.f32.gmra.mrb[0].mxu0 %v1247
    %v1315 = vpop.f32.mrb[0].mxu0
    %v1316 = vadd.f32 %v295, %v1315
    %v1317 = vpop.f32.mrb[0].mxu0
    %1318 = vdwg.mxu0
    %v1319 = vmul.f32 %v1316, %v376
    %v1320 = vadd.f32 %v1319, %v384
    %v1321 = vmax.f32 %v1320, 0.0
    %v1323 = vsel %vm297, %v1321, 0
    %1325 = vmatprep.subr.mxu0 0.0
    %1326 = vmatpush1.msra.mxu0 %v388
    %1327 = vmatprep.subr.mxu0 0.0
    %1328 = vmatpush1.msra.mxu0 %v389
    %1329 = vmatprep.subr.mxu0 0.0
    %1330 = vmatpush1.msra.mxu0 %v390
    %1331 = vmatprep.subr.mxu0 0.0
    %1332 = vmatpush1.msra.mxu0 %v391
    %1333 = vmatprep.subr.mxu0 0.0
    %1334 = vmatpush1.msra.mxu0 0.0
    %1335 = vmatprep.subr.mxu0 0.0
    %1336 = vmatpush1.msra.mxu0 0.0
    %1337 = vmatprep.subr.mxu0 0.0
    %1338 = vmatpush1.msra.mxu0 0.0
    %1339 = vmatprep.subr.mxu0 0.0
    %1340 = vmatpush1.msra.mxu0 0.0
    %1341 = vmatprep.subr.mxu0 0.0
    %1342 = vmatpush1.msra.mxu0 0.0
    %1343 = vmatprep.subr.mxu0 0.0
    %1344 = vmatpush1.msra.mxu0 0.0
    %1345 = vmatprep.subr.mxu0 0.0
    %1346 = vmatpush1.msra.mxu0 0.0
    %1347 = vmatprep.subr.mxu0 0.0
    %1348 = vmatpush1.msra.mxu0 0.0
    %1349 = vmatprep.subr.mxu0 0.0
    %1350 = vmatpush1.msra.mxu0 0.0
    %1351 = vmatprep.subr.mxu0 0.0
    %1352 = vmatpush1.msra.mxu0 0.0
    %1353 = vmatprep.subr.mxu0 0.0
    %1354 = vmatpush1.msra.mxu0 0.0
    %1355 = vmatprep.subr.mxu0 0.0
    %1356 = vmatpush1.msra.mxu0 0.0
    %1357 = vmatprep.subr.mxu0 0.0
    %1358 = vmatpush1.msra.mxu0 0.0
    %1359 = vmatprep.subr.mxu0 0.0
    %1360 = vmatpush1.msra.mxu0 0.0
    %1361 = vmatprep.subr.mxu0 0.0
    %1362 = vmatpush1.msra.mxu0 0.0
    %1363 = vmatprep.subr.mxu0 0.0
    %1364 = vmatpush1.msra.mxu0 0.0
    %1365 = vmatprep.subr.mxu0 0.0
    %1366 = vmatpush1.msra.mxu0 0.0
    %1367 = vmatprep.subr.mxu0 0.0
    %1368 = vmatpush1.msra.mxu0 0.0
    %1369 = vmatprep.subr.mxu0 0.0
    %1370 = vmatpush1.msra.mxu0 0.0
    %1371 = vmatprep.subr.mxu0 0.0
    %1372 = vmatpush1.msra.mxu0 0.0
    %1373 = vmatprep.subr.mxu0 0.0
    %1374 = vmatpush1.msra.mxu0 0.0
    %1375 = vmatprep.subr.mxu0 0.0
    %1376 = vmatpush1.msra.mxu0 0.0
    %1377 = vmatprep.subr.mxu0 0.0
    %1378 = vmatpush1.msra.mxu0 0.0
    %1379 = vmatprep.subr.mxu0 0.0
    %1380 = vmatpush1.msra.mxu0 0.0
    %1381 = vmatprep.subr.mxu0 0.0
    %1382 = vmatpush1.msra.mxu0 0.0
    %1383 = vmatprep.subr.mxu0 0.0
    %1384 = vmatpush1.msra.mxu0 0.0
    %1385 = vmatprep.subr.mxu0 0.0
    %1386 = vmatpush1.msra.mxu0 0.0
    %1387 = vmatprep.subr.mxu0 0.0
    %1388 = vmatpush1.msra.mxu0 0.0
    %1389 = vmatprep.mubr.f32.mxu0 0.0
    %1390 = vmatmul.mubr.f32.gmra.mrb[0].mxu0 %v1323
    %v1391 = vpop.f32.mrb[0].mxu0
    %v1392 = vadd.f32 %v397, %v1391
    %v1393 = vpop.f32.mrb[0].mxu0
    %1394 = vdwg.mxu0
    %v1396 = vsel %vm488, %v1167, 0
    %1398 = vmatprep.subr.mxu0 0.0
    %1399 = vmatpush1.msra.mxu0 %v480
    %1400 = vmatprep.subr.mxu0 0.0
    %1401 = vmatpush1.msra.mxu0 %v481
    %1402 = vmatprep.subr.mxu0 0.0
    %1403 = vmatpush1.msra.mxu0 %v482
    %1404 = vmatprep.subr.mxu0 0.0
    %1405 = vmatpush1.msra.mxu0 %v483
    %1406 = vmatprep.subr.mxu0 0.0
    %1407 = vmatpush1.msra.mxu0 %v484
    %1408 = vmatprep.subr.mxu0 0.0
    %1409 = vmatpush1.msra.mxu0 %v485
    %1410 = vmatprep.subr.mxu0 0.0
    %1411 = vmatpush1.msra.mxu0 %v486
    %1412 = vmatprep.subr.mxu0 0.0
    %1413 = vmatpush1.msra.mxu0 %v487
    %1414 = vmatprep.subr.mxu0 0.0
    %1415 = vmatpush1.msra.mxu0 0.0
    %1416 = vmatprep.subr.mxu0 0.0
    %1417 = vmatpush1.msra.mxu0 0.0
    %1418 = vmatprep.subr.mxu0 0.0
    %1419 = vmatpush1.msra.mxu0 0.0
    %1420 = vmatprep.subr.mxu0 0.0
    %1421 = vmatpush1.msra.mxu0 0.0
    %1422 = vmatprep.subr.mxu0 0.0
    %1423 = vmatpush1.msra.mxu0 0.0
    %1424 = vmatprep.subr.mxu0 0.0
    %1425 = vmatpush1.msra.mxu0 0.0
    %1426 = vmatprep.subr.mxu0 0.0
    %1427 = vmatpush1.msra.mxu0 0.0
    %1428 = vmatprep.subr.mxu0 0.0
    %1429 = vmatpush1.msra.mxu0 0.0
    %1430 = vmatprep.subr.mxu0 0.0
    %1431 = vmatpush1.msra.mxu0 0.0
    %1432 = vmatprep.subr.mxu0 0.0
    %1433 = vmatpush1.msra.mxu0 0.0
    %1434 = vmatprep.subr.mxu0 0.0
    %1435 = vmatpush1.msra.mxu0 0.0
    %1436 = vmatprep.subr.mxu0 0.0
    %1437 = vmatpush1.msra.mxu0 0.0
    %1438 = vmatprep.subr.mxu0 0.0
    %1439 = vmatpush1.msra.mxu0 0.0
    %1440 = vmatprep.subr.mxu0 0.0
    %1441 = vmatpush1.msra.mxu0 0.0
    %1442 = vmatprep.subr.mxu0 0.0
    %1443 = vmatpush1.msra.mxu0 0.0
    %1444 = vmatprep.subr.mxu0 0.0
    %1445 = vmatpush1.msra.mxu0 0.0
    %1446 = vmatprep.subr.mxu0 0.0
    %1447 = vmatpush1.msra.mxu0 0.0
    %1448 = vmatprep.subr.mxu0 0.0
    %1449 = vmatpush1.msra.mxu0 0.0
    %1450 = vmatprep.subr.mxu0 0.0
    %1451 = vmatpush1.msra.mxu0 0.0
    %1452 = vmatprep.subr.mxu0 0.0
    %1453 = vmatpush1.msra.mxu0 0.0
    %1454 = vmatprep.subr.mxu0 0.0
    %1455 = vmatpush1.msra.mxu0 0.0
    %1456 = vmatprep.subr.mxu0 0.0
    %1457 = vmatpush1.msra.mxu0 0.0
    %1458 = vmatprep.subr.mxu0 0.0
    %1459 = vmatpush1.msra.mxu0 0.0
    %1460 = vmatprep.subr.mxu0 0.0
    %1461 = vmatpush1.msra.mxu0 0.0
    %1462 = vmatprep.mubr.f32.mxu0 0.0
    %1463 = vmatmul.mubr.f32.gmra.mrb[0].mxu0 %v1396
    %v1464 = vpop.f32.mrb[0].mxu0
    %v1465 = vadd.f32 0.0, %v1464
    %v1466 = vpop.f32.mrb[0].mxu0
    %1467 = vdwg.mxu0
    %v1469 = vsel %vm488, %v1392, 0
    %1471 = vmatprep.subr.mxu0 0.0
    %1472 = vmatpush1.msra.mxu0 %v472
    %1473 = vmatprep.subr.mxu0 0.0
    %1474 = vmatpush1.msra.mxu0 %v473
    %1475 = vmatprep.subr.mxu0 0.0
    %1476 = vmatpush1.msra.mxu0 %v474
    %1477 = vmatprep.subr.mxu0 0.0
    %1478 = vmatpush1.msra.mxu0 %v475
    %1479 = vmatprep.subr.mxu0 0.0
    %1480 = vmatpush1.msra.mxu0 %v476
    %1481 = vmatprep.subr.mxu0 0.0
    %1482 = vmatpush1.msra.mxu0 %v477
    %1483 = vmatprep.subr.mxu0 0.0
    %1484 = vmatpush1.msra.mxu0 %v478
    %1485 = vmatprep.subr.mxu0 0.0
    %1486 = vmatpush1.msra.mxu0 %v479
    %1487 = vmatprep.subr.mxu0 0.0
    %1488 = vmatpush1.msra.mxu0 0.0
    %1489 = vmatprep.subr.mxu0 0.0
    %1490 = vmatpush1.msra.mxu0 0.0
    %1491 = vmatprep.subr.mxu0 0.0
    %1492 = vmatpush1.msra.mxu0 0.0
    %1493 = vmatprep.subr.mxu0 0.0
    %1494 = vmatpush1.msra.mxu0 0.0
    %1495 = vmatprep.subr.mxu0 0.0
    %1496 = vmatpush1.msra.mxu0 0.0
    %1497 = vmatprep.subr.mxu0 0.0
    %1498 = vmatpush1.msra.mxu0 0.0
    %1499 = vmatprep.subr.mxu0 0.0
    %1500 = vmatpush1.msra.mxu0 0.0
    %1501 = vmatprep.subr.mxu0 0.0
    %1502 = vmatpush1.msra.mxu0 0.0
    %1503 = vmatprep.subr.mxu0 0.0
    %1504 = vmatpush1.msra.mxu0 0.0
    %1505 = vmatprep.subr.mxu0 0.0
    %1506 = vmatpush1.msra.mxu0 0.0
    %1507 = vmatprep.subr.mxu0 0.0
    %1508 = vmatpush1.msra.mxu0 0.0
    %1509 = vmatprep.subr.mxu0 0.0
    %1510 = vmatpush1.msra.mxu0 0.0
    %1511 = vmatprep.subr.mxu0 0.0
    %1512 = vmatpush1.msra.mxu0 0.0
    %1513 = vmatprep.subr.mxu0 0.0
    %1514 = vmatpush1.msra.mxu0 0.0
    %1515 = vmatprep.subr.mxu0 0.0
    %1516 = vmatpush1.msra.mxu0 0.0
    %1517 = vmatprep.subr.mxu0 0.0
    %1518 = vmatpush1.msra.mxu0 0.0
    %1519 = vmatprep.subr.mxu0 0.0
    %1520 = vmatpush1.msra.mxu0 0.0
    %1521 = vmatprep.subr.mxu0 0.0
    %1522 = vmatpush1.msra.mxu0 0.0
    %1523 = vmatprep.subr.mxu0 0.0
    %1524 = vmatpush1.msra.mxu0 0.0
    %1525 = vmatprep.subr.mxu0 0.0
    %1526 = vmatpush1.msra.mxu0 0.0
    %1527 = vmatprep.subr.mxu0 0.0
    %1528 = vmatpush1.msra.mxu0 0.0
    %1529 = vmatprep.subr.mxu0 0.0
    %1530 = vmatpush1.msra.mxu0 0.0
    %1531 = vmatprep.subr.mxu0 0.0
    %1532 = vmatpush1.msra.mxu0 0.0
    %1533 = vmatprep.subr.mxu0 0.0
    %1534 = vmatpush1.msra.mxu0 0.0
    %1535 = vmatprep.mubr.f32.mxu0 0.0
    %1536 = vmatmul.mubr.f32.gmra.mrb[0].mxu0 %v1469
    %v1537 = vpop.f32.mrb[0].mxu0
    %v1538 = vadd.f32 %v1465, %v1537
    %v1539 = vpop.f32.mrb[0].mxu0
    %1540 = vdwg.mxu0
    %v1541 = vadd.f32 %v1538, %v640
    %v1542 = vxor.u32 %v1541, 2147483648
    %v1543 = vmul.f32 %v1542, 1.442695
    %v1544 = vpow.pop %v1543
    %v1545 = vadd.f32 %v1544, 1.0
    %v1546 = vrcp.pop %v1545
    %v1547 = vmul.f32 1.0, %v1546
    %1548 = vmatprep.subr.mxu0 0.0
    %1549 = vmatpush1.msra.mxu0 %v659
    %1550 = vmatprep.subr.mxu0 0.0
    %1551 = vmatpush1.msra.mxu0 %v660
    %1552 = vmatprep.subr.mxu0 0.0
    %1553 = vmatpush1.msra.mxu0 %v661
    %1554 = vmatprep.subr.mxu0 0.0
    %1555 = vmatpush1.msra.mxu0 %v662
    %1556 = vmatprep.subr.mxu0 0.0
    %1557 = vmatpush1.msra.mxu0 %v663
    %1558 = vmatprep.subr.mxu0 0.0
    %1559 = vmatpush1.msra.mxu0 %v664
    %1560 = vmatprep.subr.mxu0 0.0
    %1561 = vmatpush1.msra.mxu0 %v665
    %1562 = vmatprep.subr.mxu0 0.0
    %1563 = vmatpush1.msra.mxu0 %v666
    %1564 = vmatprep.subr.mxu0 0.0
    %1565 = vmatpush1.msra.mxu0 0.0
    %1566 = vmatprep.subr.mxu0 0.0
    %1567 = vmatpush1.msra.mxu0 0.0
    %1568 = vmatprep.subr.mxu0 0.0
    %1569 = vmatpush1.msra.mxu0 0.0
    %1570 = vmatprep.subr.mxu0 0.0
    %1571 = vmatpush1.msra.mxu0 0.0
    %1572 = vmatprep.subr.mxu0 0.0
    %1573 = vmatpush1.msra.mxu0 0.0
    %1574 = vmatprep.subr.mxu0 0.0
    %1575 = vmatpush1.msra.mxu0 0.0
    %1576 = vmatprep.subr.mxu0 0.0
    %1577 = vmatpush1.msra.mxu0 0.0
    %1578 = vmatprep.subr.mxu0 0.0
    %1579 = vmatpush1.msra.mxu0 0.0
    %1580 = vmatprep.subr.mxu0 0.0
    %1581 = vmatpush1.msra.mxu0 0.0
    %1582 = vmatprep.subr.mxu0 0.0
    %1583 = vmatpush1.msra.mxu0 0.0
    %1584 = vmatprep.subr.mxu0 0.0
    %1585 = vmatpush1.msra.mxu0 0.0
    %1586 = vmatprep.subr.mxu0 0.0
    %1587 = vmatpush1.msra.mxu0 0.0
    %1588 = vmatprep.subr.mxu0 0.0
    %1589 = vmatpush1.msra.mxu0 0.0
    %1590 = vmatprep.subr.mxu0 0.0
    %1591 = vmatpush1.msra.mxu0 0.0
    %1592 = vmatprep.subr.mxu0 0.0
    %1593 = vmatpush1.msra.mxu0 0.0
    %1594 = vmatprep.subr.mxu0 0.0
    %1595 = vmatpush1.msra.mxu0 0.0
    %1596 = vmatprep.subr.mxu0 0.0
    %1597 = vmatpush1.msra.mxu0 0.0
    %1598 = vmatprep.subr.mxu0 0.0
    %1599 = vmatpush1.msra.mxu0 0.0
    %1600 = vmatprep.subr.mxu0 0.0
    %1601 = vmatpush1.msra.mxu0 0.0
    %1602 = vmatprep.subr.mxu0 0.0
    %1603 = vmatpush1.msra.mxu0 0.0
    %1604 = vmatprep.subr.mxu0 0.0
    %1605 = vmatpush1.msra.mxu0 0.0
    %1606 = vmatprep.subr.mxu0 0.0
    %1607 = vmatpush1.msra.mxu0 0.0
    %1608 = vmatprep.subr.mxu0 0.0
    %1609 = vmatpush1.msra.mxu0 0.0
    %1610 = vmatprep.subr.mxu0 0.0
    %1611 = vmatpush1.msra.mxu0 0.0
    %1612 = vmatprep.mubr.f32.mxu0 0.0
    %1613 = vmatmul.mubr.f32.gmra.mrb[0].mxu0 %v1396
    %v1614 = vpop.f32.mrb[0].mxu0
    %v1615 = vadd.f32 0.0, %v1614
    %v1616 = vpop.f32.mrb[0].mxu0
    %1617 = vdwg.mxu0
    %1618 = vmatprep.subr.mxu0 0.0
    %1619 = vmatpush1.msra.mxu0 %v650
    %1620 = vmatprep.subr.mxu0 0.0
    %1621 = vmatpush1.msra.mxu0 %v651
    %1622 = vmatprep.subr.mxu0 0.0
    %1623 = vmatpush1.msra.mxu0 %v652
    %1624 = vmatprep.subr.mxu0 0.0
    %1625 = vmatpush1.msra.mxu0 %v653
    %1626 = vmatprep.subr.mxu0 0.0
    %1627 = vmatpush1.msra.mxu0 %v654
    %1628 = vmatprep.subr.mxu0 0.0
    %1629 = vmatpush1.msra.mxu0 %v655
    %1630 = vmatprep.subr.mxu0 0.0
    %1631 = vmatpush1.msra.mxu0 %v656
    %1632 = vmatprep.subr.mxu0 0.0
    %1633 = vmatpush1.msra.mxu0 %v657
    %1634 = vmatprep.subr.mxu0 0.0
    %1635 = vmatpush1.msra.mxu0 0.0
    %1636 = vmatprep.subr.mxu0 0.0
    %1637 = vmatpush1.msra.mxu0 0.0
    %1638 = vmatprep.subr.mxu0 0.0
    %1639 = vmatpush1.msra.mxu0 0.0
    %1640 = vmatprep.subr.mxu0 0.0
    %1641 = vmatpush1.msra.mxu0 0.0
    %1642 = vmatprep.subr.mxu0 0.0
    %1643 = vmatpush1.msra.mxu0 0.0
    %1644 = vmatprep.subr.mxu0 0.0
    %1645 = vmatpush1.msra.mxu0 0.0
    %1646 = vmatprep.subr.mxu0 0.0
    %1647 = vmatpush1.msra.mxu0 0.0
    %1648 = vmatprep.subr.mxu0 0.0
    %1649 = vmatpush1.msra.mxu0 0.0
    %1650 = vmatprep.subr.mxu0 0.0
    %1651 = vmatpush1.msra.mxu0 0.0
    %1652 = vmatprep.subr.mxu0 0.0
    %1653 = vmatpush1.msra.mxu0 0.0
    %1654 = vmatprep.subr.mxu0 0.0
    %1655 = vmatpush1.msra.mxu0 0.0
    %1656 = vmatprep.subr.mxu0 0.0
    %1657 = vmatpush1.msra.mxu0 0.0
    %1658 = vmatprep.subr.mxu0 0.0
    %1659 = vmatpush1.msra.mxu0 0.0
    %1660 = vmatprep.subr.mxu0 0.0
    %1661 = vmatpush1.msra.mxu0 0.0
    %1662 = vmatprep.subr.mxu0 0.0
    %1663 = vmatpush1.msra.mxu0 0.0
    %1664 = vmatprep.subr.mxu0 0.0
    %1665 = vmatpush1.msra.mxu0 0.0
    %1666 = vmatprep.subr.mxu0 0.0
    %1667 = vmatpush1.msra.mxu0 0.0
    %1668 = vmatprep.subr.mxu0 0.0
    %1669 = vmatpush1.msra.mxu0 0.0
    %1670 = vmatprep.subr.mxu0 0.0
    %1671 = vmatpush1.msra.mxu0 0.0
    %1672 = vmatprep.subr.mxu0 0.0
    %1673 = vmatpush1.msra.mxu0 0.0
    %1674 = vmatprep.subr.mxu0 0.0
    %1675 = vmatpush1.msra.mxu0 0.0
    %1676 = vmatprep.subr.mxu0 0.0
    %1677 = vmatpush1.msra.mxu0 0.0
    %1678 = vmatprep.subr.mxu0 0.0
    %1679 = vmatpush1.msra.mxu0 0.0
    %1680 = vmatprep.subr.mxu0 0.0
    %1681 = vmatpush1.msra.mxu0 0.0
    %1682 = vmatprep.mubr.f32.mxu0 0.0
    %1683 = vmatmul.mubr.f32.gmra.mrb[0].mxu0 %v1469
    %v1684 = vpop.f32.mrb[0].mxu0
    %v1685 = vadd.f32 %v1615, %v1684
    %v1686 = vpop.f32.mrb[0].mxu0
    %1687 = vdwg.mxu0
    %v1688 = vadd.f32 %v1685, %v813
    %v1689 = vxor.u32 %v1688, 2147483648
    %v1690 = vmul.f32 %v1689, 1.442695
    %v1691 = vpow.pop %v1690
    %v1692 = vadd.f32 %v1691, 1.0
    %v1693 = vrcp.pop %v1692
    %v1694 = vmul.f32 1.0, %v1693
    %1695 = vmatprep.subr.mxu0 0.0
    %1696 = vmatpush1.msra.mxu0 %v832
    %1697 = vmatprep.subr.mxu0 0.0
    %1698 = vmatpush1.msra.mxu0 %v833
    %1699 = vmatprep.subr.mxu0 0.0
    %1700 = vmatpush1.msra.mxu0 %v834
    %1701 = vmatprep.subr.mxu0 0.0
    %1702 = vmatpush1.msra.mxu0 %v835
    %1703 = vmatprep.subr.mxu0 0.0
    %1704 = vmatpush1.msra.mxu0 %v836
    %1705 = vmatprep.subr.mxu0 0.0
    %1706 = vmatpush1.msra.mxu0 %v837
    %1707 = vmatprep.subr.mxu0 0.0
    %1708 = vmatpush1.msra.mxu0 %v838
    %1709 = vmatprep.subr.mxu0 0.0
    %1710 = vmatpush1.msra.mxu0 %v839
    %1711 = vmatprep.subr.mxu0 0.0
    %1712 = vmatpush1.msra.mxu0 0.0
    %1713 = vmatprep.subr.mxu0 0.0
    %1714 = vmatpush1.msra.mxu0 0.0
    %1715 = vmatprep.subr.mxu0 0.0
    %1716 = vmatpush1.msra.mxu0 0.0
    %1717 = vmatprep.subr.mxu0 0.0
    %1718 = vmatpush1.msra.mxu0 0.0
    %1719 = vmatprep.subr.mxu0 0.0
    %1720 = vmatpush1.msra.mxu0 0.0
    %1721 = vmatprep.subr.mxu0 0.0
    %1722 = vmatpush1.msra.mxu0 0.0
    %1723 = vmatprep.subr.mxu0 0.0
    %1724 = vmatpush1.msra.mxu0 0.0
    %1725 = vmatprep.subr.mxu0 0.0
    %1726 = vmatpush1.msra.mxu0 0.0
    %1727 = vmatprep.subr.mxu0 0.0
    %1728 = vmatpush1.msra.mxu0 0.0
    %1729 = vmatprep.subr.mxu0 0.0
    %1730 = vmatpush1.msra.mxu0 0.0
    %1731 = vmatprep.subr.mxu0 0.0
    %1732 = vmatpush1.msra.mxu0 0.0
    %1733 = vmatprep.subr.mxu0 0.0
    %1734 = vmatpush1.msra.mxu0 0.0
    %1735 = vmatprep.subr.mxu0 0.0
    %1736 = vmatpush1.msra.mxu0 0.0
    %1737 = vmatprep.subr.mxu0 0.0
    %1738 = vmatpush1.msra.mxu0 0.0
    %1739 = vmatprep.subr.mxu0 0.0
    %1740 = vmatpush1.msra.mxu0 0.0
    %1741 = vmatprep.subr.mxu0 0.0
    %1742 = vmatpush1.msra.mxu0 0.0
    %1743 = vmatprep.subr.mxu0 0.0
    %1744 = vmatpush1.msra.mxu0 0.0
    %1745 = vmatprep.subr.mxu0 0.0
    %1746 = vmatpush1.msra.mxu0 0.0
    %1747 = vmatprep.subr.mxu0 0.0
    %1748 = vmatpush1.msra.mxu0 0.0
    %1749 = vmatprep.subr.mxu0 0.0
    %1750 = vmatpush1.msra.mxu0 0.0
    %1751 = vmatprep.subr.mxu0 0.0
    %1752 = vmatpush1.msra.mxu0 0.0
    %1753 = vmatprep.subr.mxu0 0.0
    %1754 = vmatpush1.msra.mxu0 0.0
    %1755 = vmatprep.subr.mxu0 0.0
    %1756 = vmatpush1.msra.mxu0 0.0
    %1757 = vmatprep.subr.mxu0 0.0
    %1758 = vmatpush1.msra.mxu0 0.0
    %1759 = vmatprep.mubr.f32.mxu0 0.0
    %1760 = vmatmul.mubr.f32.gmra.mrb[0].mxu0 %v1396
    %v1761 = vpop.f32.mrb[0].mxu0
    %v1762 = vadd.f32 0.0, %v1761
    %v1763 = vpop.f32.mrb[0].mxu0
    %1764 = vdwg.mxu0
    %1765 = vmatprep.subr.mxu0 0.0
    %1766 = vmatpush1.msra.mxu0 %v823
    %1767 = vmatprep.subr.mxu0 0.0
    %1768 = vmatpush1.msra.mxu0 %v824
    %1769 = vmatprep.subr.mxu0 0.0
    %1770 = vmatpush1.msra.mxu0 %v825
    %1771 = vmatprep.subr.mxu0 0.0
    %1772 = vmatpush1.msra.mxu0 %v826
    %1773 = vmatprep.subr.mxu0 0.0
    %1774 = vmatpush1.msra.mxu0 %v827
    %1775 = vmatprep.subr.mxu0 0.0
    %1776 = vmatpush1.msra.mxu0 %v828
    %1777 = vmatprep.subr.mxu0 0.0
    %1778 = vmatpush1.msra.mxu0 %v829
    %1779 = vmatprep.subr.mxu0 0.0
    %1780 = vmatpush1.msra.mxu0 %v830
    %1781 = vmatprep.subr.mxu0 0.0
    %1782 = vmatpush1.msra.mxu0 0.0
    %1783 = vmatprep.subr.mxu0 0.0
    %1784 = vmatpush1.msra.mxu0 0.0
    %1785 = vmatprep.subr.mxu0 0.0
    %1786 = vmatpush1.msra.mxu0 0.0
    %1787 = vmatprep.subr.mxu0 0.0
    %1788 = vmatpush1.msra.mxu0 0.0
    %1789 = vmatprep.subr.mxu0 0.0
    %1790 = vmatpush1.msra.mxu0 0.0
    %1791 = vmatprep.subr.mxu0 0.0
    %1792 = vmatpush1.msra.mxu0 0.0
    %1793 = vmatprep.subr.mxu0 0.0
    %1794 = vmatpush1.msra.mxu0 0.0
    %1795 = vmatprep.subr.mxu0 0.0
    %1796 = vmatpush1.msra.mxu0 0.0
    %1797 = vmatprep.subr.mxu0 0.0
    %1798 = vmatpush1.msra.mxu0 0.0
    %1799 = vmatprep.subr.mxu0 0.0
    %1800 = vmatpush1.msra.mxu0 0.0
    %1801 = vmatprep.subr.mxu0 0.0
    %1802 = vmatpush1.msra.mxu0 0.0
    %1803 = vmatprep.subr.mxu0 0.0
    %1804 = vmatpush1.msra.mxu0 0.0
    %1805 = vmatprep.subr.mxu0 0.0
    %1806 = vmatpush1.msra.mxu0 0.0
    %1807 = vmatprep.subr.mxu0 0.0
    %1808 = vmatpush1.msra.mxu0 0.0
    %1809 = vmatprep.subr.mxu0 0.0
    %1810 = vmatpush1.msra.mxu0 0.0
    %1811 = vmatprep.subr.mxu0 0.0
    %1812 = vmatpush1.msra.mxu0 0.0
    %1813 = vmatprep.subr.mxu0 0.0
    %1814 = vmatpush1.msra.mxu0 0.0
    %1815 = vmatprep.subr.mxu0 0.0
    %1816 = vmatpush1.msra.mxu0 0.0
    %1817 = vmatprep.subr.mxu0 0.0
    %1818 = vmatpush1.msra.mxu0 0.0
    %1819 = vmatprep.subr.mxu0 0.0
    %1820 = vmatpush1.msra.mxu0 0.0
    %1821 = vmatprep.subr.mxu0 0.0
    %1822 = vmatpush1.msra.mxu0 0.0
    %1823 = vmatprep.subr.mxu0 0.0
    %1824 = vmatpush1.msra.mxu0 0.0
    %1825 = vmatprep.subr.mxu0 0.0
    %1826 = vmatpush1.msra.mxu0 0.0
    %1827 = vmatprep.subr.mxu0 0.0
    %1828 = vmatpush1.msra.mxu0 0.0
    %1829 = vmatprep.mubr.f32.mxu0 0.0
    %1830 = vmatmul.mubr.f32.gmra.mrb[0].mxu0 %v1469
    %v1831 = vpop.f32.mrb[0].mxu0
    %v1832 = vadd.f32 %v1762, %v1831
    %v1833 = vpop.f32.mrb[0].mxu0
    %1834 = vdwg.mxu0
    %v1835 = vadd.f32 %v1832, %v986
    %v1836 = vtanh.pop %v1835
    %1837 = vmatprep.subr.mxu0 0.0
    %1838 = vmatpush1.msra.mxu0 %v1000
    %1839 = vmatprep.subr.mxu0 0.0
    %1840 = vmatpush1.msra.mxu0 %v1001
    %1841 = vmatprep.subr.mxu0 0.0
    %1842 = vmatpush1.msra.mxu0 %v1002
    %1843 = vmatprep.subr.mxu0 0.0
    %1844 = vmatpush1.msra.mxu0 %v1003
    %1845 = vmatprep.subr.mxu0 0.0
    %1846 = vmatpush1.msra.mxu0 %v1004
    %1847 = vmatprep.subr.mxu0 0.0
    %1848 = vmatpush1.msra.mxu0 %v1005
    %1849 = vmatprep.subr.mxu0 0.0
    %1850 = vmatpush1.msra.mxu0 %v1006
    %1851 = vmatprep.subr.mxu0 0.0
    %1852 = vmatpush1.msra.mxu0 %v1007
    %1853 = vmatprep.subr.mxu0 0.0
    %1854 = vmatpush1.msra.mxu0 0.0
    %1855 = vmatprep.subr.mxu0 0.0
    %1856 = vmatpush1.msra.mxu0 0.0
    %1857 = vmatprep.subr.mxu0 0.0
    %1858 = vmatpush1.msra.mxu0 0.0
    %1859 = vmatprep.subr.mxu0 0.0
    %1860 = vmatpush1.msra.mxu0 0.0
    %1861 = vmatprep.subr.mxu0 0.0
    %1862 = vmatpush1.msra.mxu0 0.0
    %1863 = vmatprep.subr.mxu0 0.0
    %1864 = vmatpush1.msra.mxu0 0.0
    %1865 = vmatprep.subr.mxu0 0.0
    %1866 = vmatpush1.msra.mxu0 0.0
    %1867 = vmatprep.subr.mxu0 0.0
    %1868 = vmatpush1.msra.mxu0 0.0
    %1869 = vmatprep.subr.mxu0 0.0
    %1870 = vmatpush1.msra.mxu0 0.0
    %1871 = vmatprep.subr.mxu0 0.0
    %1872 = vmatpush1.msra.mxu0 0.0
    %1873 = vmatprep.subr.mxu0 0.0
    %1874 = vmatpush1.msra.mxu0 0.0
    %1875 = vmatprep.subr.mxu0 0.0
    %1876 = vmatpush1.msra.mxu0 0.0
    %1877 = vmatprep.subr.mxu0 0.0
    %1878 = vmatpush1.msra.mxu0 0.0
    %1879 = vmatprep.subr.mxu0 0.0
    %1880 = vmatpush1.msra.mxu0 0.0
    %1881 = vmatprep.subr.mxu0 0.0
    %1882 = vmatpush1.msra.mxu0 0.0
    %1883 = vmatprep.subr.mxu0 0.0
    %1884 = vmatpush1.msra.mxu0 0.0
    %1885 = vmatprep.subr.mxu0 0.0
    %1886 = vmatpush1.msra.mxu0 0.0
    %1887 = vmatprep.subr.mxu0 0.0
    %1888 = vmatpush1.msra.mxu0 0.0
    %1889 = vmatprep.subr.mxu0 0.0
    %1890 = vmatpush1.msra.mxu0 0.0
    %1891 = vmatprep.subr.mxu0 0.0
    %1892 = vmatpush1.msra.mxu0 0.0
    %1893 = vmatprep.subr.mxu0 0.0
    %1894 = vmatpush1.msra.mxu0 0.0
    %1895 = vmatprep.subr.mxu0 0.0
    %1896 = vmatpush1.msra.mxu0 0.0
    %1897 = vmatprep.subr.mxu0 0.0
    %1898 = vmatpush1.msra.mxu0 0.0
    %1899 = vmatprep.subr.mxu0 0.0
    %1900 = vmatpush1.msra.mxu0 0.0
    %1901 = vmatprep.mubr.f32.mxu0 0.0
    %1902 = vmatmul.mubr.f32.gmra.mrb[0].mxu0 %v1396
    %v1903 = vpop.f32.mrb[0].mxu0
    %v1904 = vadd.f32 0.0, %v1903
    %v1905 = vpop.f32.mrb[0].mxu0
    %1906 = vdwg.mxu0
    %1907 = vmatprep.subr.mxu0 0.0
    %1908 = vmatpush1.msra.mxu0 %v991
    %1909 = vmatprep.subr.mxu0 0.0
    %1910 = vmatpush1.msra.mxu0 %v992
    %1911 = vmatprep.subr.mxu0 0.0
    %1912 = vmatpush1.msra.mxu0 %v993
    %1913 = vmatprep.subr.mxu0 0.0
    %1914 = vmatpush1.msra.mxu0 %v994
    %1915 = vmatprep.subr.mxu0 0.0
    %1916 = vmatpush1.msra.mxu0 %v995
    %1917 = vmatprep.subr.mxu0 0.0
    %1918 = vmatpush1.msra.mxu0 %v996
    %1919 = vmatprep.subr.mxu0 0.0
    %1920 = vmatpush1.msra.mxu0 %v997
    %1921 = vmatprep.subr.mxu0 0.0
    %1922 = vmatpush1.msra.mxu0 %v998
    %1923 = vmatprep.subr.mxu0 0.0
    %1924 = vmatpush1.msra.mxu0 0.0
    %1925 = vmatprep.subr.mxu0 0.0
    %1926 = vmatpush1.msra.mxu0 0.0
    %1927 = vmatprep.subr.mxu0 0.0
    %1928 = vmatpush1.msra.mxu0 0.0
    %1929 = vmatprep.subr.mxu0 0.0
    %1930 = vmatpush1.msra.mxu0 0.0
    %1931 = vmatprep.subr.mxu0 0.0
    %1932 = vmatpush1.msra.mxu0 0.0
    %1933 = vmatprep.subr.mxu0 0.0
    %1934 = vmatpush1.msra.mxu0 0.0
    %1935 = vmatprep.subr.mxu0 0.0
    %1936 = vmatpush1.msra.mxu0 0.0
    %1937 = vmatprep.subr.mxu0 0.0
    %1938 = vmatpush1.msra.mxu0 0.0
    %1939 = vmatprep.subr.mxu0 0.0
    %1940 = vmatpush1.msra.mxu0 0.0
    %1941 = vmatprep.subr.mxu0 0.0
    %1942 = vmatpush1.msra.mxu0 0.0
    %1943 = vmatprep.subr.mxu0 0.0
    %1944 = vmatpush1.msra.mxu0 0.0
    %1945 = vmatprep.subr.mxu0 0.0
    %1946 = vmatpush1.msra.mxu0 0.0
    %1947 = vmatprep.subr.mxu0 0.0
    %1948 = vmatpush1.msra.mxu0 0.0
    %1949 = vmatprep.subr.mxu0 0.0
    %1950 = vmatpush1.msra.mxu0 0.0
    %1951 = vmatprep.subr.mxu0 0.0
    %1952 = vmatpush1.msra.mxu0 0.0
    %1953 = vmatprep.subr.mxu0 0.0
    %1954 = vmatpush1.msra.mxu0 0.0
    %1955 = vmatprep.subr.mxu0 0.0
    %1956 = vmatpush1.msra.mxu0 0.0
    %1957 = vmatprep.subr.mxu0 0.0
    %1958 = vmatpush1.msra.mxu0 0.0
    %1959 = vmatprep.subr.mxu0 0.0
    %1960 = vmatpush1.msra.mxu0 0.0
    %1961 = vmatprep.subr.mxu0 0.0
    %1962 = vmatpush1.msra.mxu0 0.0
    %1963 = vmatprep.subr.mxu0 0.0
    %1964 = vmatpush1.msra.mxu0 0.0
    %1965 = vmatprep.subr.mxu0 0.0
    %1966 = vmatpush1.msra.mxu0 0.0
    %1967 = vmatprep.subr.mxu0 0.0
    %1968 = vmatpush1.msra.mxu0 0.0
    %1969 = vmatprep.subr.mxu0 0.0
    %1970 = vmatpush1.msra.mxu0 0.0
    %1971 = vmatprep.mubr.f32.mxu0 0.0
    %1972 = vmatmul.mubr.f32.gmra.mrb[0].mxu0 %v1469
    %v1973 = vpop.f32.mrb[0].mxu0
    %v1974 = vadd.f32 %v1904, %v1973
    %v1975 = vpop.f32.mrb[0].mxu0
    %1976 = vdwg.mxu0
    %v1977 = vadd.f32 %v1974, %v1154
    %v1978 = vxor.u32 %v1977, 2147483648
    %v1979 = vmul.f32 %v1978, 1.442695
    %v1980 = vpow.pop %v1979
    %v1981 = vadd.f32 %v1980, 1.0
    %v1982 = vrcp.pop %v1981
    %v1983 = vmul.f32 1.0, %v1982
    %v1984 = vmul.f32 %v1694, %v1165
    %v1985 = vmul.f32 %v1547, %v1836
    %v1986 = vadd.f32 %v1984, %v1985
    %v1987 = vtanh.pop %v1986
    %v1988 = vmul.f32 %v1983, %v1987
    %s1989 = scalar_lea.vmem [#allocation2], 4
    %v1990 = vld [vmem:[%s1989] sm:$0x3]
    %v1992 = vsel %vm195, %v1990, 0
    %1994 = vmatprep.subr.mxu0 0.0
    %1995 = vmatpush1.msra.mxu0 %v186
    %1996 = vmatprep.subr.mxu0 0.0
    %1997 = vmatpush1.msra.mxu0 %v187
    %1998 = vmatprep.subr.mxu0 0.0
    %1999 = vmatpush1.msra.mxu0 0.0
    %2000 = vmatprep.subr.mxu0 0.0
    %2001 = vmatpush1.msra.mxu0 0.0
    %2002 = vmatprep.subr.mxu0 0.0
    %2003 = vmatpush1.msra.mxu0 0.0
    %2004 = vmatprep.subr.mxu0 0.0
    %2005 = vmatpush1.msra.mxu0 0.0
    %2006 = vmatprep.subr.mxu0 0.0
    %2007 = vmatpush1.msra.mxu0 0.0
    %2008 = vmatprep.subr.mxu0 0.0
    %2009 = vmatpush1.msra.mxu0 0.0
    %2010 = vmatprep.subr.mxu0 0.0
    %2011 = vmatpush1.msra.mxu0 0.0
    %2012 = vmatprep.subr.mxu0 0.0
    %2013 = vmatpush1.msra.mxu0 0.0
    %2014 = vmatprep.subr.mxu0 0.0
    %2015 = vmatpush1.msra.mxu0 0.0
    %2016 = vmatprep.subr.mxu0 0.0
    %2017 = vmatpush1.msra.mxu0 0.0
    %2018 = vmatprep.subr.mxu0 0.0
    %2019 = vmatpush1.msra.mxu0 0.0
    %2020 = vmatprep.subr.mxu0 0.0
    %2021 = vmatpush1.msra.mxu0 0.0
    %2022 = vmatprep.subr.mxu0 0.0
    %2023 = vmatpush1.msra.mxu0 0.0
    %2024 = vmatprep.subr.mxu0 0.0
    %2025 = vmatpush1.msra.mxu0 0.0
    %2026 = vmatprep.subr.mxu0 0.0
    %2027 = vmatpush1.msra.mxu0 0.0
    %2028 = vmatprep.subr.mxu0 0.0
    %2029 = vmatpush1.msra.mxu0 0.0
    %2030 = vmatprep.subr.mxu0 0.0
    %2031 = vmatpush1.msra.mxu0 0.0
    %2032 = vmatprep.subr.mxu0 0.0
    %2033 = vmatpush1.msra.mxu0 0.0
    %2034 = vmatprep.subr.mxu0 0.0
    %2035 = vmatpush1.msra.mxu0 0.0
    %2036 = vmatprep.subr.mxu0 0.0
    %2037 = vmatpush1.msra.mxu0 0.0
    %2038 = vmatprep.subr.mxu0 0.0
    %2039 = vmatpush1.msra.mxu0 0.0
    %2040 = vmatprep.subr.mxu0 0.0
    %2041 = vmatpush1.msra.mxu0 0.0
    %2042 = vmatprep.subr.mxu0 0.0
    %2043 = vmatpush1.msra.mxu0 0.0
    %2044 = vmatprep.subr.mxu0 0.0
    %2045 = vmatpush1.msra.mxu0 0.0
    %2046 = vmatprep.subr.mxu0 0.0
    %2047 = vmatpush1.msra.mxu0 0.0
    %2048 = vmatprep.subr.mxu0 0.0
    %2049 = vmatpush1.msra.mxu0 0.0
    %2050 = vmatprep.subr.mxu0 0.0
    %2051 = vmatpush1.msra.mxu0 0.0
    %2052 = vmatprep.subr.mxu0 0.0
    %2053 = vmatpush1.msra.mxu0 0.0
    %2054 = vmatprep.subr.mxu0 0.0
    %2055 = vmatpush1.msra.mxu0 0.0
    %2056 = vmatprep.subr.mxu0 0.0
    %2057 = vmatpush1.msra.mxu0 0.0
    %2058 = vmatprep.mubr.f32.mxu0 0.0
    %2059 = vmatmul.mubr.f32.gmra.mrb[0].mxu0 %v1992
    %v2060 = vpop.f32.mrb[0].mxu0
    %v2061 = vadd.f32 %v193, %v2060
    %v2062 = vpop.f32.mrb[0].mxu0
    %2063 = vdwg.mxu0
    %v2064 = vmul.f32 %v2061, %v274
    %v2065 = vadd.f32 %v2064, %v282
    %v2066 = vmax.f32 %v2065, 0.0
    %v2068 = vsel %vm297, %v2066, 0
    %2070 = vmatprep.subr.mxu0 0.0
    %2071 = vmatpush1.msra.mxu0 %v286
    %2072 = vmatprep.subr.mxu0 0.0
    %2073 = vmatpush1.msra.mxu0 %v287
    %2074 = vmatprep.subr.mxu0 0.0
    %2075 = vmatpush1.msra.mxu0 %v288
    %2076 = vmatprep.subr.mxu0 0.0
    %2077 = vmatpush1.msra.mxu0 %v289
    %2078 = vmatprep.subr.mxu0 0.0
    %2079 = vmatpush1.msra.mxu0 0.0
    %2080 = vmatprep.subr.mxu0 0.0
    %2081 = vmatpush1.msra.mxu0 0.0
    %2082 = vmatprep.subr.mxu0 0.0
    %2083 = vmatpush1.msra.mxu0 0.0
    %2084 = vmatprep.subr.mxu0 0.0
    %2085 = vmatpush1.msra.mxu0 0.0
    %2086 = vmatprep.subr.mxu0 0.0
    %2087 = vmatpush1.msra.mxu0 0.0
    %2088 = vmatprep.subr.mxu0 0.0
    %2089 = vmatpush1.msra.mxu0 0.0
    %2090 = vmatprep.subr.mxu0 0.0
    %2091 = vmatpush1.msra.mxu0 0.0
    %2092 = vmatprep.subr.mxu0 0.0
    %2093 = vmatpush1.msra.mxu0 0.0
    %2094 = vmatprep.subr.mxu0 0.0
    %2095 = vmatpush1.msra.mxu0 0.0
    %2096 = vmatprep.subr.mxu0 0.0
    %2097 = vmatpush1.msra.mxu0 0.0
    %2098 = vmatprep.subr.mxu0 0.0
    %2099 = vmatpush1.msra.mxu0 0.0
    %2100 = vmatprep.subr.mxu0 0.0
    %2101 = vmatpush1.msra.mxu0 0.0
    %2102 = vmatprep.subr.mxu0 0.0
    %2103 = vmatpush1.msra.mxu0 0.0
    %2104 = vmatprep.subr.mxu0 0.0
    %2105 = vmatpush1.msra.mxu0 0.0
    %2106 = vmatprep.subr.mxu0 0.0
    %2107 = vmatpush1.msra.mxu0 0.0
    %2108 = vmatprep.subr.mxu0 0.0
    %2109 = vmatpush1.msra.mxu0 0.0
    %2110 = vmatprep.subr.mxu0 0.0
    %2111 = vmatpush1.msra.mxu0 0.0
    %2112 = vmatprep.subr.mxu0 0.0
    %2113 = vmatpush1.msra.mxu0 0.0
    %2114 = vmatprep.subr.mxu0 0.0
    %2115 = vmatpush1.msra.mxu0 0.0
    %2116 = vmatprep.subr.mxu0 0.0
    %2117 = vmatpush1.msra.mxu0 0.0
    %2118 = vmatprep.subr.mxu0 0.0
    %2119 = vmatpush1.msra.mxu0 0.0
    %2120 = vmatprep.subr.mxu0 0.0
    %2121 = vmatpush1.msra.mxu0 0.0
    %2122 = vmatprep.subr.mxu0 0.0
    %2123 = vmatpush1.msra.mxu0 0.0
    %2124 = vmatprep.subr.mxu0 0.0
    %2125 = vmatpush1.msra.mxu0 0.0
    %2126 = vmatprep.subr.mxu0 0.0
    %2127 = vmatpush1.msra.mxu0 0.0
    %2128 = vmatprep.subr.mxu0 0.0
    %2129 = vmatpush1.msra.mxu0 0.0
    %2130 = vmatprep.subr.mxu0 0.0
    %2131 = vmatpush1.msra.mxu0 0.0
    %2132 = vmatprep.subr.mxu0 0.0
    %2133 = vmatpush1.msra.mxu0 0.0
    %2134 = vmatprep.mubr.f32.mxu0 0.0
    %2135 = vmatmul.mubr.f32.gmra.mrb[0].mxu0 %v2068
    %v2136 = vpop.f32.mrb[0].mxu0
    %v2137 = vadd.f32 %v295, %v2136
    %v2138 = vpop.f32.mrb[0].mxu0
    %2139 = vdwg.mxu0
    %v2140 = vmul.f32 %v2137, %v376
    %v2141 = vadd.f32 %v2140, %v384
    %v2142 = vmax.f32 %v2141, 0.0
    %v2144 = vsel %vm297, %v2142, 0
    %2146 = vmatprep.subr.mxu0 0.0
    %2147 = vmatpush1.msra.mxu0 %v388
    %2148 = vmatprep.subr.mxu0 0.0
    %2149 = vmatpush1.msra.mxu0 %v389
    %2150 = vmatprep.subr.mxu0 0.0
    %2151 = vmatpush1.msra.mxu0 %v390
    %2152 = vmatprep.subr.mxu0 0.0
    %2153 = vmatpush1.msra.mxu0 %v391
    %2154 = vmatprep.subr.mxu0 0.0
    %2155 = vmatpush1.msra.mxu0 0.0
    %2156 = vmatprep.subr.mxu0 0.0
    %2157 = vmatpush1.msra.mxu0 0.0
    %2158 = vmatprep.subr.mxu0 0.0
    %2159 = vmatpush1.msra.mxu0 0.0
    %2160 = vmatprep.subr.mxu0 0.0
    %2161 = vmatpush1.msra.mxu0 0.0
    %2162 = vmatprep.subr.mxu0 0.0
    %2163 = vmatpush1.msra.mxu0 0.0
    %2164 = vmatprep.subr.mxu0 0.0
    %2165 = vmatpush1.msra.mxu0 0.0
    %2166 = vmatprep.subr.mxu0 0.0
    %2167 = vmatpush1.msra.mxu0 0.0
    %2168 = vmatprep.subr.mxu0 0.0
    %2169 = vmatpush1.msra.mxu0 0.0
    %2170 = vmatprep.subr.mxu0 0.0
    %2171 = vmatpush1.msra.mxu0 0.0
    %2172 = vmatprep.subr.mxu0 0.0
    %2173 = vmatpush1.msra.mxu0 0.0
    %2174 = vmatprep.subr.mxu0 0.0
    %2175 = vmatpush1.msra.mxu0 0.0
    %2176 = vmatprep.subr.mxu0 0.0
    %2177 = vmatpush1.msra.mxu0 0.0
    %2178 = vmatprep.subr.mxu0 0.0
    %2179 = vmatpush1.msra.mxu0 0.0
    %2180 = vmatprep.subr.mxu0 0.0
    %2181 = vmatpush1.msra.mxu0 0.0
    %2182 = vmatprep.subr.mxu0 0.0
    %2183 = vmatpush1.msra.mxu0 0.0
    %2184 = vmatprep.subr.mxu0 0.0
    %2185 = vmatpush1.msra.mxu0 0.0
    %2186 = vmatprep.subr.mxu0 0.0
    %2187 = vmatpush1.msra.mxu0 0.0
    %2188 = vmatprep.subr.mxu0 0.0
    %2189 = vmatpush1.msra.mxu0 0.0
    %2190 = vmatprep.subr.mxu0 0.0
    %2191 = vmatpush1.msra.mxu0 0.0
    %2192 = vmatprep.subr.mxu0 0.0
    %2193 = vmatpush1.msra.mxu0 0.0
    %2194 = vmatprep.subr.mxu0 0.0
    %2195 = vmatpush1.msra.mxu0 0.0
    %2196 = vmatprep.subr.mxu0 0.0
    %2197 = vmatpush1.msra.mxu0 0.0
    %2198 = vmatprep.subr.mxu0 0.0
    %2199 = vmatpush1.msra.mxu0 0.0
    %2200 = vmatprep.subr.mxu0 0.0
    %2201 = vmatpush1.msra.mxu0 0.0
    %2202 = vmatprep.subr.mxu0 0.0
    %2203 = vmatpush1.msra.mxu0 0.0
    %2204 = vmatprep.subr.mxu0 0.0
    %2205 = vmatpush1.msra.mxu0 0.0
    %2206 = vmatprep.subr.mxu0 0.0
    %2207 = vmatpush1.msra.mxu0 0.0
    %2208 = vmatprep.subr.mxu0 0.0
    %2209 = vmatpush1.msra.mxu0 0.0
    %2210 = vmatprep.mubr.f32.mxu0 0.0
    %2211 = vmatmul.mubr.f32.gmra.mrb[0].mxu0 %v2144
    %v2212 = vpop.f32.mrb[0].mxu0
    %v2213 = vadd.f32 %v397, %v2212
    %v2214 = vpop.f32.mrb[0].mxu0
    %2215 = vdwg.mxu0
    %v2217 = vsel %vm488, %v1988, 0
    %2219 = vmatprep.subr.mxu0 0.0
    %2220 = vmatpush1.msra.mxu0 %v480
    %2221 = vmatprep.subr.mxu0 0.0
    %2222 = vmatpush1.msra.mxu0 %v481
    %2223 = vmatprep.subr.mxu0 0.0
    %2224 = vmatpush1.msra.mxu0 %v482
    %2225 = vmatprep.subr.mxu0 0.0
    %2226 = vmatpush1.msra.mxu0 %v483
    %2227 = vmatprep.subr.mxu0 0.0
    %2228 = vmatpush1.msra.mxu0 %v484
    %2229 = vmatprep.subr.mxu0 0.0
    %2230 = vmatpush1.msra.mxu0 %v485
    %2231 = vmatprep.subr.mxu0 0.0
    %2232 = vmatpush1.msra.mxu0 %v486
    %2233 = vmatprep.subr.mxu0 0.0
    %2234 = vmatpush1.msra.mxu0 %v487
    %2235 = vmatprep.subr.mxu0 0.0
    %2236 = vmatpush1.msra.mxu0 0.0
    %2237 = vmatprep.subr.mxu0 0.0
    %2238 = vmatpush1.msra.mxu0 0.0
    %2239 = vmatprep.subr.mxu0 0.0
    %2240 = vmatpush1.msra.mxu0 0.0
    %2241 = vmatprep.subr.mxu0 0.0
    %2242 = vmatpush1.msra.mxu0 0.0
    %2243 = vmatprep.subr.mxu0 0.0
    %2244 = vmatpush1.msra.mxu0 0.0
    %2245 = vmatprep.subr.mxu0 0.0
    %2246 = vmatpush1.msra.mxu0 0.0
    %2247 = vmatprep.subr.mxu0 0.0
    %2248 = vmatpush1.msra.mxu0 0.0
    %2249 = vmatprep.subr.mxu0 0.0
    %2250 = vmatpush1.msra.mxu0 0.0
    %2251 = vmatprep.subr.mxu0 0.0
    %2252 = vmatpush1.msra.mxu0 0.0
    %2253 = vmatprep.subr.mxu0 0.0
    %2254 = vmatpush1.msra.mxu0 0.0
    %2255 = vmatprep.subr.mxu0 0.0
    %2256 = vmatpush1.msra.mxu0 0.0
    %2257 = vmatprep.subr.mxu0 0.0
    %2258 = vmatpush1.msra.mxu0 0.0
    %2259 = vmatprep.subr.mxu0 0.0
    %2260 = vmatpush1.msra.mxu0 0.0
    %2261 = vmatprep.subr.mxu0 0.0
    %2262 = vmatpush1.msra.mxu0 0.0
    %2263 = vmatprep.subr.mxu0 0.0
    %2264 = vmatpush1.msra.mxu0 0.0
    %2265 = vmatprep.subr.mxu0 0.0
    %2266 = vmatpush1.msra.mxu0 0.0
    %2267 = vmatprep.subr.mxu0 0.0
    %2268 = vmatpush1.msra.mxu0 0.0
    %2269 = vmatprep.subr.mxu0 0.0
    %2270 = vmatpush1.msra.mxu0 0.0
    %2271 = vmatprep.subr.mxu0 0.0
    %2272 = vmatpush1.msra.mxu0 0.0
    %2273 = vmatprep.subr.mxu0 0.0
    %2274 = vmatpush1.msra.mxu0 0.0
    %2275 = vmatprep.subr.mxu0 0.0
    %2276 = vmatpush1.msra.mxu0 0.0
    %2277 = vmatprep.subr.mxu0 0.0
    %2278 = vmatpush1.msra.mxu0 0.0
    %2279 = vmatprep.subr.mxu0 0.0
    %2280 = vmatpush1.msra.mxu0 0.0
    %2281 = vmatprep.subr.mxu0 0.0
    %2282 = vmatpush1.msra.mxu0 0.0
    %2283 = vmatprep.mubr.f32.mxu0 0.0
    %2284 = vmatmul.mubr.f32.gmra.mrb[0].mxu0 %v2217
    %v2285 = vpop.f32.mrb[0].mxu0
    %v2286 = vadd.f32 0.0, %v2285
    %v2287 = vpop.f32.mrb[0].mxu0
    %2288 = vdwg.mxu0
    %v2290 = vsel %vm488, %v2213, 0
    %2292 = vmatprep.subr.mxu0 0.0
    %2293 = vmatpush1.msra.mxu0 %v472
    %2294 = vmatprep.subr.mxu0 0.0
    %2295 = vmatpush1.msra.mxu0 %v473
    %2296 = vmatprep.subr.mxu0 0.0
    %2297 = vmatpush1.msra.mxu0 %v474
    %2298 = vmatprep.subr.mxu0 0.0
    %2299 = vmatpush1.msra.mxu0 %v475
    %2300 = vmatprep.subr.mxu0 0.0
    %2301 = vmatpush1.msra.mxu0 %v476
    %2302 = vmatprep.subr.mxu0 0.0
    %2303 = vmatpush1.msra.mxu0 %v477
    %2304 = vmatprep.subr.mxu0 0.0
    %2305 = vmatpush1.msra.mxu0 %v478
    %2306 = vmatprep.subr.mxu0 0.0
    %2307 = vmatpush1.msra.mxu0 %v479
    %2308 = vmatprep.subr.mxu0 0.0
    %2309 = vmatpush1.msra.mxu0 0.0
    %2310 = vmatprep.subr.mxu0 0.0
    %2311 = vmatpush1.msra.mxu0 0.0
    %2312 = vmatprep.subr.mxu0 0.0
    %2313 = vmatpush1.msra.mxu0 0.0
    %2314 = vmatprep.subr.mxu0 0.0
    %2315 = vmatpush1.msra.mxu0 0.0
    %2316 = vmatprep.subr.mxu0 0.0
    %2317 = vmatpush1.msra.mxu0 0.0
    %2318 = vmatprep.subr.mxu0 0.0
    %2319 = vmatpush1.msra.mxu0 0.0
    %2320 = vmatprep.subr.mxu0 0.0
    %2321 = vmatpush1.msra.mxu0 0.0
    %2322 = vmatprep.subr.mxu0 0.0
    %2323 = vmatpush1.msra.mxu0 0.0
    %2324 = vmatprep.subr.mxu0 0.0
    %2325 = vmatpush1.msra.mxu0 0.0
    %2326 = vmatprep.subr.mxu0 0.0
    %2327 = vmatpush1.msra.mxu0 0.0
    %2328 = vmatprep.subr.mxu0 0.0
    %2329 = vmatpush1.msra.mxu0 0.0
    %2330 = vmatprep.subr.mxu0 0.0
    %2331 = vmatpush1.msra.mxu0 0.0
    %2332 = vmatprep.subr.mxu0 0.0
    %2333 = vmatpush1.msra.mxu0 0.0
    %2334 = vmatprep.subr.mxu0 0.0
    %2335 = vmatpush1.msra.mxu0 0.0
    %2336 = vmatprep.subr.mxu0 0.0
    %2337 = vmatpush1.msra.mxu0 0.0
    %2338 = vmatprep.subr.mxu0 0.0
    %2339 = vmatpush1.msra.mxu0 0.0
    %2340 = vmatprep.subr.mxu0 0.0
    %2341 = vmatpush1.msra.mxu0 0.0
    %2342 = vmatprep.subr.mxu0 0.0
    %2343 = vmatpush1.msra.mxu0 0.0
    %2344 = vmatprep.subr.mxu0 0.0
    %2345 = vmatpush1.msra.mxu0 0.0
    %2346 = vmatprep.subr.mxu0 0.0
    %2347 = vmatpush1.msra.mxu0 0.0
    %2348 = vmatprep.subr.mxu0 0.0
    %2349 = vmatpush1.msra.mxu0 0.0
    %2350 = vmatprep.subr.mxu0 0.0
    %2351 = vmatpush1.msra.mxu0 0.0
    %2352 = vmatprep.subr.mxu0 0.0
    %2353 = vmatpush1.msra.mxu0 0.0
    %2354 = vmatprep.subr.mxu0 0.0
    %2355 = vmatpush1.msra.mxu0 0.0
    %2356 = vmatprep.mubr.f32.mxu0 0.0
    %2357 = vmatmul.mubr.f32.gmra.mrb[0].mxu0 %v2290
    %v2358 = vpop.f32.mrb[0].mxu0
    %v2359 = vadd.f32 %v2286, %v2358
    %v2360 = vpop.f32.mrb[0].mxu0
    %2361 = vdwg.mxu0
    %v2362 = vadd.f32 %v2359, %v640
    %v2363 = vxor.u32 %v2362, 2147483648
    %v2364 = vmul.f32 %v2363, 1.442695
    %v2365 = vpow.pop %v2364
    %v2366 = vadd.f32 %v2365, 1.0
    %v2367 = vrcp.pop %v2366
    %v2368 = vmul.f32 1.0, %v2367
    %2369 = vmatprep.subr.mxu0 0.0
    %2370 = vmatpush1.msra.mxu0 %v659
    %2371 = vmatprep.subr.mxu0 0.0
    %2372 = vmatpush1.msra.mxu0 %v660
    %2373 = vmatprep.subr.mxu0 0.0
    %2374 = vmatpush1.msra.mxu0 %v661
    %2375 = vmatprep.subr.mxu0 0.0
    %2376 = vmatpush1.msra.mxu0 %v662
    %2377 = vmatprep.subr.mxu0 0.0
    %2378 = vmatpush1.msra.mxu0 %v663
    %2379 = vmatprep.subr.mxu0 0.0
    %2380 = vmatpush1.msra.mxu0 %v664
    %2381 = vmatprep.subr.mxu0 0.0
    %2382 = vmatpush1.msra.mxu0 %v665
    %2383 = vmatprep.subr.mxu0 0.0
    %2384 = vmatpush1.msra.mxu0 %v666
    %2385 = vmatprep.subr.mxu0 0.0
    %2386 = vmatpush1.msra.mxu0 0.0
    %2387 = vmatprep.subr.mxu0 0.0
    %2388 = vmatpush1.msra.mxu0 0.0
    %2389 = vmatprep.subr.mxu0 0.0
    %2390 = vmatpush1.msra.mxu0 0.0
    %2391 = vmatprep.subr.mxu0 0.0
    %2392 = vmatpush1.msra.mxu0 0.0
    %2393 = vmatprep.subr.mxu0 0.0
    %2394 = vmatpush1.msra.mxu0 0.0
    %2395 = vmatprep.subr.mxu0 0.0
    %2396 = vmatpush1.msra.mxu0 0.0
    %2397 = vmatprep.subr.mxu0 0.0
    %2398 = vmatpush1.msra.mxu0 0.0
    %2399 = vmatprep.subr.mxu0 0.0
    %2400 = vmatpush1.msra.mxu0 0.0
    %2401 = vmatprep.subr.mxu0 0.0
    %2402 = vmatpush1.msra.mxu0 0.0
    %2403 = vmatprep.subr.mxu0 0.0
    %2404 = vmatpush1.msra.mxu0 0.0
    %2405 = vmatprep.subr.mxu0 0.0
    %2406 = vmatpush1.msra.mxu0 0.0
    %2407 = vmatprep.subr.mxu0 0.0
    %2408 = vmatpush1.msra.mxu0 0.0
    %2409 = vmatprep.subr.mxu0 0.0
    %2410 = vmatpush1.msra.mxu0 0.0
    %2411 = vmatprep.subr.mxu0 0.0
    %2412 = vmatpush1.msra.mxu0 0.0
    %2413 = vmatprep.subr.mxu0 0.0
    %2414 = vmatpush1.msra.mxu0 0.0
    %2415 = vmatprep.subr.mxu0 0.0
    %2416 = vmatpush1.msra.mxu0 0.0
    %2417 = vmatprep.subr.mxu0 0.0
    %2418 = vmatpush1.msra.mxu0 0.0
    %2419 = vmatprep.subr.mxu0 0.0
    %2420 = vmatpush1.msra.mxu0 0.0
    %2421 = vmatprep.subr.mxu0 0.0
    %2422 = vmatpush1.msra.mxu0 0.0
    %2423 = vmatprep.subr.mxu0 0.0
    %2424 = vmatpush1.msra.mxu0 0.0
    %2425 = vmatprep.subr.mxu0 0.0
    %2426 = vmatpush1.msra.mxu0 0.0
    %2427 = vmatprep.subr.mxu0 0.0
    %2428 = vmatpush1.msra.mxu0 0.0
    %2429 = vmatprep.subr.mxu0 0.0
    %2430 = vmatpush1.msra.mxu0 0.0
    %2431 = vmatprep.subr.mxu0 0.0
    %2432 = vmatpush1.msra.mxu0 0.0
    %2433 = vmatprep.mubr.f32.mxu0 0.0
    %2434 = vmatmul.mubr.f32.gmra.mrb[0].mxu0 %v2217
    %v2435 = vpop.f32.mrb[0].mxu0
    %v2436 = vadd.f32 0.0, %v2435
    %v2437 = vpop.f32.mrb[0].mxu0
    %2438 = vdwg.mxu0
    %2439 = vmatprep.subr.mxu0 0.0
    %2440 = vmatpush1.msra.mxu0 %v650
    %2441 = vmatprep.subr.mxu0 0.0
    %2442 = vmatpush1.msra.mxu0 %v651
    %2443 = vmatprep.subr.mxu0 0.0
    %2444 = vmatpush1.msra.mxu0 %v652
    %2445 = vmatprep.subr.mxu0 0.0
    %2446 = vmatpush1.msra.mxu0 %v653
    %2447 = vmatprep.subr.mxu0 0.0
    %2448 = vmatpush1.msra.mxu0 %v654
    %2449 = vmatprep.subr.mxu0 0.0
    %2450 = vmatpush1.msra.mxu0 %v655
    %2451 = vmatprep.subr.mxu0 0.0
    %2452 = vmatpush1.msra.mxu0 %v656
    %2453 = vmatprep.subr.mxu0 0.0
    %2454 = vmatpush1.msra.mxu0 %v657
    %2455 = vmatprep.subr.mxu0 0.0
    %2456 = vmatpush1.msra.mxu0 0.0
    %2457 = vmatprep.subr.mxu0 0.0
    %2458 = vmatpush1.msra.mxu0 0.0
    %2459 = vmatprep.subr.mxu0 0.0
    %2460 = vmatpush1.msra.mxu0 0.0
    %2461 = vmatprep.subr.mxu0 0.0
    %2462 = vmatpush1.msra.mxu0 0.0
    %2463 = vmatprep.subr.mxu0 0.0
    %2464 = vmatpush1.msra.mxu0 0.0
    %2465 = vmatprep.subr.mxu0 0.0
    %2466 = vmatpush1.msra.mxu0 0.0
    %2467 = vmatprep.subr.mxu0 0.0
    %2468 = vmatpush1.msra.mxu0 0.0
    %2469 = vmatprep.subr.mxu0 0.0
    %2470 = vmatpush1.msra.mxu0 0.0
    %2471 = vmatprep.subr.mxu0 0.0
    %2472 = vmatpush1.msra.mxu0 0.0
    %2473 = vmatprep.subr.mxu0 0.0
    %2474 = vmatpush1.msra.mxu0 0.0
    %2475 = vmatprep.subr.mxu0 0.0
    %2476 = vmatpush1.msra.mxu0 0.0
    %2477 = vmatprep.subr.mxu0 0.0
    %2478 = vmatpush1.msra.mxu0 0.0
    %2479 = vmatprep.subr.mxu0 0.0
    %2480 = vmatpush1.msra.mxu0 0.0
    %2481 = vmatprep.subr.mxu0 0.0
    %2482 = vmatpush1.msra.mxu0 0.0
    %2483 = vmatprep.subr.mxu0 0.0
    %2484 = vmatpush1.msra.mxu0 0.0
    %2485 = vmatprep.subr.mxu0 0.0
    %2486 = vmatpush1.msra.mxu0 0.0
    %2487 = vmatprep.subr.mxu0 0.0
    %2488 = vmatpush1.msra.mxu0 0.0
    %2489 = vmatprep.subr.mxu0 0.0
    %2490 = vmatpush1.msra.mxu0 0.0
    %2491 = vmatprep.subr.mxu0 0.0
    %2492 = vmatpush1.msra.mxu0 0.0
    %2493 = vmatprep.subr.mxu0 0.0
    %2494 = vmatpush1.msra.mxu0 0.0
    %2495 = vmatprep.subr.mxu0 0.0
    %2496 = vmatpush1.msra.mxu0 0.0
    %2497 = vmatprep.subr.mxu0 0.0
    %2498 = vmatpush1.msra.mxu0 0.0
    %2499 = vmatprep.subr.mxu0 0.0
    %2500 = vmatpush1.msra.mxu0 0.0
    %2501 = vmatprep.subr.mxu0 0.0
    %2502 = vmatpush1.msra.mxu0 0.0
    %2503 = vmatprep.mubr.f32.mxu0 0.0
    %2504 = vmatmul.mubr.f32.gmra.mrb[0].mxu0 %v2290
    %v2505 = vpop.f32.mrb[0].mxu0
    %v2506 = vadd.f32 %v2436, %v2505
    %v2507 = vpop.f32.mrb[0].mxu0
    %2508 = vdwg.mxu0
    %v2509 = vadd.f32 %v2506, %v813
    %v2510 = vxor.u32 %v2509, 2147483648
    %v2511 = vmul.f32 %v2510, 1.442695
    %v2512 = vpow.pop %v2511
    %v2513 = vadd.f32 %v2512, 1.0
    %v2514 = vrcp.pop %v2513
    %v2515 = vmul.f32 1.0, %v2514
    %2516 = vmatprep.subr.mxu0 0.0
    %2517 = vmatpush1.msra.mxu0 %v832
    %2518 = vmatprep.subr.mxu0 0.0
    %2519 = vmatpush1.msra.mxu0 %v833
    %2520 = vmatprep.subr.mxu0 0.0
    %2521 = vmatpush1.msra.mxu0 %v834
    %2522 = vmatprep.subr.mxu0 0.0
    %2523 = vmatpush1.msra.mxu0 %v835
    %2524 = vmatprep.subr.mxu0 0.0
    %2525 = vmatpush1.msra.mxu0 %v836
    %2526 = vmatprep.subr.mxu0 0.0
    %2527 = vmatpush1.msra.mxu0 %v837
    %2528 = vmatprep.subr.mxu0 0.0
    %2529 = vmatpush1.msra.mxu0 %v838
    %2530 = vmatprep.subr.mxu0 0.0
    %2531 = vmatpush1.msra.mxu0 %v839
    %2532 = vmatprep.subr.mxu0 0.0
    %2533 = vmatpush1.msra.mxu0 0.0
    %2534 = vmatprep.subr.mxu0 0.0
    %2535 = vmatpush1.msra.mxu0 0.0
    %2536 = vmatprep.subr.mxu0 0.0
    %2537 = vmatpush1.msra.mxu0 0.0
    %2538 = vmatprep.subr.mxu0 0.0
    %2539 = vmatpush1.msra.mxu0 0.0
    %2540 = vmatprep.subr.mxu0 0.0
    %2541 = vmatpush1.msra.mxu0 0.0
    %2542 = vmatprep.subr.mxu0 0.0
    %2543 = vmatpush1.msra.mxu0 0.0
    %2544 = vmatprep.subr.mxu0 0.0
    %2545 = vmatpush1.msra.mxu0 0.0
    %2546 = vmatprep.subr.mxu0 0.0
    %2547 = vmatpush1.msra.mxu0 0.0
    %2548 = vmatprep.subr.mxu0 0.0
    %2549 = vmatpush1.msra.mxu0 0.0
    %2550 = vmatprep.subr.mxu0 0.0
    %2551 = vmatpush1.msra.mxu0 0.0
    %2552 = vmatprep.subr.mxu0 0.0
    %2553 = vmatpush1.msra.mxu0 0.0
    %2554 = vmatprep.subr.mxu0 0.0
    %2555 = vmatpush1.msra.mxu0 0.0
    %2556 = vmatprep.subr.mxu0 0.0
    %2557 = vmatpush1.msra.mxu0 0.0
    %2558 = vmatprep.subr.mxu0 0.0
    %2559 = vmatpush1.msra.mxu0 0.0
    %2560 = vmatprep.subr.mxu0 0.0
    %2561 = vmatpush1.msra.mxu0 0.0
    %2562 = vmatprep.subr.mxu0 0.0
    %2563 = vmatpush1.msra.mxu0 0.0
    %2564 = vmatprep.subr.mxu0 0.0
    %2565 = vmatpush1.msra.mxu0 0.0
    %2566 = vmatprep.subr.mxu0 0.0
    %2567 = vmatpush1.msra.mxu0 0.0
    %2568 = vmatprep.subr.mxu0 0.0
    %2569 = vmatpush1.msra.mxu0 0.0
    %2570 = vmatprep.subr.mxu0 0.0
    %2571 = vmatpush1.msra.mxu0 0.0
    %2572 = vmatprep.subr.mxu0 0.0
    %2573 = vmatpush1.msra.mxu0 0.0
    %2574 = vmatprep.subr.mxu0 0.0
    %2575 = vmatpush1.msra.mxu0 0.0
    %2576 = vmatprep.subr.mxu0 0.0
    %2577 = vmatpush1.msra.mxu0 0.0
    %2578 = vmatprep.subr.mxu0 0.0
    %2579 = vmatpush1.msra.mxu0 0.0
    %2580 = vmatprep.mubr.f32.mxu0 0.0
    %2581 = vmatmul.mubr.f32.gmra.mrb[0].mxu0 %v2217
    %v2582 = vpop.f32.mrb[0].mxu0
    %v2583 = vadd.f32 0.0, %v2582
    %v2584 = vpop.f32.mrb[0].mxu0
    %2585 = vdwg.mxu0
    %2586 = vmatprep.subr.mxu0 0.0
    %2587 = vmatpush1.msra.mxu0 %v823
    %2588 = vmatprep.subr.mxu0 0.0
    %2589 = vmatpush1.msra.mxu0 %v824
    %2590 = vmatprep.subr.mxu0 0.0
    %2591 = vmatpush1.msra.mxu0 %v825
    %2592 = vmatprep.subr.mxu0 0.0
    %2593 = vmatpush1.msra.mxu0 %v826
    %2594 = vmatprep.subr.mxu0 0.0
    %2595 = vmatpush1.msra.mxu0 %v827
    %2596 = vmatprep.subr.mxu0 0.0
    %2597 = vmatpush1.msra.mxu0 %v828
    %2598 = vmatprep.subr.mxu0 0.0
    %2599 = vmatpush1.msra.mxu0 %v829
    %2600 = vmatprep.subr.mxu0 0.0
    %2601 = vmatpush1.msra.mxu0 %v830
    %2602 = vmatprep.subr.mxu0 0.0
    %2603 = vmatpush1.msra.mxu0 0.0
    %2604 = vmatprep.subr.mxu0 0.0
    %2605 = vmatpush1.msra.mxu0 0.0
    %2606 = vmatprep.subr.mxu0 0.0
    %2607 = vmatpush1.msra.mxu0 0.0
    %2608 = vmatprep.subr.mxu0 0.0
    %2609 = vmatpush1.msra.mxu0 0.0
    %2610 = vmatprep.subr.mxu0 0.0
    %2611 = vmatpush1.msra.mxu0 0.0
    %2612 = vmatprep.subr.mxu0 0.0
    %2613 = vmatpush1.msra.mxu0 0.0
    %2614 = vmatprep.subr.mxu0 0.0
    %2615 = vmatpush1.msra.mxu0 0.0
    %2616 = vmatprep.subr.mxu0 0.0
    %2617 = vmatpush1.msra.mxu0 0.0
    %2618 = vmatprep.subr.mxu0 0.0
    %2619 = vmatpush1.msra.mxu0 0.0
    %2620 = vmatprep.subr.mxu0 0.0
    %2621 = vmatpush1.msra.mxu0 0.0
    %2622 = vmatprep.subr.mxu0 0.0
    %2623 = vmatpush1.msra.mxu0 0.0
    %2624 = vmatprep.subr.mxu0 0.0
    %2625 = vmatpush1.msra.mxu0 0.0
    %2626 = vmatprep.subr.mxu0 0.0
    %2627 = vmatpush1.msra.mxu0 0.0
    %2628 = vmatprep.subr.mxu0 0.0
    %2629 = vmatpush1.msra.mxu0 0.0
    %2630 = vmatprep.subr.mxu0 0.0
    %2631 = vmatpush1.msra.mxu0 0.0
    %2632 = vmatprep.subr.mxu0 0.0
    %2633 = vmatpush1.msra.mxu0 0.0
    %2634 = vmatprep.subr.mxu0 0.0
    %2635 = vmatpush1.msra.mxu0 0.0
    %2636 = vmatprep.subr.mxu0 0.0
    %2637 = vmatpush1.msra.mxu0 0.0
    %2638 = vmatprep.subr.mxu0 0.0
    %2639 = vmatpush1.msra.mxu0 0.0
    %2640 = vmatprep.subr.mxu0 0.0
    %2641 = vmatpush1.msra.mxu0 0.0
    %2642 = vmatprep.subr.mxu0 0.0
    %2643 = vmatpush1.msra.mxu0 0.0
    %2644 = vmatprep.subr.mxu0 0.0
    %2645 = vmatpush1.msra.mxu0 0.0
    %2646 = vmatprep.subr.mxu0 0.0
    %2647 = vmatpush1.msra.mxu0 0.0
    %2648 = vmatprep.subr.mxu0 0.0
    %2649 = vmatpush1.msra.mxu0 0.0
    %2650 = vmatprep.mubr.f32.mxu0 0.0
    %2651 = vmatmul.mubr.f32.gmra.mrb[0].mxu0 %v2290
    %v2652 = vpop.f32.mrb[0].mxu0
    %v2653 = vadd.f32 %v2583, %v2652
    %v2654 = vpop.f32.mrb[0].mxu0
    %2655 = vdwg.mxu0
    %v2656 = vadd.f32 %v2653, %v986
    %v2657 = vtanh.pop %v2656
    %2658 = vmatprep.subr.mxu0 0.0
    %2659 = vmatpush1.msra.mxu0 %v1000
    %2660 = vmatprep.subr.mxu0 0.0
    %2661 = vmatpush1.msra.mxu0 %v1001
    %2662 = vmatprep.subr.mxu0 0.0
    %2663 = vmatpush1.msra.mxu0 %v1002
    %2664 = vmatprep.subr.mxu0 0.0
    %2665 = vmatpush1.msra.mxu0 %v1003
    %2666 = vmatprep.subr.mxu0 0.0
    %2667 = vmatpush1.msra.mxu0 %v1004
    %2668 = vmatprep.subr.mxu0 0.0
    %2669 = vmatpush1.msra.mxu0 %v1005
    %2670 = vmatprep.subr.mxu0 0.0
    %2671 = vmatpush1.msra.mxu0 %v1006
    %2672 = vmatprep.subr.mxu0 0.0
    %2673 = vmatpush1.msra.mxu0 %v1007
    %2674 = vmatprep.subr.mxu0 0.0
    %2675 = vmatpush1.msra.mxu0 0.0
    %2676 = vmatprep.subr.mxu0 0.0
    %2677 = vmatpush1.msra.mxu0 0.0
    %2678 = vmatprep.subr.mxu0 0.0
    %2679 = vmatpush1.msra.mxu0 0.0
    %2680 = vmatprep.subr.mxu0 0.0
    %2681 = vmatpush1.msra.mxu0 0.0
    %2682 = vmatprep.subr.mxu0 0.0
    %2683 = vmatpush1.msra.mxu0 0.0
    %2684 = vmatprep.subr.mxu0 0.0
    %2685 = vmatpush1.msra.mxu0 0.0
    %2686 = vmatprep.subr.mxu0 0.0
    %2687 = vmatpush1.msra.mxu0 0.0
    %2688 = vmatprep.subr.mxu0 0.0
    %2689 = vmatpush1.msra.mxu0 0.0
    %2690 = vmatprep.subr.mxu0 0.0
    %2691 = vmatpush1.msra.mxu0 0.0
    %2692 = vmatprep.subr.mxu0 0.0
    %2693 = vmatpush1.msra.mxu0 0.0
    %2694 = vmatprep.subr.mxu0 0.0
    %2695 = vmatpush1.msra.mxu0 0.0
    %2696 = vmatprep.subr.mxu0 0.0
    %2697 = vmatpush1.msra.mxu0 0.0
    %2698 = vmatprep.subr.mxu0 0.0
    %2699 = vmatpush1.msra.mxu0 0.0
    %2700 = vmatprep.subr.mxu0 0.0
    %2701 = vmatpush1.msra.mxu0 0.0
    %2702 = vmatprep.subr.mxu0 0.0
    %2703 = vmatpush1.msra.mxu0 0.0
    %2704 = vmatprep.subr.mxu0 0.0
    %2705 = vmatpush1.msra.mxu0 0.0
    %2706 = vmatprep.subr.mxu0 0.0
    %2707 = vmatpush1.msra.mxu0 0.0
    %2708 = vmatprep.subr.mxu0 0.0
    %2709 = vmatpush1.msra.mxu0 0.0
    %2710 = vmatprep.subr.mxu0 0.0
    %2711 = vmatpush1.msra.mxu0 0.0
    %2712 = vmatprep.subr.mxu0 0.0
    %2713 = vmatpush1.msra.mxu0 0.0
    %2714 = vmatprep.subr.mxu0 0.0
    %2715 = vmatpush1.msra.mxu0 0.0
    %2716 = vmatprep.subr.mxu0 0.0
    %2717 = vmatpush1.msra.mxu0 0.0
    %2718 = vmatprep.subr.mxu0 0.0
    %2719 = vmatpush1.msra.mxu0 0.0
    %2720 = vmatprep.subr.mxu0 0.0
    %2721 = vmatpush1.msra.mxu0 0.0
    %2722 = vmatprep.mubr.f32.mxu0 0.0
    %2723 = vmatmul.mubr.f32.gmra.mrb[0].mxu0 %v2217
    %v2724 = vpop.f32.mrb[0].mxu0
    %v2725 = vadd.f32 0.0, %v2724
    %v2726 = vpop.f32.mrb[0].mxu0
    %2727 = vdwg.mxu0
    %2728 = vmatprep.subr.mxu0 0.0
    %2729 = vmatpush1.msra.mxu0 %v991
    %2730 = vmatprep.subr.mxu0 0.0
    %2731 = vmatpush1.msra.mxu0 %v992
    %2732 = vmatprep.subr.mxu0 0.0
    %2733 = vmatpush1.msra.mxu0 %v993
    %2734 = vmatprep.subr.mxu0 0.0
    %2735 = vmatpush1.msra.mxu0 %v994
    %2736 = vmatprep.subr.mxu0 0.0
    %2737 = vmatpush1.msra.mxu0 %v995
    %2738 = vmatprep.subr.mxu0 0.0
    %2739 = vmatpush1.msra.mxu0 %v996
    %2740 = vmatprep.subr.mxu0 0.0
    %2741 = vmatpush1.msra.mxu0 %v997
    %2742 = vmatprep.subr.mxu0 0.0
    %2743 = vmatpush1.msra.mxu0 %v998
    %2744 = vmatprep.subr.mxu0 0.0
    %2745 = vmatpush1.msra.mxu0 0.0
    %2746 = vmatprep.subr.mxu0 0.0
    %2747 = vmatpush1.msra.mxu0 0.0
    %2748 = vmatprep.subr.mxu0 0.0
    %2749 = vmatpush1.msra.mxu0 0.0
    %2750 = vmatprep.subr.mxu0 0.0
    %2751 = vmatpush1.msra.mxu0 0.0
    %2752 = vmatprep.subr.mxu0 0.0
    %2753 = vmatpush1.msra.mxu0 0.0
    %2754 = vmatprep.subr.mxu0 0.0
    %2755 = vmatpush1.msra.mxu0 0.0
    %2756 = vmatprep.subr.mxu0 0.0
    %2757 = vmatpush1.msra.mxu0 0.0
    %2758 = vmatprep.subr.mxu0 0.0
    %2759 = vmatpush1.msra.mxu0 0.0
    %2760 = vmatprep.subr.mxu0 0.0
    %2761 = vmatpush1.msra.mxu0 0.0
    %2762 = vmatprep.subr.mxu0 0.0
    %2763 = vmatpush1.msra.mxu0 0.0
    %2764 = vmatprep.subr.mxu0 0.0
    %2765 = vmatpush1.msra.mxu0 0.0
    %2766 = vmatprep.subr.mxu0 0.0
    %2767 = vmatpush1.msra.mxu0 0.0
    %2768 = vmatprep.subr.mxu0 0.0
    %2769 = vmatpush1.msra.mxu0 0.0
    %2770 = vmatprep.subr.mxu0 0.0
    %2771 = vmatpush1.msra.mxu0 0.0
    %2772 = vmatprep.subr.mxu0 0.0
    %2773 = vmatpush1.msra.mxu0 0.0
    %2774 = vmatprep.subr.mxu0 0.0
    %2775 = vmatpush1.msra.mxu0 0.0
    %2776 = vmatprep.subr.mxu0 0.0
    %2777 = vmatpush1.msra.mxu0 0.0
    %2778 = vmatprep.subr.mxu0 0.0
    %2779 = vmatpush1.msra.mxu0 0.0
    %2780 = vmatprep.subr.mxu0 0.0
    %2781 = vmatpush1.msra.mxu0 0.0
    %2782 = vmatprep.subr.mxu0 0.0
    %2783 = vmatpush1.msra.mxu0 0.0
    %2784 = vmatprep.subr.mxu0 0.0
    %2785 = vmatpush1.msra.mxu0 0.0
    %2786 = vmatprep.subr.mxu0 0.0
    %2787 = vmatpush1.msra.mxu0 0.0
    %2788 = vmatprep.subr.mxu0 0.0
    %2789 = vmatpush1.msra.mxu0 0.0
    %2790 = vmatprep.subr.mxu0 0.0
    %2791 = vmatpush1.msra.mxu0 0.0
    %2792 = vmatprep.mubr.f32.mxu0 0.0
    %2793 = vmatmul.mubr.f32.gmra.mrb[0].mxu0 %v2290
    %v2794 = vpop.f32.mrb[0].mxu0
    %v2795 = vadd.f32 %v2725, %v2794
    %v2796 = vpop.f32.mrb[0].mxu0
    %2797 = vdwg.mxu0
    %v2798 = vadd.f32 %v2795, %v1154
    %v2799 = vxor.u32 %v2798, 2147483648
    %v2800 = vmul.f32 %v2799, 1.442695
    %v2801 = vpow.pop %v2800
    %v2802 = vadd.f32 %v2801, 1.0
    %v2803 = vrcp.pop %v2802
    %v2804 = vmul.f32 1.0, %v2803
    %v2805 = vmul.f32 %v2515, %v1986
    %v2806 = vmul.f32 %v2368, %v2657
    %v2807 = vadd.f32 %v2805, %v2806
    %v2808 = vtanh.pop %v2807
    %v2809 = vmul.f32 %v2804, %v2808
    loop: start=0, step=1, limit=25
    $region102: #{tpu_custom_call.1} parent=1 // loop_pre_header
      _
    $region103: #{tpu_custom_call.1} parent=1 // loop_header
      %s2811 = sphi 0, %s2815
      %p2812 = scmp.ge.s32.totalorder %s2811, 25
      %v2816 = vphi %v2213, %v3504
      %v2817 = vphi %v2809, %v3504
      %v2818 = vphi %v2807, %v3502
    $region104: #{tpu_custom_call.1} parent=1 // loop_header_branch
      %2814 = sbr.rel (%p2812) target = $region108
    $region105: #{tpu_custom_call.1} parent=1 // loop_body
      %v2819 = vld [vmem:[#allocation17] sm:$0xff]
      %v2820 = vld [vmem:[#allocation17 + $0x8] sm:$0xff]
      %v2821 = vld [vmem:[#allocation17 + $0x10] sm:$0xff]
      %v2822 = vld [vmem:[#allocation17 + $0x18] sm:$0xff]
      %v2823 = vld [vmem:[#allocation17 + $0x20] sm:$0xff]
      %v2824 = vld [vmem:[#allocation17 + $0x28] sm:$0xff]
      %v2825 = vld [vmem:[#allocation17 + $0x30] sm:$0xff]
      %v2826 = vld [vmem:[#allocation17 + $0x38] sm:$0xff]
      %v2827 = vld [vmem:[#allocation19] sm:$0xff]
      %v2828 = vld [vmem:[#allocation19 + $0x8] sm:$0xff]
      %v2829 = vld [vmem:[#allocation19 + $0x10] sm:$0xff]
      %v2830 = vld [vmem:[#allocation19 + $0x18] sm:$0xff]
      %v2831 = vld [vmem:[#allocation19 + $0x20] sm:$0xff]
      %v2832 = vld [vmem:[#allocation19 + $0x28] sm:$0xff]
      %v2833 = vld [vmem:[#allocation19 + $0x30] sm:$0xff]
      %v2834 = vld [vmem:[#allocation19 + $0x38] sm:$0xff]
      %v2836 = vsel %vm488, %v2817, 0
      %2838 = vmatprep.subr.mxu0 0.0
      %2839 = vmatpush1.msra.mxu0 %v2827
      %2840 = vmatprep.subr.mxu0 0.0
      %2841 = vmatpush1.msra.mxu0 %v2828
      %2842 = vmatprep.subr.mxu0 0.0
      %2843 = vmatpush1.msra.mxu0 %v2829
      %2844 = vmatprep.subr.mxu0 0.0
      %2845 = vmatpush1.msra.mxu0 %v2830
      %2846 = vmatprep.subr.mxu0 0.0
      %2847 = vmatpush1.msra.mxu0 %v2831
      %2848 = vmatprep.subr.mxu0 0.0
      %2849 = vmatpush1.msra.mxu0 %v2832
      %2850 = vmatprep.subr.mxu0 0.0
      %2851 = vmatpush1.msra.mxu0 %v2833
      %2852 = vmatprep.subr.mxu0 0.0
      %2853 = vmatpush1.msra.mxu0 %v2834
      %2854 = vmatprep.subr.mxu0 0.0
      %2855 = vmatpush1.msra.mxu0 0.0
      %2856 = vmatprep.subr.mxu0 0.0
      %2857 = vmatpush1.msra.mxu0 0.0
      %2858 = vmatprep.subr.mxu0 0.0
      %2859 = vmatpush1.msra.mxu0 0.0
      %2860 = vmatprep.subr.mxu0 0.0
      %2861 = vmatpush1.msra.mxu0 0.0
      %2862 = vmatprep.subr.mxu0 0.0
      %2863 = vmatpush1.msra.mxu0 0.0
      %2864 = vmatprep.subr.mxu0 0.0
      %2865 = vmatpush1.msra.mxu0 0.0
      %2866 = vmatprep.subr.mxu0 0.0
      %2867 = vmatpush1.msra.mxu0 0.0
      %2868 = vmatprep.subr.mxu0 0.0
      %2869 = vmatpush1.msra.mxu0 0.0
      %2870 = vmatprep.subr.mxu0 0.0
      %2871 = vmatpush1.msra.mxu0 0.0
      %2872 = vmatprep.subr.mxu0 0.0
      %2873 = vmatpush1.msra.mxu0 0.0
      %2874 = vmatprep.subr.mxu0 0.0
      %2875 = vmatpush1.msra.mxu0 0.0
      %2876 = vmatprep.subr.mxu0 0.0
      %2877 = vmatpush1.msra.mxu0 0.0
      %2878 = vmatprep.subr.mxu0 0.0
      %2879 = vmatpush1.msra.mxu0 0.0
      %2880 = vmatprep.subr.mxu0 0.0
      %2881 = vmatpush1.msra.mxu0 0.0
      %2882 = vmatprep.subr.mxu0 0.0
      %2883 = vmatpush1.msra.mxu0 0.0
      %2884 = vmatprep.subr.mxu0 0.0
      %2885 = vmatpush1.msra.mxu0 0.0
      %2886 = vmatprep.subr.mxu0 0.0
      %2887 = vmatpush1.msra.mxu0 0.0
      %2888 = vmatprep.subr.mxu0 0.0
      %2889 = vmatpush1.msra.mxu0 0.0
      %2890 = vmatprep.subr.mxu0 0.0
      %2891 = vmatpush1.msra.mxu0 0.0
      %2892 = vmatprep.subr.mxu0 0.0
      %2893 = vmatpush1.msra.mxu0 0.0
      %2894 = vmatprep.subr.mxu0 0.0
      %2895 = vmatpush1.msra.mxu0 0.0
      %2896 = vmatprep.subr.mxu0 0.0
      %2897 = vmatpush1.msra.mxu0 0.0
      %2898 = vmatprep.subr.mxu0 0.0
      %2899 = vmatpush1.msra.mxu0 0.0
      %2900 = vmatprep.subr.mxu0 0.0
      %2901 = vmatpush1.msra.mxu0 0.0
      %2902 = vmatprep.mubr.f32.mxu0 0.0
      %2903 = vmatmul.mubr.f32.gmra.mrb[0].mxu0 %v2836
      %v2904 = vpop.f32.mrb[0].mxu0
      %v2905 = vadd.f32 0.0, %v2904
      %v2906 = vpop.f32.mrb[0].mxu0
      %2907 = vdwg.mxu0
      %v2909 = vsel %vm488, %v2816, 0
      %2911 = vmatprep.subr.mxu0 0.0
      %2912 = vmatpush1.msra.mxu0 %v2819
      %2913 = vmatprep.subr.mxu0 0.0
      %2914 = vmatpush1.msra.mxu0 %v2820
      %2915 = vmatprep.subr.mxu0 0.0
      %2916 = vmatpush1.msra.mxu0 %v2821
      %2917 = vmatprep.subr.mxu0 0.0
      %2918 = vmatpush1.msra.mxu0 %v2822
      %2919 = vmatprep.subr.mxu0 0.0
      %2920 = vmatpush1.msra.mxu0 %v2823
      %2921 = vmatprep.subr.mxu0 0.0
      %2922 = vmatpush1.msra.mxu0 %v2824
      %2923 = vmatprep.subr.mxu0 0.0
      %2924 = vmatpush1.msra.mxu0 %v2825
      %2925 = vmatprep.subr.mxu0 0.0
      %2926 = vmatpush1.msra.mxu0 %v2826
      %2927 = vmatprep.subr.mxu0 0.0
      %2928 = vmatpush1.msra.mxu0 0.0
      %2929 = vmatprep.subr.mxu0 0.0
      %2930 = vmatpush1.msra.mxu0 0.0
      %2931 = vmatprep.subr.mxu0 0.0
      %2932 = vmatpush1.msra.mxu0 0.0
      %2933 = vmatprep.subr.mxu0 0.0
      %2934 = vmatpush1.msra.mxu0 0.0
      %2935 = vmatprep.subr.mxu0 0.0
      %2936 = vmatpush1.msra.mxu0 0.0
      %2937 = vmatprep.subr.mxu0 0.0
      %2938 = vmatpush1.msra.mxu0 0.0
      %2939 = vmatprep.subr.mxu0 0.0
      %2940 = vmatpush1.msra.mxu0 0.0
      %2941 = vmatprep.subr.mxu0 0.0
      %2942 = vmatpush1.msra.mxu0 0.0
      %2943 = vmatprep.subr.mxu0 0.0
      %2944 = vmatpush1.msra.mxu0 0.0
      %2945 = vmatprep.subr.mxu0 0.0
      %2946 = vmatpush1.msra.mxu0 0.0
      %2947 = vmatprep.subr.mxu0 0.0
      %2948 = vmatpush1.msra.mxu0 0.0
      %2949 = vmatprep.subr.mxu0 0.0
      %2950 = vmatpush1.msra.mxu0 0.0
      %2951 = vmatprep.subr.mxu0 0.0
      %2952 = vmatpush1.msra.mxu0 0.0
      %2953 = vmatprep.subr.mxu0 0.0
      %2954 = vmatpush1.msra.mxu0 0.0
      %2955 = vmatprep.subr.mxu0 0.0
      %2956 = vmatpush1.msra.mxu0 0.0
      %2957 = vmatprep.subr.mxu0 0.0
      %2958 = vmatpush1.msra.mxu0 0.0
      %2959 = vmatprep.subr.mxu0 0.0
      %2960 = vmatpush1.msra.mxu0 0.0
      %2961 = vmatprep.subr.mxu0 0.0
      %2962 = vmatpush1.msra.mxu0 0.0
      %2963 = vmatprep.subr.mxu0 0.0
      %2964 = vmatpush1.msra.mxu0 0.0
      %2965 = vmatprep.subr.mxu0 0.0
      %2966 = vmatpush1.msra.mxu0 0.0
      %2967 = vmatprep.subr.mxu0 0.0
      %2968 = vmatpush1.msra.mxu0 0.0
      %2969 = vmatprep.subr.mxu0 0.0
      %2970 = vmatpush1.msra.mxu0 0.0
      %2971 = vmatprep.subr.mxu0 0.0
      %2972 = vmatpush1.msra.mxu0 0.0
      %2973 = vmatprep.subr.mxu0 0.0
      %2974 = vmatpush1.msra.mxu0 0.0
      %2975 = vmatprep.mubr.f32.mxu0 0.0
      %2976 = vmatmul.mubr.f32.gmra.mrb[0].mxu0 %v2909
      %v2977 = vpop.f32.mrb[0].mxu0
      %v2978 = vadd.f32 %v2905, %v2977
      %v2979 = vpop.f32.mrb[0].mxu0
      %2980 = vdwg.mxu0
      %v2981 = vld [vmem:[%s13] sm:$0x1]
      %v2983 = vlaneseq
      %v2984 = vshrl.u32 %v2983, 7
      %v2985 = vsub.s32 0, %v2984
      %v2986 = vrot.slane %v2981, %v2985
      %v2988 = vadd.f32 %v2978, %v2986
      %v2989 = vxor.u32 %v2988, 2147483648
      %v2990 = vmul.f32 %v2989, 1.442695
      %v2991 = vpow.pop %v2990
      %v2992 = vadd.f32 %v2991, 1.0
      %v2993 = vrcp.pop %v2992
      %v2994 = vmul.f32 1.0, %v2993
      %v2995 = vld [vmem:[%s649] sm:$0xff]
      %v2996 = vld [vmem:[%s649 + $0x8] sm:$0xff]
      %v2997 = vld [vmem:[%s649 + $0x10] sm:$0xff]
      %v2998 = vld [vmem:[%s649 + $0x18] sm:$0xff]
      %v2999 = vld [vmem:[%s649 + $0x20] sm:$0xff]
      %v3000 = vld [vmem:[%s649 + $0x28] sm:$0xff]
      %v3001 = vld [vmem:[%s649 + $0x30] sm:$0xff]
      %v3002 = vld [vmem:[%s649 + $0x38] sm:$0xff]
      %v3003 = vld [vmem:[%s658] sm:$0xff]
      %v3004 = vld [vmem:[%s658 + $0x8] sm:$0xff]
      %v3005 = vld [vmem:[%s658 + $0x10] sm:$0xff]
      %v3006 = vld [vmem:[%s658 + $0x18] sm:$0xff]
      %v3007 = vld [vmem:[%s658 + $0x20] sm:$0xff]
      %v3008 = vld [vmem:[%s658 + $0x28] sm:$0xff]
      %v3009 = vld [vmem:[%s658 + $0x30] sm:$0xff]
      %v3010 = vld [vmem:[%s658 + $0x38] sm:$0xff]
      %3011 = vmatprep.subr.mxu0 0.0
      %3012 = vmatpush1.msra.mxu0 %v3003
      %3013 = vmatprep.subr.mxu0 0.0
      %3014 = vmatpush1.msra.mxu0 %v3004
      %3015 = vmatprep.subr.mxu0 0.0
      %3016 = vmatpush1.msra.mxu0 %v3005
      %3017 = vmatprep.subr.mxu0 0.0
      %3018 = vmatpush1.msra.mxu0 %v3006
      %3019 = vmatprep.subr.mxu0 0.0
      %3020 = vmatpush1.msra.mxu0 %v3007
      %3021 = vmatprep.subr.mxu0 0.0
      %3022 = vmatpush1.msra.mxu0 %v3008
      %3023 = vmatprep.subr.mxu0 0.0
      %3024 = vmatpush1.msra.mxu0 %v3009
      %3025 = vmatprep.subr.mxu0 0.0
      %3026 = vmatpush1.msra.mxu0 %v3010
      %3027 = vmatprep.subr.mxu0 0.0
      %3028 = vmatpush1.msra.mxu0 0.0
      %3029 = vmatprep.subr.mxu0 0.0
      %3030 = vmatpush1.msra.mxu0 0.0
      %3031 = vmatprep.subr.mxu0 0.0
      %3032 = vmatpush1.msra.mxu0 0.0
      %3033 = vmatprep.subr.mxu0 0.0
      %3034 = vmatpush1.msra.mxu0 0.0
      %3035 = vmatprep.subr.mxu0 0.0
      %3036 = vmatpush1.msra.mxu0 0.0
      %3037 = vmatprep.subr.mxu0 0.0
      %3038 = vmatpush1.msra.mxu0 0.0
      %3039 = vmatprep.subr.mxu0 0.0
      %3040 = vmatpush1.msra.mxu0 0.0
      %3041 = vmatprep.subr.mxu0 0.0
      %3042 = vmatpush1.msra.mxu0 0.0
      %3043 = vmatprep.subr.mxu0 0.0
      %3044 = vmatpush1.msra.mxu0 0.0
      %3045 = vmatprep.subr.mxu0 0.0
      %3046 = vmatpush1.msra.mxu0 0.0
      %3047 = vmatprep.subr.mxu0 0.0
      %3048 = vmatpush1.msra.mxu0 0.0
      %3049 = vmatprep.subr.mxu0 0.0
      %3050 = vmatpush1.msra.mxu0 0.0
      %3051 = vmatprep.subr.mxu0 0.0
      %3052 = vmatpush1.msra.mxu0 0.0
      %3053 = vmatprep.subr.mxu0 0.0
      %3054 = vmatpush1.msra.mxu0 0.0
      %3055 = vmatprep.subr.mxu0 0.0
      %3056 = vmatpush1.msra.mxu0 0.0
      %3057 = vmatprep.subr.mxu0 0.0
      %3058 = vmatpush1.msra.mxu0 0.0
      %3059 = vmatprep.subr.mxu0 0.0
      %3060 = vmatpush1.msra.mxu0 0.0
      %3061 = vmatprep.subr.mxu0 0.0
      %3062 = vmatpush1.msra.mxu0 0.0
      %3063 = vmatprep.subr.mxu0 0.0
      %3064 = vmatpush1.msra.mxu0 0.0
      %3065 = vmatprep.subr.mxu0 0.0
      %3066 = vmatpush1.msra.mxu0 0.0
      %3067 = vmatprep.subr.mxu0 0.0
      %3068 = vmatpush1.msra.mxu0 0.0
      %3069 = vmatprep.subr.mxu0 0.0
      %3070 = vmatpush1.msra.mxu0 0.0
      %3071 = vmatprep.subr.mxu0 0.0
      %3072 = vmatpush1.msra.mxu0 0.0
      %3073 = vmatprep.subr.mxu0 0.0
      %3074 = vmatpush1.msra.mxu0 0.0
      %3075 = vmatprep.mubr.f32.mxu0 0.0
      %3076 = vmatmul.mubr.f32.gmra.mrb[0].mxu0 %v2836
      %v3077 = vpop.f32.mrb[0].mxu0
      %v3078 = vadd.f32 0.0, %v3077
      %v3079 = vpop.f32.mrb[0].mxu0
      %3080 = vdwg.mxu0
      %3081 = vmatprep.subr.mxu0 0.0
      %3082 = vmatpush1.msra.mxu0 %v2995
      %3083 = vmatprep.subr.mxu0 0.0
      %3084 = vmatpush1.msra.mxu0 %v2996
      %3085 = vmatprep.subr.mxu0 0.0
      %3086 = vmatpush1.msra.mxu0 %v2997
      %3087 = vmatprep.subr.mxu0 0.0
      %3088 = vmatpush1.msra.mxu0 %v2998
      %3089 = vmatprep.subr.mxu0 0.0
      %3090 = vmatpush1.msra.mxu0 %v2999
      %3091 = vmatprep.subr.mxu0 0.0
      %3092 = vmatpush1.msra.mxu0 %v3000
      %3093 = vmatprep.subr.mxu0 0.0
      %3094 = vmatpush1.msra.mxu0 %v3001
      %3095 = vmatprep.subr.mxu0 0.0
      %3096 = vmatpush1.msra.mxu0 %v3002
      %3097 = vmatprep.subr.mxu0 0.0
      %3098 = vmatpush1.msra.mxu0 0.0
      %3099 = vmatprep.subr.mxu0 0.0
      %3100 = vmatpush1.msra.mxu0 0.0
      %3101 = vmatprep.subr.mxu0 0.0
      %3102 = vmatpush1.msra.mxu0 0.0
      %3103 = vmatprep.subr.mxu0 0.0
      %3104 = vmatpush1.msra.mxu0 0.0
      %3105 = vmatprep.subr.mxu0 0.0
      %3106 = vmatpush1.msra.mxu0 0.0
      %3107 = vmatprep.subr.mxu0 0.0
      %3108 = vmatpush1.msra.mxu0 0.0
      %3109 = vmatprep.subr.mxu0 0.0
      %3110 = vmatpush1.msra.mxu0 0.0
      %3111 = vmatprep.subr.mxu0 0.0
      %3112 = vmatpush1.msra.mxu0 0.0
      %3113 = vmatprep.subr.mxu0 0.0
      %3114 = vmatpush1.msra.mxu0 0.0
      %3115 = vmatprep.subr.mxu0 0.0
      %3116 = vmatpush1.msra.mxu0 0.0
      %3117 = vmatprep.subr.mxu0 0.0
      %3118 = vmatpush1.msra.mxu0 0.0
      %3119 = vmatprep.subr.mxu0 0.0
      %3120 = vmatpush1.msra.mxu0 0.0
      %3121 = vmatprep.subr.mxu0 0.0
      %3122 = vmatpush1.msra.mxu0 0.0
      %3123 = vmatprep.subr.mxu0 0.0
      %3124 = vmatpush1.msra.mxu0 0.0
      %3125 = vmatprep.subr.mxu0 0.0
      %3126 = vmatpush1.msra.mxu0 0.0
      %3127 = vmatprep.subr.mxu0 0.0
      %3128 = vmatpush1.msra.mxu0 0.0
      %3129 = vmatprep.subr.mxu0 0.0
      %3130 = vmatpush1.msra.mxu0 0.0
      %3131 = vmatprep.subr.mxu0 0.0
      %3132 = vmatpush1.msra.mxu0 0.0
      %3133 = vmatprep.subr.mxu0 0.0
      %3134 = vmatpush1.msra.mxu0 0.0
      %3135 = vmatprep.subr.mxu0 0.0
      %3136 = vmatpush1.msra.mxu0 0.0
      %3137 = vmatprep.subr.mxu0 0.0
      %3138 = vmatpush1.msra.mxu0 0.0
      %3139 = vmatprep.subr.mxu0 0.0
      %3140 = vmatpush1.msra.mxu0 0.0
      %3141 = vmatprep.subr.mxu0 0.0
      %3142 = vmatpush1.msra.mxu0 0.0
      %3143 = vmatprep.subr.mxu0 0.0
      %3144 = vmatpush1.msra.mxu0 0.0
      %3145 = vmatprep.mubr.f32.mxu0 0.0
      %3146 = vmatmul.mubr.f32.gmra.mrb[0].mxu0 %v2909
      %v3147 = vpop.f32.mrb[0].mxu0
      %v3148 = vadd.f32 %v3078, %v3147
      %v3149 = vpop.f32.mrb[0].mxu0
      %3150 = vdwg.mxu0
      %v3151 = vld [vmem:[%s807] sm:$0x1]
      %v3153 = vlaneseq
      %v3154 = vshrl.u32 %v3153, 7
      %v3155 = vsub.s32 0, %v3154
      %v3156 = vrot.slane %v3151, %v3155
      %v3158 = vadd.f32 %v3148, %v3156
      %v3159 = vxor.u32 %v3158, 2147483648
      %v3160 = vmul.f32 %v3159, 1.442695
      %v3161 = vpow.pop %v3160
      %v3162 = vadd.f32 %v3161, 1.0
      %v3163 = vrcp.pop %v3162
      %v3164 = vmul.f32 1.0, %v3163
      %v3165 = vld [vmem:[%s822] sm:$0xff]
      %v3166 = vld [vmem:[%s822 + $0x8] sm:$0xff]
      %v3167 = vld [vmem:[%s822 + $0x10] sm:$0xff]
      %v3168 = vld [vmem:[%s822 + $0x18] sm:$0xff]
      %v3169 = vld [vmem:[%s822 + $0x20] sm:$0xff]
      %v3170 = vld [vmem:[%s822 + $0x28] sm:$0xff]
      %v3171 = vld [vmem:[%s822 + $0x30] sm:$0xff]
      %v3172 = vld [vmem:[%s822 + $0x38] sm:$0xff]
      %v3173 = vld [vmem:[%s831] sm:$0xff]
      %v3174 = vld [vmem:[%s831 + $0x8] sm:$0xff]
      %v3175 = vld [vmem:[%s831 + $0x10] sm:$0xff]
      %v3176 = vld [vmem:[%s831 + $0x18] sm:$0xff]
      %v3177 = vld [vmem:[%s831 + $0x20] sm:$0xff]
      %v3178 = vld [vmem:[%s831 + $0x28] sm:$0xff]
      %v3179 = vld [vmem:[%s831 + $0x30] sm:$0xff]
      %v3180 = vld [vmem:[%s831 + $0x38] sm:$0xff]
      %3181 = vmatprep.subr.mxu0 0.0
      %3182 = vmatpush1.msra.mxu0 %v3173
      %3183 = vmatprep.subr.mxu0 0.0
      %3184 = vmatpush1.msra.mxu0 %v3174
      %3185 = vmatprep.subr.mxu0 0.0
      %3186 = vmatpush1.msra.mxu0 %v3175
      %3187 = vmatprep.subr.mxu0 0.0
      %3188 = vmatpush1.msra.mxu0 %v3176
      %3189 = vmatprep.subr.mxu0 0.0
      %3190 = vmatpush1.msra.mxu0 %v3177
      %3191 = vmatprep.subr.mxu0 0.0
      %3192 = vmatpush1.msra.mxu0 %v3178
      %3193 = vmatprep.subr.mxu0 0.0
      %3194 = vmatpush1.msra.mxu0 %v3179
      %3195 = vmatprep.subr.mxu0 0.0
      %3196 = vmatpush1.msra.mxu0 %v3180
      %3197 = vmatprep.subr.mxu0 0.0
      %3198 = vmatpush1.msra.mxu0 0.0
      %3199 = vmatprep.subr.mxu0 0.0
      %3200 = vmatpush1.msra.mxu0 0.0
      %3201 = vmatprep.subr.mxu0 0.0
      %3202 = vmatpush1.msra.mxu0 0.0
      %3203 = vmatprep.subr.mxu0 0.0
      %3204 = vmatpush1.msra.mxu0 0.0
      %3205 = vmatprep.subr.mxu0 0.0
      %3206 = vmatpush1.msra.mxu0 0.0
      %3207 = vmatprep.subr.mxu0 0.0
      %3208 = vmatpush1.msra.mxu0 0.0
      %3209 = vmatprep.subr.mxu0 0.0
      %3210 = vmatpush1.msra.mxu0 0.0
      %3211 = vmatprep.subr.mxu0 0.0
      %3212 = vmatpush1.msra.mxu0 0.0
      %3213 = vmatprep.subr.mxu0 0.0
      %3214 = vmatpush1.msra.mxu0 0.0
      %3215 = vmatprep.subr.mxu0 0.0
      %3216 = vmatpush1.msra.mxu0 0.0
      %3217 = vmatprep.subr.mxu0 0.0
      %3218 = vmatpush1.msra.mxu0 0.0
      %3219 = vmatprep.subr.mxu0 0.0
      %3220 = vmatpush1.msra.mxu0 0.0
      %3221 = vmatprep.subr.mxu0 0.0
      %3222 = vmatpush1.msra.mxu0 0.0
      %3223 = vmatprep.subr.mxu0 0.0
      %3224 = vmatpush1.msra.mxu0 0.0
      %3225 = vmatprep.subr.mxu0 0.0
      %3226 = vmatpush1.msra.mxu0 0.0
      %3227 = vmatprep.subr.mxu0 0.0
      %3228 = vmatpush1.msra.mxu0 0.0
      %3229 = vmatprep.subr.mxu0 0.0
      %3230 = vmatpush1.msra.mxu0 0.0
      %3231 = vmatprep.subr.mxu0 0.0
      %3232 = vmatpush1.msra.mxu0 0.0
      %3233 = vmatprep.subr.mxu0 0.0
      %3234 = vmatpush1.msra.mxu0 0.0
      %3235 = vmatprep.subr.mxu0 0.0
      %3236 = vmatpush1.msra.mxu0 0.0
      %3237 = vmatprep.subr.mxu0 0.0
      %3238 = vmatpush1.msra.mxu0 0.0
      %3239 = vmatprep.subr.mxu0 0.0
      %3240 = vmatpush1.msra.mxu0 0.0
      %3241 = vmatprep.subr.mxu0 0.0
      %3242 = vmatpush1.msra.mxu0 0.0
      %3243 = vmatprep.subr.mxu0 0.0
      %3244 = vmatpush1.msra.mxu0 0.0
      %3245 = vmatprep.mubr.f32.mxu0 0.0
      %3246 = vmatmul.mubr.f32.gmra.mrb[0].mxu0 %v2836
      %v3247 = vpop.f32.mrb[0].mxu0
      %v3248 = vadd.f32 0.0, %v3247
      %v3249 = vpop.f32.mrb[0].mxu0
      %3250 = vdwg.mxu0
      %3251 = vmatprep.subr.mxu0 0.0
      %3252 = vmatpush1.msra.mxu0 %v3165
      %3253 = vmatprep.subr.mxu0 0.0
      %3254 = vmatpush1.msra.mxu0 %v3166
      %3255 = vmatprep.subr.mxu0 0.0
      %3256 = vmatpush1.msra.mxu0 %v3167
      %3257 = vmatprep.subr.mxu0 0.0
      %3258 = vmatpush1.msra.mxu0 %v3168
      %3259 = vmatprep.subr.mxu0 0.0
      %3260 = vmatpush1.msra.mxu0 %v3169
      %3261 = vmatprep.subr.mxu0 0.0
      %3262 = vmatpush1.msra.mxu0 %v3170
      %3263 = vmatprep.subr.mxu0 0.0
      %3264 = vmatpush1.msra.mxu0 %v3171
      %3265 = vmatprep.subr.mxu0 0.0
      %3266 = vmatpush1.msra.mxu0 %v3172
      %3267 = vmatprep.subr.mxu0 0.0
      %3268 = vmatpush1.msra.mxu0 0.0
      %3269 = vmatprep.subr.mxu0 0.0
      %3270 = vmatpush1.msra.mxu0 0.0
      %3271 = vmatprep.subr.mxu0 0.0
      %3272 = vmatpush1.msra.mxu0 0.0
      %3273 = vmatprep.subr.mxu0 0.0
      %3274 = vmatpush1.msra.mxu0 0.0
      %3275 = vmatprep.subr.mxu0 0.0
      %3276 = vmatpush1.msra.mxu0 0.0
      %3277 = vmatprep.subr.mxu0 0.0
      %3278 = vmatpush1.msra.mxu0 0.0
      %3279 = vmatprep.subr.mxu0 0.0
      %3280 = vmatpush1.msra.mxu0 0.0
      %3281 = vmatprep.subr.mxu0 0.0
      %3282 = vmatpush1.msra.mxu0 0.0
      %3283 = vmatprep.subr.mxu0 0.0
      %3284 = vmatpush1.msra.mxu0 0.0
      %3285 = vmatprep.subr.mxu0 0.0
      %3286 = vmatpush1.msra.mxu0 0.0
      %3287 = vmatprep.subr.mxu0 0.0
      %3288 = vmatpush1.msra.mxu0 0.0
      %3289 = vmatprep.subr.mxu0 0.0
      %3290 = vmatpush1.msra.mxu0 0.0
      %3291 = vmatprep.subr.mxu0 0.0
      %3292 = vmatpush1.msra.mxu0 0.0
      %3293 = vmatprep.subr.mxu0 0.0
      %3294 = vmatpush1.msra.mxu0 0.0
      %3295 = vmatprep.subr.mxu0 0.0
      %3296 = vmatpush1.msra.mxu0 0.0
      %3297 = vmatprep.subr.mxu0 0.0
      %3298 = vmatpush1.msra.mxu0 0.0
      %3299 = vmatprep.subr.mxu0 0.0
      %3300 = vmatpush1.msra.mxu0 0.0
      %3301 = vmatprep.subr.mxu0 0.0
      %3302 = vmatpush1.msra.mxu0 0.0
      %3303 = vmatprep.subr.mxu0 0.0
      %3304 = vmatpush1.msra.mxu0 0.0
      %3305 = vmatprep.subr.mxu0 0.0
      %3306 = vmatpush1.msra.mxu0 0.0
      %3307 = vmatprep.subr.mxu0 0.0
      %3308 = vmatpush1.msra.mxu0 0.0
      %3309 = vmatprep.subr.mxu0 0.0
      %3310 = vmatpush1.msra.mxu0 0.0
      %3311 = vmatprep.subr.mxu0 0.0
      %3312 = vmatpush1.msra.mxu0 0.0
      %3313 = vmatprep.subr.mxu0 0.0
      %3314 = vmatpush1.msra.mxu0 0.0
      %3315 = vmatprep.mubr.f32.mxu0 0.0
      %3316 = vmatmul.mubr.f32.gmra.mrb[0].mxu0 %v2909
      %v3317 = vpop.f32.mrb[0].mxu0
      %v3318 = vadd.f32 %v3248, %v3317
      %v3319 = vpop.f32.mrb[0].mxu0
      %3320 = vdwg.mxu0
      %v3321 = vld [vmem:[%s980] sm:$0x1]
      %v3323 = vlaneseq
      %v3324 = vshrl.u32 %v3323, 7
      %v3325 = vsub.s32 0, %v3324
      %v3326 = vrot.slane %v3321, %v3325
      %v3328 = vadd.f32 %v3318, %v3326
      %v3329 = vtanh.pop %v3328
      %v3330 = vld [vmem:[%s990] sm:$0xff]
      %v3331 = vld [vmem:[%s990 + $0x8] sm:$0xff]
      %v3332 = vld [vmem:[%s990 + $0x10] sm:$0xff]
      %v3333 = vld [vmem:[%s990 + $0x18] sm:$0xff]
      %v3334 = vld [vmem:[%s990 + $0x20] sm:$0xff]
      %v3335 = vld [vmem:[%s990 + $0x28] sm:$0xff]
      %v3336 = vld [vmem:[%s990 + $0x30] sm:$0xff]
      %v3337 = vld [vmem:[%s990 + $0x38] sm:$0xff]
      %v3338 = vld [vmem:[%s999] sm:$0xff]
      %v3339 = vld [vmem:[%s999 + $0x8] sm:$0xff]
      %v3340 = vld [vmem:[%s999 + $0x10] sm:$0xff]
      %v3341 = vld [vmem:[%s999 + $0x18] sm:$0xff]
      %v3342 = vld [vmem:[%s999 + $0x20] sm:$0xff]
      %v3343 = vld [vmem:[%s999 + $0x28] sm:$0xff]
      %v3344 = vld [vmem:[%s999 + $0x30] sm:$0xff]
      %v3345 = vld [vmem:[%s999 + $0x38] sm:$0xff]
      %3346 = vmatprep.subr.mxu0 0.0
      %3347 = vmatpush1.msra.mxu0 %v3338
      %3348 = vmatprep.subr.mxu0 0.0
      %3349 = vmatpush1.msra.mxu0 %v3339
      %3350 = vmatprep.subr.mxu0 0.0
      %3351 = vmatpush1.msra.mxu0 %v3340
      %3352 = vmatprep.subr.mxu0 0.0
      %3353 = vmatpush1.msra.mxu0 %v3341
      %3354 = vmatprep.subr.mxu0 0.0
      %3355 = vmatpush1.msra.mxu0 %v3342
      %3356 = vmatprep.subr.mxu0 0.0
      %3357 = vmatpush1.msra.mxu0 %v3343
      %3358 = vmatprep.subr.mxu0 0.0
      %3359 = vmatpush1.msra.mxu0 %v3344
      %3360 = vmatprep.subr.mxu0 0.0
      %3361 = vmatpush1.msra.mxu0 %v3345
      %3362 = vmatprep.subr.mxu0 0.0
      %3363 = vmatpush1.msra.mxu0 0.0
      %3364 = vmatprep.subr.mxu0 0.0
      %3365 = vmatpush1.msra.mxu0 0.0
      %3366 = vmatprep.subr.mxu0 0.0
      %3367 = vmatpush1.msra.mxu0 0.0
      %3368 = vmatprep.subr.mxu0 0.0
      %3369 = vmatpush1.msra.mxu0 0.0
      %3370 = vmatprep.subr.mxu0 0.0
      %3371 = vmatpush1.msra.mxu0 0.0
      %3372 = vmatprep.subr.mxu0 0.0
      %3373 = vmatpush1.msra.mxu0 0.0
      %3374 = vmatprep.subr.mxu0 0.0
      %3375 = vmatpush1.msra.mxu0 0.0
      %3376 = vmatprep.subr.mxu0 0.0
      %3377 = vmatpush1.msra.mxu0 0.0
      %3378 = vmatprep.subr.mxu0 0.0
      %3379 = vmatpush1.msra.mxu0 0.0
      %3380 = vmatprep.subr.mxu0 0.0
      %3381 = vmatpush1.msra.mxu0 0.0
      %3382 = vmatprep.subr.mxu0 0.0
      %3383 = vmatpush1.msra.mxu0 0.0
      %3384 = vmatprep.subr.mxu0 0.0
      %3385 = vmatpush1.msra.mxu0 0.0
      %3386 = vmatprep.subr.mxu0 0.0
      %3387 = vmatpush1.msra.mxu0 0.0
      %3388 = vmatprep.subr.mxu0 0.0
      %3389 = vmatpush1.msra.mxu0 0.0
      %3390 = vmatprep.subr.mxu0 0.0
      %3391 = vmatpush1.msra.mxu0 0.0
      %3392 = vmatprep.subr.mxu0 0.0
      %3393 = vmatpush1.msra.mxu0 0.0
      %3394 = vmatprep.subr.mxu0 0.0
      %3395 = vmatpush1.msra.mxu0 0.0
      %3396 = vmatprep.subr.mxu0 0.0
      %3397 = vmatpush1.msra.mxu0 0.0
      %3398 = vmatprep.subr.mxu0 0.0
      %3399 = vmatpush1.msra.mxu0 0.0
      %3400 = vmatprep.subr.mxu0 0.0
      %3401 = vmatpush1.msra.mxu0 0.0
      %3402 = vmatprep.subr.mxu0 0.0
      %3403 = vmatpush1.msra.mxu0 0.0
      %3404 = vmatprep.subr.mxu0 0.0
      %3405 = vmatpush1.msra.mxu0 0.0
      %3406 = vmatprep.subr.mxu0 0.0
      %3407 = vmatpush1.msra.mxu0 0.0
      %3408 = vmatprep.subr.mxu0 0.0
      %3409 = vmatpush1.msra.mxu0 0.0
      %3410 = vmatprep.mubr.f32.mxu0 0.0
      %3411 = vmatmul.mubr.f32.gmra.mrb[0].mxu0 %v2836
      %v3412 = vpop.f32.mrb[0].mxu0
      %v3413 = vadd.f32 0.0, %v3412
      %v3414 = vpop.f32.mrb[0].mxu0
      %3415 = vdwg.mxu0
      %3416 = vmatprep.subr.mxu0 0.0
      %3417 = vmatpush1.msra.mxu0 %v3330
      %3418 = vmatprep.subr.mxu0 0.0
      %3419 = vmatpush1.msra.mxu0 %v3331
      %3420 = vmatprep.subr.mxu0 0.0
      %3421 = vmatpush1.msra.mxu0 %v3332
      %3422 = vmatprep.subr.mxu0 0.0
      %3423 = vmatpush1.msra.mxu0 %v3333
      %3424 = vmatprep.subr.mxu0 0.0
      %3425 = vmatpush1.msra.mxu0 %v3334
      %3426 = vmatprep.subr.mxu0 0.0
      %3427 = vmatpush1.msra.mxu0 %v3335
      %3428 = vmatprep.subr.mxu0 0.0
      %3429 = vmatpush1.msra.mxu0 %v3336
      %3430 = vmatprep.subr.mxu0 0.0
      %3431 = vmatpush1.msra.mxu0 %v3337
      %3432 = vmatprep.subr.mxu0 0.0
      %3433 = vmatpush1.msra.mxu0 0.0
      %3434 = vmatprep.subr.mxu0 0.0
      %3435 = vmatpush1.msra.mxu0 0.0
      %3436 = vmatprep.subr.mxu0 0.0
      %3437 = vmatpush1.msra.mxu0 0.0
      %3438 = vmatprep.subr.mxu0 0.0
      %3439 = vmatpush1.msra.mxu0 0.0
      %3440 = vmatprep.subr.mxu0 0.0
      %3441 = vmatpush1.msra.mxu0 0.0
      %3442 = vmatprep.subr.mxu0 0.0
      %3443 = vmatpush1.msra.mxu0 0.0
      %3444 = vmatprep.subr.mxu0 0.0
      %3445 = vmatpush1.msra.mxu0 0.0
      %3446 = vmatprep.subr.mxu0 0.0
      %3447 = vmatpush1.msra.mxu0 0.0
      %3448 = vmatprep.subr.mxu0 0.0
      %3449 = vmatpush1.msra.mxu0 0.0
      %3450 = vmatprep.subr.mxu0 0.0
      %3451 = vmatpush1.msra.mxu0 0.0
      %3452 = vmatprep.subr.mxu0 0.0
      %3453 = vmatpush1.msra.mxu0 0.0
      %3454 = vmatprep.subr.mxu0 0.0
      %3455 = vmatpush1.msra.mxu0 0.0
      %3456 = vmatprep.subr.mxu0 0.0
      %3457 = vmatpush1.msra.mxu0 0.0
      %3458 = vmatprep.subr.mxu0 0.0
      %3459 = vmatpush1.msra.mxu0 0.0
      %3460 = vmatprep.subr.mxu0 0.0
      %3461 = vmatpush1.msra.mxu0 0.0
      %3462 = vmatprep.subr.mxu0 0.0
      %3463 = vmatpush1.msra.mxu0 0.0
      %3464 = vmatprep.subr.mxu0 0.0
      %3465 = vmatpush1.msra.mxu0 0.0
      %3466 = vmatprep.subr.mxu0 0.0
      %3467 = vmatpush1.msra.mxu0 0.0
      %3468 = vmatprep.subr.mxu0 0.0
      %3469 = vmatpush1.msra.mxu0 0.0
      %3470 = vmatprep.subr.mxu0 0.0
      %3471 = vmatpush1.msra.mxu0 0.0
      %3472 = vmatprep.subr.mxu0 0.0
      %3473 = vmatpush1.msra.mxu0 0.0
      %3474 = vmatprep.subr.mxu0 0.0
      %3475 = vmatpush1.msra.mxu0 0.0
      %3476 = vmatprep.subr.mxu0 0.0
      %3477 = vmatpush1.msra.mxu0 0.0
      %3478 = vmatprep.subr.mxu0 0.0
      %3479 = vmatpush1.msra.mxu0 0.0
      %3480 = vmatprep.mubr.f32.mxu0 0.0
      %3481 = vmatmul.mubr.f32.gmra.mrb[0].mxu0 %v2909
      %v3482 = vpop.f32.mrb[0].mxu0
      %v3483 = vadd.f32 %v3413, %v3482
      %v3484 = vpop.f32.mrb[0].mxu0
      %3485 = vdwg.mxu0
      %v3486 = vld [vmem:[%s1148] sm:$0x1]
      %v3488 = vlaneseq
      %v3489 = vshrl.u32 %v3488, 7
      %v3490 = vsub.s32 0, %v3489
      %v3491 = vrot.slane %v3486, %v3490
      %v3493 = vadd.f32 %v3483, %v3491
      %v3494 = vxor.u32 %v3493, 2147483648
      %v3495 = vmul.f32 %v3494, 1.442695
      %v3496 = vpow.pop %v3495
      %v3497 = vadd.f32 %v3496, 1.0
      %v3498 = vrcp.pop %v3497
      %v3499 = vmul.f32 1.0, %v3498
      %v3500 = vmul.f32 %v3164, %v2818
      %v3501 = vmul.f32 %v2994, %v3329
      %v3502 = vadd.f32 %v3500, %v3501
      %v3503 = vtanh.pop %v3502
      %v3504 = vmul.f32 %v3499, %v3503
      %s3505 = smul.u32 %s2811, 2
      %s3506 = scalar_lea.vmem [#allocation20], %s3505
      %vm3507 = vcmask 517120
      %3508 = vst.msk [vmem:[%s3506] sm:$0x3] %vm3507, %v3504
    $region106: #{tpu_custom_call.1} parent=1 // loop_footer
      %s2815 = sadd.s32 1, %s2811
    $region107: #{tpu_custom_call.1} parent=1 // loop_footer_branch
      %2810 = sbr.rel target = $region103
    $region108: #{tpu_custom_call.1} parent=1 // loop_exit
      _
    // Predicated region
    $region109: #{tpu_custom_call.1} parent=1 // pred_check
      _
    $region110: #{tpu_custom_call.1} parent=1 // pred_check_branch
      %3510 = sbr.rel (0) target = $region112
    $region111: #{tpu_custom_call.1} parent=1 // pred_region
      %s3512 = ssub.s32 800, 800
      %3513 = vsyncadd [#allocation4], %s3512
      %s3514 = sshll.u32 [#allocation20], 4
      %s3515 = int_to_ptr.vmem [resolvable:$true] %s3514
      %3520 = dma.vmem_to_hbm [thread:$0]  %s3515, 800, %s14, [#allocation4], 32, 32, 2
    $region112: #{tpu_custom_call.1} parent=1 // pred_fallthru
      _
    // Predicated region
    $region113: #{tpu_custom_call.1} parent=1 // pred_check
      _
    $region114: #{tpu_custom_call.1} parent=1 // pred_check_branch
      %3522 = sbr.rel (0) target = $region116
    $region115: #{tpu_custom_call.1} parent=1 // pred_region
      %3523 = dma.done [#allocation4], 800
    $region116: #{tpu_custom_call.1} parent=1 // pred_fallthru
      _
    %3524 = vsyncpa [#allocation3], 1
    %3525 = vsyncpa [#allocation6], 1
    %3526 = vsyncpa [#allocation9], 1
    %3527 = vsyncpa [#allocation12], 1
    %3528 = vsyncpa [#allocation15], 1
    %3529 = vsyncpa [#allocation18], 1
    %3530 = vsyncpa [#allocation4], 1

</llo_original>
